<compile_context>
chip_gen: v7x
topology: tpu7x:2x2x1
jax: 0.10.0
libtpu: 0.0.40
codegen_flags: <defaults>
</compile_context>

<pallas_src>
import functools

import jax
import jax.numpy as jnp
from jax import lax
from jax.experimental import pallas as pl
from jax.experimental.pallas import tpu as pltpu

PAD = 8                       # spare rows after each flattened plane so shifted tap slices stay in-bounds
VMEM_LIMIT = 64 * 1024 * 1024


# ----------------------------------------------------------------------------
# Pallas kernels
# ----------------------------------------------------------------------------
def upconv_kernel(x_ref, w_ref, b_ref, o_ref):
    """ConvTranspose2d(k=2, s=2) phase matmul: ONE (L,Cin)@(Cin,4*Cup) per image.

    x_ref: (1, L, Cin) bf16    w_ref: (Cin, 4*Cup) bf16    b_ref: (1, 4*Cup) f32
    o_ref: (1, L, 4*Cup) bf16  flat output channel = (ky*2 + kx)*Cup + c
    """
    y = jnp.dot(x_ref[0], w_ref[...], preferred_element_type=jnp.float32)
    o_ref[0] = (y + b_ref[...]).astype(o_ref.dtype)


def block_kernel(xu_ref, en_ref, w1_ref, b1_ref, w2_ref, b2_ref, o_ref, mid_ref,
                 *, Wu, H1, H2):
    """Fused Block (conv3x3 valid -> ReLU -> conv3x3 valid), one image per step.

    Activations are flattened planes with row stride Wu.  The channel concat
    [x, enc] and the 3 dx taps are folded into the contraction dim, so each
    conv is 3 matmuls (one per dy).  Columns >= (valid width) of each flat row
    are garbage and are dropped by downstream consumers.

    xu_ref: (1, Hu*Wu+PAD, Cup)  bf16     en_ref: (1, Hu*Wu+PAD, Cenc) bf16
    w1_ref: (3, 3*(Cup+Cenc), Cmid) bf16  b1_ref: (1, Cmid) f32
    w2_ref: (3, 3*Cmid, Cout)       bf16  b2_ref: (1, Cout) f32
    o_ref : (1, H2*Wu, Cout)              mid_ref: VMEM (H1*Wu+PAD, Cmid) bf16
    """
    L1, L2 = H1 * Wu, H2 * Wu
    f32 = jnp.float32
    cmid = mid_ref.shape[-1]

    # ---- conv1: lane-concat the 3 dx-shifted views of xu and enc -> K = 3*(Cup+Cenc)
    lc1 = 2 * Wu + L1                       # == Hu*Wu; dx=2 slice ends at Lu+2 <= Lu+PAD
    cat1 = jnp.concatenate(
        [xu_ref[0, dx:dx + lc1, :] for dx in range(3)]
        + [en_ref[0, dx:dx + lc1, :] for dx in range(3)], axis=-1)
    acc = jnp.dot(cat1[0:L1], w1_ref[0], preferred_element_type=f32)
    for dy in (1, 2):
        acc += jnp.dot(cat1[dy * Wu:dy * Wu + L1], w1_ref[dy],
                       preferred_element_type=f32)
    mid_ref[0:L1, :] = jnp.maximum(acc + b1_ref[...], 0.0).astype(mid_ref.dtype)
    # PAD rows only ever feed garbage output columns, but keep them zeroed so
    # no uninitialized VMEM is consumed (do NOT remove as a micro-opt).
    mid_ref[L1:, :] = jnp.zeros((PAD, cmid), mid_ref.dtype)

    # ---- conv2: same dx folding on the mid plane -> K = 3*Cmid
    lc2 = 2 * Wu + L2                       # == L1; dx=2 slice ends at L1+2 <= L1+PAD
    cat2 = jnp.concatenate([mid_ref[dx:dx + lc2, :] for dx in range(3)], axis=-1)
    acc2 = jnp.dot(cat2[0:L2], w2_ref[0], preferred_element_type=f32)
    for dy in (1, 2):
        acc2 += jnp.dot(cat2[dy * Wu:dy * Wu + L2], w2_ref[dy],
                        preferred_element_type=f32)
    o_ref[0] = (acc2 + b2_ref[...]).astype(o_ref.dtype)


# ----------------------------------------------------------------------------
# Wrappers (flattened-plane bf16 layout)
# ----------------------------------------------------------------------------
def upconv_phases(x_flat, w, b):
    """x_flat: (N, L, Cin) bf16 flattened plane (may contain garbage columns).
    w: (Cin, Cup, 2, 2) PyTorch ConvTranspose2d layout; b: (Cup,).
    Returns (N, L, 4*Cup) bf16 phase tensor, flat channel = (ky*2+kx)*Cup + c."""
    N, L, Cin = x_flat.shape
    Cup = w.shape[1]
    wf = jnp.transpose(w, (0, 2, 3, 1)).reshape(Cin, 4 * Cup).astype(jnp.bfloat16)
    bf = jnp.tile(b, 4).reshape(1, 4 * Cup).astype(jnp.float32)
    return pl.pallas_call(
        upconv_kernel,
        out_shape=jax.ShapeDtypeStruct((N, L, 4 * Cup), jnp.bfloat16),
        grid=(N,),
        in_specs=[
            pl.BlockSpec((1, L, Cin), lambda n: (n, 0, 0)),
            pl.BlockSpec((Cin, 4 * Cup), lambda n: (0, 0)),
            pl.BlockSpec((1, 4 * Cup), lambda n: (0, 0)),
        ],
        out_specs=pl.BlockSpec((1, L, 4 * Cup), lambda n: (n, 0, 0)),
        compiler_params=pltpu.CompilerParams(
            dimension_semantics=("parallel",),
            vmem_limit_bytes=VMEM_LIMIT),
    )(x_flat, wf, bf)


def subpixel_scatter(ph, Hin, Sin, Win, Cup):
    """Phase tensor (N, Hin*Sin, 4*Cup) -> padded flat upsampled plane
    (N, 2*Hin*2*Win + PAD, Cup) bf16, dropping garbage columns w >= Win.
    Under jit this is a single fused bf16 copy (slice+transpose+reshape+pad).
    TODO(synk): move this 2x2 interleave into VMEM inside a fused upconv+block
                kernel (needs an in-kernel lane->sublane relayout)."""
    N = ph.shape[0]
    Hu, Wu = 2 * Hin, 2 * Win
    p = ph.reshape(N, Hin, Sin, 2, 2, Cup)[:, :, :Win]
    up = p.transpose(0, 1, 3, 2, 4, 5).reshape(N, Hu * Wu, Cup)
    return jnp.pad(up, ((0, 0), (0, PAD), (0, 0)))


def prep_residual(enc_nchw, Hu, Wu):
    """NCHW encoder residual -> center-cropped, flattened, padded bf16 plane."""
    He, We = enc_nchw.shape[2], enc_nchw.shape[3]
    top = int(round((He - Hu) / 2.0))
    left = int(round((We - Wu) / 2.0))
    e = jnp.transpose(enc_nchw[:, :, top:top + Hu, left:left + Wu], (0, 2, 3, 1))
    e = e.reshape(e.shape[0], Hu * Wu, e.shape[-1]).astype(jnp.bfloat16)
    return jnp.pad(e, ((0, 0), (0, PAD), (0, 0)))


def block(xu_flat, en_flat, c1_w, c1_b, c2_w, c2_b, *, Hu, Wu, out_dtype):
    """xu_flat/en_flat: (N, Hu*Wu+PAD, C) bf16 flattened planes (row stride Wu).
    c1_w: (Cmid, Cup+Cenc, 3, 3) OIHW (first Cup input channels match xu);
    c2_w: (Cout, Cmid, 3, 3).
    Returns flat (N, (Hu-4)*Wu, Cout) out_dtype; columns >= Wu-4 are garbage."""
    N = xu_flat.shape[0]
    Cup, Cenc = xu_flat.shape[-1], en_flat.shape[-1]
    Cmid, Cout = c1_w.shape[0], c2_w.shape[0]
    H1, H2 = Hu - 2, Hu - 4
    Lp, L2 = Hu * Wu + PAD, H2 * Wu

    # dx-folded weights; K order must match the in-kernel concat:
    # [xu dx0 | xu dx1 | xu dx2 | enc dx0 | enc dx1 | enc dx2]
    w1x = jnp.transpose(c1_w[:, :Cup], (2, 3, 1, 0)).reshape(3, 3 * Cup, Cmid)
    w1e = jnp.transpose(c1_w[:, Cup:], (2, 3, 1, 0)).reshape(3, 3 * Cenc, Cmid)
    w1 = jnp.concatenate([w1x, w1e], axis=1).astype(jnp.bfloat16)
    w2 = jnp.transpose(c2_w, (2, 3, 1, 0)).reshape(3, 3 * Cmid, Cout).astype(jnp.bfloat16)
    b1 = c1_b.reshape(1, Cmid).astype(jnp.float32)
    b2 = c2_b.reshape(1, Cout).astype(jnp.float32)

    kern = functools.partial(block_kernel, Wu=Wu, H1=H1, H2=H2)
    return pl.pallas_call(
        kern,
        out_shape=jax.ShapeDtypeStruct((N, L2, Cout), out_dtype),
        grid=(N,),
        in_specs=[
            pl.BlockSpec((1, Lp, Cup), lambda n: (n, 0, 0)),
            pl.BlockSpec((1, Lp, Cenc), lambda n: (n, 0, 0)),
            pl.BlockSpec((3, 3 * (Cup + Cenc), Cmid), lambda n: (0, 0, 0)),
            pl.BlockSpec((1, Cmid), lambda n: (0, 0)),
            pl.BlockSpec((3, 3 * Cmid, Cout), lambda n: (0, 0, 0)),
            pl.BlockSpec((1, Cout), lambda n: (0, 0)),
        ],
        out_specs=pl.BlockSpec((1, L2, Cout), lambda n: (n, 0, 0)),
        scratch_shapes=[pltpu.VMEM((H1 * Wu + PAD, Cmid), jnp.bfloat16)],
        compiler_params=pltpu.CompilerParams(
            dimension_semantics=("parallel",),
            vmem_limit_bytes=VMEM_LIMIT),
    )(xu_flat, en_flat, w1, b1, w2, b2)


def decoder_forward(params, x_nchw, encoder_residuals_nchw):
    """Matches Decoder.forward.  NCHW in/out; stages run on flattened bf16 planes.

    Garbage columns produced by valid convs are propagated (stride vs valid
    width bookkeeping) instead of cropped, so there are no inter-stage crop
    copies; only the final output is cropped."""
    N, C0, H0, W0 = x_nchw.shape
    x_flat = jnp.transpose(x_nchw, (0, 2, 3, 1)).reshape(N, H0 * W0, C0)
    x_flat = x_flat.astype(jnp.bfloat16)
    Hin, Sin, Win = H0, W0, W0            # rows, row stride, valid width

    n_stages = len(params["stages"])
    for i, p in enumerate(params["stages"]):
        Cup = p["up_w"].shape[1]
        ph = upconv_phases(x_flat, p["up_w"], p["up_b"])        # (N, Hin*Sin, 4*Cup) bf16
        Hu, Wu = 2 * Hin, 2 * Win
        xu = subpixel_scatter(ph, Hin, Sin, Win, Cup)           # (N, Hu*Wu+PAD, Cup)
        en = prep_residual(encoder_residuals_nchw[i], Hu, Wu)   # (N, Hu*Wu+PAD, Cenc)
        last = i == n_stages - 1
        x_flat = block(xu, en, p["c1_w"], p["c1_b"], p["c2_w"], p["c2_b"],
                       Hu=Hu, Wu=Wu,
                       out_dtype=jnp.float32 if last else jnp.bfloat16)
        Hin, Sin, Win = Hu - 4, Wu, Wu - 4                      # garbage columns propagate

    out = x_flat.reshape(N, Hin, Sin, -1)[:, :, :Win, :]        # final crop + NCHW
    return jnp.transpose(out, (0, 3, 1, 2)).astype(jnp.float32)


# ----------------------------------------------------------------------------
# Pure-JAX reference (NCHW, f32-exact) for sanity checking
# ----------------------------------------------------------------------------
def ref_conv2d(x, w, b):
    y = lax.conv_general_dilated(
        x, w, window_strides=(1, 1), padding="VALID",
        dimension_numbers=("NCHW", "OIHW", "NCHW"),
        precision=lax.Precision.HIGHEST)
    return y + b[None, :, None, None]


def ref_conv_transpose2x2(x, w, b):
    wk = jnp.transpose(jnp.flip(w, (2, 3)), (1, 0, 2, 3))  # (Cout,Cin,2,2)
    y = lax.conv_general_dilated(
        x, wk, window_strides=(1, 1), padding=((1, 1), (1, 1)),
        lhs_dilation=(2, 2), dimension_numbers=("NCHW", "OIHW", "NCHW"),
        precision=lax.Precision.HIGHEST)
    return y + b[None, :, None, None]


def ref_center_crop_nchw(t, H, W):
    h, w = t.shape[2], t.shape[3]
    top = int(round((h - H) / 2.0))
    left = int(round((w - W) / 2.0))
    return t[:, :, top:top + H, left:left + W]


def ref_forward(params, x, residuals):
    for i, p in enumerate(params["stages"]):
        x = ref_conv_transpose2x2(x, p["up_w"], p["up_b"])
        enc = ref_center_crop_nchw(residuals[i], x.shape[2], x.shape[3])
        x = jnp.concatenate([x, enc], axis=1)
        x = ref_conv2d(x, p["c1_w"], p["c1_b"])
        x = jnp.maximum(x, 0.0)
        x = ref_conv2d(x, p["c2_w"], p["c2_b"])
    return x


# ----------------------------------------------------------------------------
# Deterministic parameter init (shapes follow the PyTorch module)
# ----------------------------------------------------------------------------
def init_params(key, chs):
    stages = []
    for i in range(len(chs) - 1):
        cin, cout = chs[i], chs[i + 1]
        k = jax.random.fold_in(key, i)
        k1, k2, k3, k4, k5, k6 = jax.random.split(k, 6)
        stages.append(dict(
            up_w=0.1 * jax.random.normal(k1, (cin, cout, 2, 2), jnp.float32),
            up_b=0.1 * jax.random.normal(k2, (cout,), jnp.float32),
            c1_w=0.1 * jax.random.normal(k3, (cout, cin, 3, 3), jnp.float32),
            c1_b=0.1 * jax.random.normal(k4, (cout,), jnp.float32),
            c2_w=0.1 * jax.random.normal(k5, (cout, cout, 3, 3), jnp.float32),
            c2_b=0.1 * jax.random.normal(k6, (cout,), jnp.float32),
        ))
    return dict(stages=stages)


if __name__ == "__main__":
    # Small shapes: chs=(32,16,8) (2 decoder stages), batch=2, spatial 6x6.
    chs = (32, 16, 8)
    N = 2

    params = init_params(jax.random.PRNGKey(0), chs)

    kx, kr0, kr1 = jax.random.split(jax.random.PRNGKey(0), 3)
    x = jax.random.normal(kx, (N, chs[0], 6, 6), jnp.float32)
    encoder_residual = [
        jax.random.normal(kr0, (N, chs[1], 16, 16), jnp.float32),
        jax.random.normal(kr1, (N, chs[2], 18, 18), jnp.float32),
    ]

    fwd = jax.jit(decoder_forward)
    out = fwd(params, x, encoder_residual)
    out = jax.block_until_ready(out)

    ref = ref_forward(params, x, encoder_residual)
    assert out.shape == (N, chs[-1], 12, 12), out.shape
    rel = float(jnp.max(jnp.abs(out - ref)) / (jnp.max(jnp.abs(ref)) + 1e-6))
    assert rel < 0.05, f"max relative error too high: {rel}"

    print("KERNEL_OK")
</pallas_src>

<mosaic_0001>
module attributes {stable_mosaic.version = 11 : i64} {
  func.func @upconv_kernel(%arg0: i32, %arg1: memref<1x36x32xbf16, #tpu.memory_space<vmem>>, %arg2: memref<32x64xbf16, #tpu.memory_space<vmem>>, %arg3: memref<1x64xf32, #tpu.memory_space<vmem>>, %arg4: memref<1x36x64xbf16, #tpu.memory_space<vmem>>) attributes {dimension_semantics = [#tpu.dimension_semantics<parallel>], iteration_bounds = array<i64: 2>, scalar_prefetch = 0 : i64, scratch_operands = 0 : i64, tpu.core_type = #tpu.core_type<tc>, window_params = [{transform_indices = @transform_0, window_bounds = array<i64: 1, 36, 32>}, {pipeline_mode = #tpu.pipeline_mode<synchronous>, transform_indices = @transform_1, window_bounds = array<i64: 32, 64>}, {pipeline_mode = #tpu.pipeline_mode<synchronous>, transform_indices = @transform_2, window_bounds = array<i64: 1, 64>}, {transform_indices = @transform_3, window_bounds = array<i64: 1, 36, 64>}]} {
    %c0 = arith.constant 0 : index
    %c0_0 = arith.constant 0 : index
    %c0_1 = arith.constant 0 : index
    %0 = vector.load %arg1[%c0, %c0_0, %c0_1] : memref<1x36x32xbf16, #tpu.memory_space<vmem>>, vector<1x36x32xbf16>
    %1 = vector.shape_cast %0 : vector<1x36x32xbf16> to vector<36x32xbf16>
    %c0_2 = arith.constant 0 : index
    %c0_3 = arith.constant 0 : index
    %2 = vector.load %arg2[%c0_2, %c0_3] : memref<32x64xbf16, #tpu.memory_space<vmem>>, vector<32x64xbf16>
    %cst = arith.constant dense<0.000000e+00> : vector<36x64xf32>
    %3 = tpu.matmul %1, %2, %cst {dimension_numbers = #tpu.dot_dimension_numbers<[1], [0], [0], [1], [0, 0, 1, 1], [], []>} : vector<36x32xbf16>, vector<32x64xbf16>, vector<36x64xf32> -> vector<36x64xf32>
    %c0_4 = arith.constant 0 : index
    %c0_5 = arith.constant 0 : index
    %4 = vector.load %arg3[%c0_4, %c0_5] : memref<1x64xf32, #tpu.memory_space<vmem>>, vector<1x64xf32>
    %5 = vector.broadcast %4 : vector<1x64xf32> to vector<36x64xf32>
    %6 = arith.addf %3, %5 : vector<36x64xf32>
    %7 = arith.truncf %6 : vector<36x64xf32> to vector<36x64xbf16>
    %c0_6 = arith.constant 0 : index
    %c0_7 = arith.constant 0 : index
    %c0_8 = arith.constant 0 : index
    %8 = vector.load %arg4[%c0_6, %c0_7, %c0_8] : memref<1x36x64xbf16, #tpu.memory_space<vmem>>, vector<1x36x64xbf16>
    %9 = vector.shape_cast %8 : vector<1x36x64xbf16> to vector<36x64xbf16>
    %10 = vector.shape_cast %7 : vector<36x64xbf16> to vector<1x36x64xbf16>
    tpu.vector_store %arg4[%c0_6, %c0_7, %c0_8], %10 {strides = array<i32>} : memref<1x36x64xbf16, #tpu.memory_space<vmem>>, vector<1x36x64xbf16>,
    return
  }
  func.func @transform_0(%arg0: i32) -> (i32, i32, i32) {
    %c0_i32 = arith.constant 0 : i32
    %c0_i32_0 = arith.constant 0 : i32
    %c0_i32_1 = arith.constant 0 : i32
    return %arg0, %c0_i32, %c0_i32_0 : i32, i32, i32
  }
  func.func @transform_1(%arg0: i32) -> (i32, i32) {
    %c0_i32 = arith.constant 0 : i32
    %c0_i32_0 = arith.constant 0 : i32
    %c0_i32_1 = arith.constant 0 : i32
    return %c0_i32, %c0_i32_0 : i32, i32
  }
  func.func @transform_2(%arg0: i32) -> (i32, i32) {
    %c0_i32 = arith.constant 0 : i32
    %c0_i32_0 = arith.constant 0 : i32
    %c0_i32_1 = arith.constant 0 : i32
    return %c0_i32, %c0_i32_0 : i32, i32
  }
  func.func @transform_3(%arg0: i32) -> (i32, i32, i32) {
    %c0_i32 = arith.constant 0 : i32
    %c0_i32_0 = arith.constant 0 : i32
    %c0_i32_1 = arith.constant 0 : i32
    return %arg0, %c0_i32, %c0_i32_0 : i32, i32, i32
  }
}

module attributes {stable_mosaic.version = 11 : i64} {
  func.func @block_kernel(%arg0: i32, %arg1: memref<1x152x16xbf16, #tpu.memory_space<vmem>>, %arg2: memref<1x152x16xbf16, #tpu.memory_space<vmem>>, %arg3: memref<3x96x16xbf16, #tpu.memory_space<vmem>>, %arg4: memref<1x16xf32, #tpu.memory_space<vmem>>, %arg5: memref<3x48x16xbf16, #tpu.memory_space<vmem>>, %arg6: memref<1x16xf32, #tpu.memory_space<vmem>>, %arg7: memref<1x96x16xbf16, #tpu.memory_space<vmem>>, %arg8: memref<128x16xbf16, #tpu.memory_space<vmem>>) attributes {dimension_semantics = [#tpu.dimension_semantics<parallel>], iteration_bounds = array<i64: 2>, scalar_prefetch = 0 : i64, scratch_operands = 1 : i64, tpu.core_type = #tpu.core_type<tc>, window_params = [{transform_indices = @transform_0, window_bounds = array<i64: 1, 152, 16>}, {transform_indices = @transform_1, window_bounds = array<i64: 1, 152, 16>}, {pipeline_mode = #tpu.pipeline_mode<synchronous>, transform_indices = @transform_2, window_bounds = array<i64: 3, 96, 16>}, {pipeline_mode = #tpu.pipeline_mode<synchronous>, transform_indices = @transform_3, window_bounds = array<i64: 1, 16>}, {pipeline_mode = #tpu.pipeline_mode<synchronous>, transform_indices = @transform_4, window_bounds = array<i64: 3, 48, 16>}, {pipeline_mode = #tpu.pipeline_mode<synchronous>, transform_indices = @transform_5, window_bounds = array<i64: 1, 16>}, {transform_indices = @transform_6, window_bounds = array<i64: 1, 96, 16>}]} {
    %c0 = arith.constant 0 : index
    %c0_0 = arith.constant 0 : index
    %c0_1 = arith.constant 0 : index
    %0 = vector.load %arg1[%c0, %c0_0, %c0_1] : memref<1x152x16xbf16, #tpu.memory_space<vmem>>, vector<1x144x16xbf16>
    %1 = vector.shape_cast %0 : vector<1x144x16xbf16> to vector<144x16xbf16>
    %c0_2 = arith.constant 0 : index
    %c1 = arith.constant 1 : index
    %c0_3 = arith.constant 0 : index
    %2 = vector.load %arg1[%c0_2, %c1, %c0_3] : memref<1x152x16xbf16, #tpu.memory_space<vmem>>, vector<1x144x16xbf16>
    %3 = vector.shape_cast %2 : vector<1x144x16xbf16> to vector<144x16xbf16>
    %c0_4 = arith.constant 0 : index
    %c2 = arith.constant 2 : index
    %c0_5 = arith.constant 0 : index
    %4 = vector.load %arg1[%c0_4, %c2, %c0_5] : memref<1x152x16xbf16, #tpu.memory_space<vmem>>, vector<1x144x16xbf16>
    %5 = vector.shape_cast %4 : vector<1x144x16xbf16> to vector<144x16xbf16>
    %c0_6 = arith.constant 0 : index
    %c0_7 = arith.constant 0 : index
    %c0_8 = arith.constant 0 : index
    %6 = vector.load %arg2[%c0_6, %c0_7, %c0_8] : memref<1x152x16xbf16, #tpu.memory_space<vmem>>, vector<1x144x16xbf16>
    %7 = vector.shape_cast %6 : vector<1x144x16xbf16> to vector<144x16xbf16>
    %c0_9 = arith.constant 0 : index
    %c1_10 = arith.constant 1 : index
    %c0_11 = arith.constant 0 : index
    %8 = vector.load %arg2[%c0_9, %c1_10, %c0_11] : memref<1x152x16xbf16, #tpu.memory_space<vmem>>, vector<1x144x16xbf16>
    %9 = vector.shape_cast %8 : vector<1x144x16xbf16> to vector<144x16xbf16>
    %c0_12 = arith.constant 0 : index
    %c2_13 = arith.constant 2 : index
    %c0_14 = arith.constant 0 : index
    %10 = vector.load %arg2[%c0_12, %c2_13, %c0_14] : memref<1x152x16xbf16, #tpu.memory_space<vmem>>, vector<1x144x16xbf16>
    %11 = vector.shape_cast %10 : vector<1x144x16xbf16> to vector<144x16xbf16>
    %12 = tpu.concatenate %1, %3, %5, %7, %9, %11 in 1 : vector<144x16xbf16>, vector<144x16xbf16>, vector<144x16xbf16>, vector<144x16xbf16>, vector<144x16xbf16>, vector<144x16xbf16> -> vector<144x96xbf16>
    %13 = vector.extract_strided_slice %12 {offsets = [0, 0], sizes = [120, 96], strides = [1, 1]} : vector<144x96xbf16> to vector<120x96xbf16>
    %c0_15 = arith.constant 0 : index
    %c0_16 = arith.constant 0 : index
    %c0_17 = arith.constant 0 : index
    %14 = vector.load %arg3[%c0_15, %c0_16, %c0_17] : memref<3x96x16xbf16, #tpu.memory_space<vmem>>, vector<1x96x16xbf16>
    %15 = vector.shape_cast %14 : vector<1x96x16xbf16> to vector<96x16xbf16>
    %cst = arith.constant dense<0.000000e+00> : vector<120x16xf32>
    %16 = tpu.matmul %13, %15, %cst {dimension_numbers = #tpu.dot_dimension_numbers<[1], [0], [0], [1], [0, 0, 1, 1], [], []>} : vector<120x96xbf16>, vector<96x16xbf16>, vector<120x16xf32> -> vector<120x16xf32>
    %17 = vector.extract_strided_slice %12 {offsets = [12, 0], sizes = [120, 96], strides = [1, 1]} : vector<144x96xbf16> to vector<120x96xbf16>
    %c1_18 = arith.constant 1 : index
    %c0_19 = arith.constant 0 : index
    %c0_20 = arith.constant 0 : index
    %18 = vector.load %arg3[%c1_18, %c0_19, %c0_20] : memref<3x96x16xbf16, #tpu.memory_space<vmem>>, vector<1x96x16xbf16>
    %19 = vector.shape_cast %18 : vector<1x96x16xbf16> to vector<96x16xbf16>
    %cst_21 = arith.constant dense<0.000000e+00> : vector<120x16xf32>
    %20 = tpu.matmul %17, %19, %cst_21 {dimension_numbers = #tpu.dot_dimension_numbers<[1], [0], [0], [1], [0, 0, 1, 1], [], []>} : vector<120x96xbf16>, vector<96x16xbf16>, vector<120x16xf32> -> vector<120x16xf32>
    %21 = arith.addf %16, %20 : vector<120x16xf32>
    %22 = vector.extract_strided_slice %12 {offsets = [24, 0], sizes = [120, 96], strides = [1, 1]} : vector<144x96xbf16> to vector<120x96xbf16>
    %c2_22 = arith.constant 2 : index
    %c0_23 = arith.constant 0 : index
    %c0_24 = arith.constant 0 : index
    %23 = vector.load %arg3[%c2_22, %c0_23, %c0_24] : memref<3x96x16xbf16, #tpu.memory_space<vmem>>, vector<1x96x16xbf16>
    %24 = vector.shape_cast %23 : vector<1x96x16xbf16> to vector<96x16xbf16>
    %cst_25 = arith.constant dense<0.000000e+00> : vector<120x16xf32>
    %25 = tpu.matmul %22, %24, %cst_25 {dimension_numbers = #tpu.dot_dimension_numbers<[1], [0], [0], [1], [0, 0, 1, 1], [], []>} : vector<120x96xbf16>, vector<96x16xbf16>, vector<120x16xf32> -> vector<120x16xf32>
    %26 = arith.addf %21, %25 : vector<120x16xf32>
    %c0_26 = arith.constant 0 : index
    %c0_27 = arith.constant 0 : index
    %27 = vector.load %arg4[%c0_26, %c0_27] : memref<1x16xf32, #tpu.memory_space<vmem>>, vector<1x16xf32>
    %28 = vector.broadcast %27 : vector<1x16xf32> to vector<120x16xf32>
    %29 = arith.addf %26, %28 : vector<120x16xf32>
    %cst_28 = arith.constant 0.000000e+00 : f32
    %30 = vector.broadcast %cst_28 : f32 to vector<120x16xf32>
    %31 = arith.maximumf %29, %30 : vector<120x16xf32>
    %32 = arith.truncf %31 : vector<120x16xf32> to vector<120x16xbf16>
    %c0_29 = arith.constant 0 : index
    %c0_30 = arith.constant 0 : index
    %33 = vector.load %arg8[%c0_29, %c0_30] : memref<128x16xbf16, #tpu.memory_space<vmem>>, vector<120x16xbf16>
    tpu.vector_store %arg8[%c0_29, %c0_30], %32 {strides = array<i32>} : memref<128x16xbf16, #tpu.memory_space<vmem>>, vector<120x16xbf16>,
    %cst_31 = arith.constant 0.000000e+00 : bf16
    %34 = vector.broadcast %cst_31 : bf16 to vector<8x16xbf16>
    %c120 = arith.constant 120 : index
    %c0_32 = arith.constant 0 : index
    %35 = vector.load %arg8[%c120, %c0_32] : memref<128x16xbf16, #tpu.memory_space<vmem>>, vector<8x16xbf16>
    tpu.vector_store %arg8[%c120, %c0_32], %34 {strides = array<i32>} : memref<128x16xbf16, #tpu.memory_space<vmem>>, vector<8x16xbf16>,
    %c0_33 = arith.constant 0 : index
    %c0_34 = arith.constant 0 : index
    %36 = vector.load %arg8[%c0_33, %c0_34] : memref<128x16xbf16, #tpu.memory_space<vmem>>, vector<120x16xbf16>
    %c1_35 = arith.constant 1 : index
    %c0_36 = arith.constant 0 : index
    %37 = vector.load %arg8[%c1_35, %c0_36] : memref<128x16xbf16, #tpu.memory_space<vmem>>, vector<120x16xbf16>
    %c2_37 = arith.constant 2 : index
    %c0_38 = arith.constant 0 : index
    %38 = vector.load %arg8[%c2_37, %c0_38] : memref<128x16xbf16, #tpu.memory_space<vmem>>, vector<120x16xbf16>
    %39 = tpu.concatenate %36, %37, %38 in 1 : vector<120x16xbf16>, vector<120x16xbf16>, vector<120x16xbf16> -> vector<120x48xbf16>
    %40 = vector.extract_strided_slice %39 {offsets = [0, 0], sizes = [96, 48], strides = [1, 1]} : vector<120x48xbf16> to vector<96x48xbf16>
    %c0_39 = arith.constant 0 : index
    %c0_40 = arith.constant 0 : index
    %c0_41 = arith.constant 0 : index
    %41 = vector.load %arg5[%c0_39, %c0_40, %c0_41] : memref<3x48x16xbf16, #tpu.memory_space<vmem>>, vector<1x48x16xbf16>
    %42 = vector.shape_cast %41 : vector<1x48x16xbf16> to vector<48x16xbf16>
    %cst_42 = arith.constant dense<0.000000e+00> : vector<96x16xf32>
    %43 = tpu.matmul %40, %42, %cst_42 {dimension_numbers = #tpu.dot_dimension_numbers<[1], [0], [0], [1], [0, 0, 1, 1], [], []>} : vector<96x48xbf16>, vector<48x16xbf16>, vector<96x16xf32> -> vector<96x16xf32>
    %44 = vector.extract_strided_slice %39 {offsets = [12, 0], sizes = [96, 48], strides = [1, 1]} : vector<120x48xbf16> to vector<96x48xbf16>
    %c1_43 = arith.constant 1 : index
    %c0_44 = arith.constant 0 : index
    %c0_45 = arith.constant 0 : index
    %45 = vector.load %arg5[%c1_43, %c0_44, %c0_45] : memref<3x48x16xbf16, #tpu.memory_space<vmem>>, vector<1x48x16xbf16>
    %46 = vector.shape_cast %45 : vector<1x48x16xbf16> to vector<48x16xbf16>
    %cst_46 = arith.constant dense<0.000000e+00> : vector<96x16xf32>
    %47 = tpu.matmul %44, %46, %cst_46 {dimension_numbers = #tpu.dot_dimension_numbers<[1], [0], [0], [1], [0, 0, 1, 1], [], []>} : vector<96x48xbf16>, vector<48x16xbf16>, vector<96x16xf32> -> vector<96x16xf32>
    %48 = arith.addf %43, %47 : vector<96x16xf32>
    %49 = vector.extract_strided_slice %39 {offsets = [24, 0], sizes = [96, 48], strides = [1, 1]} : vector<120x48xbf16> to vector<96x48xbf16>
    %c2_47 = arith.constant 2 : index
    %c0_48 = arith.constant 0 : index
    %c0_49 = arith.constant 0 : index
    %50 = vector.load %arg5[%c2_47, %c0_48, %c0_49] : memref<3x48x16xbf16, #tpu.memory_space<vmem>>, vector<1x48x16xbf16>
    %51 = vector.shape_cast %50 : vector<1x48x16xbf16> to vector<48x16xbf16>
    %cst_50 = arith.constant dense<0.000000e+00> : vector<96x16xf32>
    %52 = tpu.matmul %49, %51, %cst_50 {dimension_numbers = #tpu.dot_dimension_numbers<[1], [0], [0], [1], [0, 0, 1, 1], [], []>} : vector<96x48xbf16>, vector<48x16xbf16>, vector<96x16xf32> -> vector<96x16xf32>
    %53 = arith.addf %48, %52 : vector<96x16xf32>
    %c0_51 = arith.constant 0 : index
    %c0_52 = arith.constant 0 : index
    %54 = vector.load %arg6[%c0_51, %c0_52] : memref<1x16xf32, #tpu.memory_space<vmem>>, vector<1x16xf32>
    %55 = vector.broadcast %54 : vector<1x16xf32> to vector<96x16xf32>
    %56 = arith.addf %53, %55 : vector<96x16xf32>
    %57 = arith.truncf %56 : vector<96x16xf32> to vector<96x16xbf16>
    %c0_53 = arith.constant 0 : index
    %c0_54 = arith.constant 0 : index
    %c0_55 = arith.constant 0 : index
    %58 = vector.load %arg7[%c0_53, %c0_54, %c0_55] : memref<1x96x16xbf16, #tpu.memory_space<vmem>>, vector<1x96x16xbf16>
    %59 = vector.shape_cast %58 : vector<1x96x16xbf16> to vector<96x16xbf16>
    %60 = vector.shape_cast %57 : vector<96x16xbf16> to vector<1x96x16xbf16>
    tpu.vector_store %arg7[%c0_53, %c0_54, %c0_55], %60 {strides = array<i32>} : memref<1x96x16xbf16, #tpu.memory_space<vmem>>, vector<1x96x16xbf16>,
    return
  }
  func.func @transform_0(%arg0: i32) -> (i32, i32, i32) {
    %c0_i32 = arith.constant 0 : i32
    %c0_i32_0 = arith.constant 0 : i32
    %c0_i32_1 = arith.constant 0 : i32
    return %arg0, %c0_i32, %c0_i32_0 : i32, i32, i32
  }
  func.func @transform_1(%arg0: i32) -> (i32, i32, i32) {
    %c0_i32 = arith.constant 0 : i32
    %c0_i32_0 = arith.constant 0 : i32
    %c0_i32_1 = arith.constant 0 : i32
    return %arg0, %c0_i32, %c0_i32_0 : i32, i32, i32
  }
  func.func @transform_2(%arg0: i32) -> (i32, i32, i32) {
    %c0_i32 = arith.constant 0 : i32
    %c0_i32_0 = arith.constant 0 : i32
    %c0_i32_1 = arith.constant 0 : i32
    %c0_i32_2 = arith.constant 0 : i32
    return %c0_i32, %c0_i32_0, %c0_i32_1 : i32, i32, i32
  }
  func.func @transform_3(%arg0: i32) -> (i32, i32) {
    %c0_i32 = arith.constant 0 : i32
    %c0_i32_0 = arith.constant 0 : i32
    %c0_i32_1 = arith.constant 0 : i32
    return %c0_i32, %c0_i32_0 : i32, i32
  }
  func.func @transform_4(%arg0: i32) -> (i32, i32, i32) {
    %c0_i32 = arith.constant 0 : i32
    %c0_i32_0 = arith.constant 0 : i32
    %c0_i32_1 = arith.constant 0 : i32
    %c0_i32_2 = arith.constant 0 : i32
    return %c0_i32, %c0_i32_0, %c0_i32_1 : i32, i32, i32
  }
  func.func @transform_5(%arg0: i32) -> (i32, i32) {
    %c0_i32 = arith.constant 0 : i32
    %c0_i32_0 = arith.constant 0 : i32
    %c0_i32_1 = arith.constant 0 : i32
    return %c0_i32, %c0_i32_0 : i32, i32
  }
  func.func @transform_6(%arg0: i32) -> (i32, i32, i32) {
    %c0_i32 = arith.constant 0 : i32
    %c0_i32_0 = arith.constant 0 : i32
    %c0_i32_1 = arith.constant 0 : i32
    return %arg0, %c0_i32, %c0_i32_0 : i32, i32, i32
  }
}

module attributes {stable_mosaic.version = 11 : i64} {
  func.func @upconv_kernel(%arg0: i32, %arg1: memref<1x96x16xbf16, #tpu.memory_space<vmem>>, %arg2: memref<16x32xbf16, #tpu.memory_space<vmem>>, %arg3: memref<1x32xf32, #tpu.memory_space<vmem>>, %arg4: memref<1x96x32xbf16, #tpu.memory_space<vmem>>) attributes {dimension_semantics = [#tpu.dimension_semantics<parallel>], iteration_bounds = array<i64: 2>, scalar_prefetch = 0 : i64, scratch_operands = 0 : i64, tpu.core_type = #tpu.core_type<tc>, window_params = [{transform_indices = @transform_0, window_bounds = array<i64: 1, 96, 16>}, {pipeline_mode = #tpu.pipeline_mode<synchronous>, transform_indices = @transform_1, window_bounds = array<i64: 16, 32>}, {pipeline_mode = #tpu.pipeline_mode<synchronous>, transform_indices = @transform_2, window_bounds = array<i64: 1, 32>}, {transform_indices = @transform_3, window_bounds = array<i64: 1, 96, 32>}]} {
    %c0 = arith.constant 0 : index
    %c0_0 = arith.constant 0 : index
    %c0_1 = arith.constant 0 : index
    %0 = vector.load %arg1[%c0, %c0_0, %c0_1] : memref<1x96x16xbf16, #tpu.memory_space<vmem>>, vector<1x96x16xbf16>
    %1 = vector.shape_cast %0 : vector<1x96x16xbf16> to vector<96x16xbf16>
    %c0_2 = arith.constant 0 : index
    %c0_3 = arith.constant 0 : index
    %2 = vector.load %arg2[%c0_2, %c0_3] : memref<16x32xbf16, #tpu.memory_space<vmem>>, vector<16x32xbf16>
    %cst = arith.constant dense<0.000000e+00> : vector<96x32xf32>
    %3 = tpu.matmul %1, %2, %cst {dimension_numbers = #tpu.dot_dimension_numbers<[1], [0], [0], [1], [0, 0, 1, 1], [], []>} : vector<96x16xbf16>, vector<16x32xbf16>, vector<96x32xf32> -> vector<96x32xf32>
    %c0_4 = arith.constant 0 : index
    %c0_5 = arith.constant 0 : index
    %4 = vector.load %arg3[%c0_4, %c0_5] : memref<1x32xf32, #tpu.memory_space<vmem>>, vector<1x32xf32>
    %5 = vector.broadcast %4 : vector<1x32xf32> to vector<96x32xf32>
    %6 = arith.addf %3, %5 : vector<96x32xf32>
    %7 = arith.truncf %6 : vector<96x32xf32> to vector<96x32xbf16>
    %c0_6 = arith.constant 0 : index
    %c0_7 = arith.constant 0 : index
    %c0_8 = arith.constant 0 : index
    %8 = vector.load %arg4[%c0_6, %c0_7, %c0_8] : memref<1x96x32xbf16, #tpu.memory_space<vmem>>, vector<1x96x32xbf16>
    %9 = vector.shape_cast %8 : vector<1x96x32xbf16> to vector<96x32xbf16>
    %10 = vector.shape_cast %7 : vector<96x32xbf16> to vector<1x96x32xbf16>
    tpu.vector_store %arg4[%c0_6, %c0_7, %c0_8], %10 {strides = array<i32>} : memref<1x96x32xbf16, #tpu.memory_space<vmem>>, vector<1x96x32xbf16>,
    return
  }
  func.func @transform_0(%arg0: i32) -> (i32, i32, i32) {
    %c0_i32 = arith.constant 0 : i32
    %c0_i32_0 = arith.constant 0 : i32
    %c0_i32_1 = arith.constant 0 : i32
    return %arg0, %c0_i32, %c0_i32_0 : i32, i32, i32
  }
  func.func @transform_1(%arg0: i32) -> (i32, i32) {
    %c0_i32 = arith.constant 0 : i32
    %c0_i32_0 = arith.constant 0 : i32
    %c0_i32_1 = arith.constant 0 : i32
    return %c0_i32, %c0_i32_0 : i32, i32
  }
  func.func @transform_2(%arg0: i32) -> (i32, i32) {
    %c0_i32 = arith.constant 0 : i32
    %c0_i32_0 = arith.constant 0 : i32
    %c0_i32_1 = arith.constant 0 : i32
    return %c0_i32, %c0_i32_0 : i32, i32
  }
  func.func @transform_3(%arg0: i32) -> (i32, i32, i32) {
    %c0_i32 = arith.constant 0 : i32
    %c0_i32_0 = arith.constant 0 : i32
    %c0_i32_1 = arith.constant 0 : i32
    return %arg0, %c0_i32, %c0_i32_0 : i32, i32, i32
  }
}

module attributes {stable_mosaic.version = 11 : i64} {
  func.func @block_kernel(%arg0: i32, %arg1: memref<1x264x8xbf16, #tpu.memory_space<vmem>>, %arg2: memref<1x264x8xbf16, #tpu.memory_space<vmem>>, %arg3: memref<3x48x8xbf16, #tpu.memory_space<vmem>>, %arg4: memref<1x8xf32, #tpu.memory_space<vmem>>, %arg5: memref<3x24x8xbf16, #tpu.memory_space<vmem>>, %arg6: memref<1x8xf32, #tpu.memory_space<vmem>>, %arg7: memref<1x192x8xf32, #tpu.memory_space<vmem>>, %arg8: memref<232x8xbf16, #tpu.memory_space<vmem>>) attributes {dimension_semantics = [#tpu.dimension_semantics<parallel>], iteration_bounds = array<i64: 2>, scalar_prefetch = 0 : i64, scratch_operands = 1 : i64, tpu.core_type = #tpu.core_type<tc>, window_params = [{transform_indices = @transform_0, window_bounds = array<i64: 1, 264, 8>}, {transform_indices = @transform_1, window_bounds = array<i64: 1, 264, 8>}, {pipeline_mode = #tpu.pipeline_mode<synchronous>, transform_indices = @transform_2, window_bounds = array<i64: 3, 48, 8>}, {pipeline_mode = #tpu.pipeline_mode<synchronous>, transform_indices = @transform_3, window_bounds = array<i64: 1, 8>}, {pipeline_mode = #tpu.pipeline_mode<synchronous>, transform_indices = @transform_4, window_bounds = array<i64: 3, 24, 8>}, {pipeline_mode = #tpu.pipeline_mode<synchronous>, transform_indices = @transform_5, window_bounds = array<i64: 1, 8>}, {transform_indices = @transform_6, window_bounds = array<i64: 1, 192, 8>}]} {
    %c0 = arith.constant 0 : index
    %c0_0 = arith.constant 0 : index
    %c0_1 = arith.constant 0 : index
    %0 = vector.load %arg1[%c0, %c0_0, %c0_1] : memref<1x264x8xbf16, #tpu.memory_space<vmem>>, vector<1x256x8xbf16>
    %1 = vector.shape_cast %0 : vector<1x256x8xbf16> to vector<256x8xbf16>
    %c0_2 = arith.constant 0 : index
    %c1 = arith.constant 1 : index
    %c0_3 = arith.constant 0 : index
    %2 = vector.load %arg1[%c0_2, %c1, %c0_3] : memref<1x264x8xbf16, #tpu.memory_space<vmem>>, vector<1x256x8xbf16>
    %3 = vector.shape_cast %2 : vector<1x256x8xbf16> to vector<256x8xbf16>
    %c0_4 = arith.constant 0 : index
    %c2 = arith.constant 2 : index
    %c0_5 = arith.constant 0 : index
    %4 = vector.load %arg1[%c0_4, %c2, %c0_5] : memref<1x264x8xbf16, #tpu.memory_space<vmem>>, vector<1x256x8xbf16>
    %5 = vector.shape_cast %4 : vector<1x256x8xbf16> to vector<256x8xbf16>
    %c0_6 = arith.constant 0 : index
    %c0_7 = arith.constant 0 : index
    %c0_8 = arith.constant 0 : index
    %6 = vector.load %arg2[%c0_6, %c0_7, %c0_8] : memref<1x264x8xbf16, #tpu.memory_space<vmem>>, vector<1x256x8xbf16>
    %7 = vector.shape_cast %6 : vector<1x256x8xbf16> to vector<256x8xbf16>
    %c0_9 = arith.constant 0 : index
    %c1_10 = arith.constant 1 : index
    %c0_11 = arith.constant 0 : index
    %8 = vector.load %arg2[%c0_9, %c1_10, %c0_11] : memref<1x264x8xbf16, #tpu.memory_space<vmem>>, vector<1x256x8xbf16>
    %9 = vector.shape_cast %8 : vector<1x256x8xbf16> to vector<256x8xbf16>
    %c0_12 = arith.constant 0 : index
    %c2_13 = arith.constant 2 : index
    %c0_14 = arith.constant 0 : index
    %10 = vector.load %arg2[%c0_12, %c2_13, %c0_14] : memref<1x264x8xbf16, #tpu.memory_space<vmem>>, vector<1x256x8xbf16>
    %11 = vector.shape_cast %10 : vector<1x256x8xbf16> to vector<256x8xbf16>
    %12 = tpu.concatenate %1, %3, %5, %7, %9, %11 in 1 : vector<256x8xbf16>, vector<256x8xbf16>, vector<256x8xbf16>, vector<256x8xbf16>, vector<256x8xbf16>, vector<256x8xbf16> -> vector<256x48xbf16>
    %13 = vector.extract_strided_slice %12 {offsets = [0, 0], sizes = [224, 48], strides = [1, 1]} : vector<256x48xbf16> to vector<224x48xbf16>
    %c0_15 = arith.constant 0 : index
    %c0_16 = arith.constant 0 : index
    %c0_17 = arith.constant 0 : index
    %14 = vector.load %arg3[%c0_15, %c0_16, %c0_17] : memref<3x48x8xbf16, #tpu.memory_space<vmem>>, vector<1x48x8xbf16>
    %15 = vector.shape_cast %14 : vector<1x48x8xbf16> to vector<48x8xbf16>
    %cst = arith.constant dense<0.000000e+00> : vector<224x8xf32>
    %16 = tpu.matmul %13, %15, %cst {dimension_numbers = #tpu.dot_dimension_numbers<[1], [0], [0], [1], [0, 0, 1, 1], [], []>} : vector<224x48xbf16>, vector<48x8xbf16>, vector<224x8xf32> -> vector<224x8xf32>
    %17 = vector.extract_strided_slice %12 {offsets = [16, 0], sizes = [224, 48], strides = [1, 1]} : vector<256x48xbf16> to vector<224x48xbf16>
    %c1_18 = arith.constant 1 : index
    %c0_19 = arith.constant 0 : index
    %c0_20 = arith.constant 0 : index
    %18 = vector.load %arg3[%c1_18, %c0_19, %c0_20] : memref<3x48x8xbf16, #tpu.memory_space<vmem>>, vector<1x48x8xbf16>
    %19 = vector.shape_cast %18 : vector<1x48x8xbf16> to vector<48x8xbf16>
    %cst_21 = arith.constant dense<0.000000e+00> : vector<224x8xf32>
    %20 = tpu.matmul %17, %19, %cst_21 {dimension_numbers = #tpu.dot_dimension_numbers<[1], [0], [0], [1], [0, 0, 1, 1], [], []>} : vector<224x48xbf16>, vector<48x8xbf16>, vector<224x8xf32> -> vector<224x8xf32>
    %21 = arith.addf %16, %20 : vector<224x8xf32>
    %22 = vector.extract_strided_slice %12 {offsets = [32, 0], sizes = [224, 48], strides = [1, 1]} : vector<256x48xbf16> to vector<224x48xbf16>
    %c2_22 = arith.constant 2 : index
    %c0_23 = arith.constant 0 : index
    %c0_24 = arith.constant 0 : index
    %23 = vector.load %arg3[%c2_22, %c0_23, %c0_24] : memref<3x48x8xbf16, #tpu.memory_space<vmem>>, vector<1x48x8xbf16>
    %24 = vector.shape_cast %23 : vector<1x48x8xbf16> to vector<48x8xbf16>
    %cst_25 = arith.constant dense<0.000000e+00> : vector<224x8xf32>
    %25 = tpu.matmul %22, %24, %cst_25 {dimension_numbers = #tpu.dot_dimension_numbers<[1], [0], [0], [1], [0, 0, 1, 1], [], []>} : vector<224x48xbf16>, vector<48x8xbf16>, vector<224x8xf32> -> vector<224x8xf32>
    %26 = arith.addf %21, %25 : vector<224x8xf32>
    %c0_26 = arith.constant 0 : index
    %c0_27 = arith.constant 0 : index
    %27 = vector.load %arg4[%c0_26, %c0_27] : memref<1x8xf32, #tpu.memory_space<vmem>>, vector<1x8xf32>
    %28 = vector.broadcast %27 : vector<1x8xf32> to vector<224x8xf32>
    %29 = arith.addf %26, %28 : vector<224x8xf32>
    %cst_28 = arith.constant 0.000000e+00 : f32
    %30 = vector.broadcast %cst_28 : f32 to vector<224x8xf32>
    %31 = arith.maximumf %29, %30 : vector<224x8xf32>
    %32 = arith.truncf %31 : vector<224x8xf32> to vector<224x8xbf16>
    %c0_29 = arith.constant 0 : index
    %c0_30 = arith.constant 0 : index
    %33 = vector.load %arg8[%c0_29, %c0_30] : memref<232x8xbf16, #tpu.memory_space<vmem>>, vector<224x8xbf16>
    tpu.vector_store %arg8[%c0_29, %c0_30], %32 {strides = array<i32>} : memref<232x8xbf16, #tpu.memory_space<vmem>>, vector<224x8xbf16>,
    %cst_31 = arith.constant 0.000000e+00 : bf16
    %34 = vector.broadcast %cst_31 : bf16 to vector<8x8xbf16>
    %c224 = arith.constant 224 : index
    %c0_32 = arith.constant 0 : index
    %35 = vector.load %arg8[%c224, %c0_32] : memref<232x8xbf16, #tpu.memory_space<vmem>>, vector<8x8xbf16>
    tpu.vector_store %arg8[%c224, %c0_32], %34 {strides = array<i32>} : memref<232x8xbf16, #tpu.memory_space<vmem>>, vector<8x8xbf16>,
    %c0_33 = arith.constant 0 : index
    %c0_34 = arith.constant 0 : index
    %36 = vector.load %arg8[%c0_33, %c0_34] : memref<232x8xbf16, #tpu.memory_space<vmem>>, vector<224x8xbf16>
    %c1_35 = arith.constant 1 : index
    %c0_36 = arith.constant 0 : index
    %37 = vector.load %arg8[%c1_35, %c0_36] : memref<232x8xbf16, #tpu.memory_space<vmem>>, vector<224x8xbf16>
    %c2_37 = arith.constant 2 : index
    %c0_38 = arith.constant 0 : index
    %38 = vector.load %arg8[%c2_37, %c0_38] : memref<232x8xbf16, #tpu.memory_space<vmem>>, vector<224x8xbf16>
    %39 = tpu.concatenate %36, %37, %38 in 1 : vector<224x8xbf16>, vector<224x8xbf16>, vector<224x8xbf16> -> vector<224x24xbf16>
    %40 = vector.extract_strided_slice %39 {offsets = [0, 0], sizes = [192, 24], strides = [1, 1]} : vector<224x24xbf16> to vector<192x24xbf16>
    %c0_39 = arith.constant 0 : index
    %c0_40 = arith.constant 0 : index
    %c0_41 = arith.constant 0 : index
    %41 = vector.load %arg5[%c0_39, %c0_40, %c0_41] : memref<3x24x8xbf16, #tpu.memory_space<vmem>>, vector<1x24x8xbf16>
    %42 = vector.shape_cast %41 : vector<1x24x8xbf16> to vector<24x8xbf16>
    %cst_42 = arith.constant dense<0.000000e+00> : vector<192x8xf32>
    %43 = tpu.matmul %40, %42, %cst_42 {dimension_numbers = #tpu.dot_dimension_numbers<[1], [0], [0], [1], [0, 0, 1, 1], [], []>} : vector<192x24xbf16>, vector<24x8xbf16>, vector<192x8xf32> -> vector<192x8xf32>
    %44 = vector.extract_strided_slice %39 {offsets = [16, 0], sizes = [192, 24], strides = [1, 1]} : vector<224x24xbf16> to vector<192x24xbf16>
    %c1_43 = arith.constant 1 : index
    %c0_44 = arith.constant 0 : index
    %c0_45 = arith.constant 0 : index
    %45 = vector.load %arg5[%c1_43, %c0_44, %c0_45] : memref<3x24x8xbf16, #tpu.memory_space<vmem>>, vector<1x24x8xbf16>
    %46 = vector.shape_cast %45 : vector<1x24x8xbf16> to vector<24x8xbf16>
    %cst_46 = arith.constant dense<0.000000e+00> : vector<192x8xf32>
    %47 = tpu.matmul %44, %46, %cst_46 {dimension_numbers = #tpu.dot_dimension_numbers<[1], [0], [0], [1], [0, 0, 1, 1], [], []>} : vector<192x24xbf16>, vector<24x8xbf16>, vector<192x8xf32> -> vector<192x8xf32>
    %48 = arith.addf %43, %47 : vector<192x8xf32>
    %49 = vector.extract_strided_slice %39 {offsets = [32, 0], sizes = [192, 24], strides = [1, 1]} : vector<224x24xbf16> to vector<192x24xbf16>
    %c2_47 = arith.constant 2 : index
    %c0_48 = arith.constant 0 : index
    %c0_49 = arith.constant 0 : index
    %50 = vector.load %arg5[%c2_47, %c0_48, %c0_49] : memref<3x24x8xbf16, #tpu.memory_space<vmem>>, vector<1x24x8xbf16>
    %51 = vector.shape_cast %50 : vector<1x24x8xbf16> to vector<24x8xbf16>
    %cst_50 = arith.constant dense<0.000000e+00> : vector<192x8xf32>
    %52 = tpu.matmul %49, %51, %cst_50 {dimension_numbers = #tpu.dot_dimension_numbers<[1], [0], [0], [1], [0, 0, 1, 1], [], []>} : vector<192x24xbf16>, vector<24x8xbf16>, vector<192x8xf32> -> vector<192x8xf32>
    %53 = arith.addf %48, %52 : vector<192x8xf32>
    %c0_51 = arith.constant 0 : index
    %c0_52 = arith.constant 0 : index
    %54 = vector.load %arg6[%c0_51, %c0_52] : memref<1x8xf32, #tpu.memory_space<vmem>>, vector<1x8xf32>
    %55 = vector.broadcast %54 : vector<1x8xf32> to vector<192x8xf32>
    %56 = arith.addf %53, %55 : vector<192x8xf32>
    %c0_53 = arith.constant 0 : index
    %c0_54 = arith.constant 0 : index
    %c0_55 = arith.constant 0 : index
    %57 = vector.load %arg7[%c0_53, %c0_54, %c0_55] : memref<1x192x8xf32, #tpu.memory_space<vmem>>, vector<1x192x8xf32>
    %58 = vector.shape_cast %57 : vector<1x192x8xf32> to vector<192x8xf32>
    %59 = vector.shape_cast %56 : vector<192x8xf32> to vector<1x192x8xf32>
    tpu.vector_store %arg7[%c0_53, %c0_54, %c0_55], %59 {strides = array<i32>} : memref<1x192x8xf32, #tpu.memory_space<vmem>>, vector<1x192x8xf32>,
    return
  }
  func.func @transform_0(%arg0: i32) -> (i32, i32, i32) {
    %c0_i32 = arith.constant 0 : i32
    %c0_i32_0 = arith.constant 0 : i32
    %c0_i32_1 = arith.constant 0 : i32
    return %arg0, %c0_i32, %c0_i32_0 : i32, i32, i32
  }
  func.func @transform_1(%arg0: i32) -> (i32, i32, i32) {
    %c0_i32 = arith.constant 0 : i32
    %c0_i32_0 = arith.constant 0 : i32
    %c0_i32_1 = arith.constant 0 : i32
    return %arg0, %c0_i32, %c0_i32_0 : i32, i32, i32
  }
  func.func @transform_2(%arg0: i32) -> (i32, i32, i32) {
    %c0_i32 = arith.constant 0 : i32
    %c0_i32_0 = arith.constant 0 : i32
    %c0_i32_1 = arith.constant 0 : i32
    %c0_i32_2 = arith.constant 0 : i32
    return %c0_i32, %c0_i32_0, %c0_i32_1 : i32, i32, i32
  }
  func.func @transform_3(%arg0: i32) -> (i32, i32) {
    %c0_i32 = arith.constant 0 : i32
    %c0_i32_0 = arith.constant 0 : i32
    %c0_i32_1 = arith.constant 0 : i32
    return %c0_i32, %c0_i32_0 : i32, i32
  }
  func.func @transform_4(%arg0: i32) -> (i32, i32, i32) {
    %c0_i32 = arith.constant 0 : i32
    %c0_i32_0 = arith.constant 0 : i32
    %c0_i32_1 = arith.constant 0 : i32
    %c0_i32_2 = arith.constant 0 : i32
    return %c0_i32, %c0_i32_0, %c0_i32_1 : i32, i32, i32
  }
  func.func @transform_5(%arg0: i32) -> (i32, i32) {
    %c0_i32 = arith.constant 0 : i32
    %c0_i32_0 = arith.constant 0 : i32
    %c0_i32_1 = arith.constant 0 : i32
    return %c0_i32, %c0_i32_0 : i32, i32
  }
  func.func @transform_6(%arg0: i32) -> (i32, i32, i32) {
    %c0_i32 = arith.constant 0 : i32
    %c0_i32_0 = arith.constant 0 : i32
    %c0_i32_1 = arith.constant 0 : i32
    return %arg0, %c0_i32, %c0_i32_0 : i32, i32, i32
  }
}

</mosaic_0001>

<llo_original>
// kernel: tile.13
$region0: #{tile.13}
  #allocation0 [shape = 's32[1]{0}', space=sflag, size = 0x4, scoped, tag = 'scoped memory for tile.13']
  %s0 = inlined_call_operand.vmem [shape: f32[16], index: 0, kind: input, shape index: {}]
  %s1 = inlined_call_operand.vmem [shape: f32[4,16], index: 1, kind: output, shape index: {}]
  // Predicated region
  $region2: #{tile.13} parent=0 // pred_check
    _
  $region3: #{tile.13} parent=0 // pred_check_branch
    %3 = sbr.rel (0) target = $region5
  $region4: #{tile.13} parent=0 // pred_region
    _
  $region5: #{tile.13} parent=0 // pred_fallthru
    _
  %v4 = vld [vmem:[%s0] ss:$0 sm:$0xff]
  %5 = vst [vmem:[%s1] sm:$0xf] %v4

// kernel: tile.14
$region0: #{tile.14}
  %s0 = inlined_call_operand.vmem [shape: f32[4,16], index: 0, kind: input, shape index: {}]
  %s1 = inlined_call_operand.hbm [shape: f32[1,64], index: 1, kind: output, shape index: {}]
  $region1: #{tile.14} parent=0
    #allocation0 [shape = 'u8[512]{0}', space=vmem, size = 0x400, scoped, tag = 'operand span for operand 1']
    #allocation1 [shape = 's32[1]{0}', space=sflag, size = 0x4, scoped, tag = 'scoped memory for tile.14']
    #allocation2 [shape = 'u8[4096]{0}', space=vmem, size = 0x1000, scoped, tag = 'scoped mem for output reshape']
    #allocation3 [shape = 'u8[4096]{0}', space=vmem, size = 0x1000, scoped, tag = 'scoped mem for input reshape']
    %2 = vsyncpa [#allocation1], 0
    %s4 = sshllo.u32 0, 4
    %v5 = vld [vmem:[%s0] sm:%s4]
    %6 = vst [vmem:[#allocation3] sm:%s4] %v5
    %v7 = vld [vmem:[#allocation3] sm:$0x1]
    %vm8 = vcmask 130048
    %9 = vst.msk [vmem:[#allocation2] sm:$0x1] %vm8, %v7
    %s10 = scalar_lea.vmem [#allocation3], 3
    %v11 = vld [vmem:[%s10] sm:$0x1]
    %12 = vrot.lane.b32.xlu0 %v11, 48
    %v13 = vpop.permute.xlu0 %12
    %vm14 = vcmask 523648
    %15 = vst.msk [vmem:[#allocation2] sm:$0x1] %vm14, %v13
    %s16 = scalar_lea.vmem [#allocation3], 2
    %v17 = vld [vmem:[%s16] sm:$0x1]
    %18 = vrot.lane.b32.xlu0 %v17, 32
    %v19 = vpop.permute.xlu0 %18
    %vm20 = vcmask 392448
    %21 = vst.msk [vmem:[#allocation2] sm:$0x1] %vm20, %v19
    %s22 = scalar_lea.vmem [#allocation3], 1
    %v23 = vld [vmem:[%s22] sm:$0x1]
    %24 = vrot.lane.b32.xlu0 %v23, 16
    %v25 = vpop.permute.xlu0 %24
    %vm26 = vcmask 261248
    %27 = vst.msk [vmem:[#allocation2] sm:$0x1] %vm26, %v25
    %s29 = sshllo.u32 0, 1
    %v31 = vld [vmem:[#allocation2] sm:%s29]
    %s32 = sshllo.u32 0, 1
    %33 = vst [vmem:[#allocation0] sm:%s32] %v31
    %s35 = ssub.s32 16, 16
    %36 = vsyncadd [#allocation1], %s35
    %s38 = sshll.u32 [#allocation0], 4
    %s39 = int_to_ptr.vmem [resolvable:$true] %s38
    %41 = dma.vmem_to_hbm [thread:$0]  %s39, 16, %s1, [#allocation1]
    %42 = dma.done [#allocation1], 16
    %43 = vsyncpa [#allocation1], 1

// kernel: decoder_forward.4
$region0: #{decoder_forward.4}
  #allocation0 [shape = 'u32[]', space=smem, size = 0x4, offset = 0x4, fixed_abs, tag = 'smem constant byte address 0x4 - core index']
  #allocation1 [shape = 'u32[144,128]{1,0:T(1,128)}', space=vmem, size = 0x12000, scoped, tag = 'internal scratch']
  %s0 = inlined_call_operand.hbm [shape: bf16[2,36,32], index: 0, kind: input, shape index: {}]
  %s1 = inlined_call_operand.hbm [shape: bf16[32,64], index: 1, kind: input, shape index: {}]
  %s2 = inlined_call_operand.hbm [shape: f32[1,64], index: 2, kind: input, shape index: {}]
  %s3 = inlined_call_operand.hbm [shape: bf16[2,36,64], index: 3, kind: output, shape index: {}]
  %s4 = sld [smem:[#allocation0]]
  $region57: #{decoder_forward.4} parent=0
    _
  %s6 = ssub.s32 1, %s4
  %s7 = scalar_select 0, %s6, %s4
  $region1: #{decoder_forward.4} parent=0
    #allocation2 [shape = 'u8[20480]{0}', space=vmem, size = 0x5000, scoped, tag = 'input window, operand 0']
    #allocation3 [shape = 's32[2]{0}', space=sflag, size = 0x8, scoped, tag = 'scoped memory for decoder_forward.4']
    #allocation4 [shape = 's32[2]{0}', space=sflag, size = 0x8, scoped, tag = 'scoped memory for decoder_forward.4']
    #allocation5 [shape = 'u8[8192]{0}', space=vmem, size = 0x2000, scoped, tag = 'input window, operand 1, single buffered']
    #allocation6 [shape = 's32[1]{0}', space=sflag, size = 0x4, scoped, tag = 'scoped memory for decoder_forward.4']
    #allocation7 [shape = 'u8[512]{0}', space=vmem, size = 0x400, scoped, tag = 'input window, operand 2, single buffered']
    #allocation8 [shape = 'u8[20480]{0}', space=vmem, size = 0x5000, scoped, tag = 'output window, operand 0']
    %8 = vsyncpa [#allocation3], 0
    %s9 = scalar_lea.sflag [#allocation3], 1
    %10 = vsyncpa %s9, 0
    %11 = vsyncpa [#allocation6], 0
    %12 = vsyncpa [#allocation4], 0
    %s13 = scalar_lea.sflag [#allocation4], 1
    %14 = vsyncpa %s13, 0
    loop: start=0, step=1, limit=4
    $region2: #{decoder_forward.4} parent=1 // loop_pre_header
      _
    $region3: #{decoder_forward.4} parent=1 // loop_header
      %s16 = sphi 0, %s20
      %p17 = scmp.ge.s32.totalorder %s16, 4
      %s26 = sphi 0, %s28
      %s29 = sphi 0, %s26
      %s30 = sphi 0, %s29
      %s46 = sphi 0, %s30
      %s50 = sphi 0, %s50
      %s52 = sphi 0, %s50
      %s53 = sphi 0, %s52
      %s67 = sphi 0, %s53
      %s71 = sphi 0, %s71
      %s73 = sphi 0, %s71
      %s74 = sphi 0, %s73
      %s88 = sphi 0, %s74
      %s94 = sphi 0, %s96
      %s97 = sphi 0, %s94
      %s98 = sphi 0, %s97
      %s114 = sphi 0, %s98
    $region4: #{decoder_forward.4} parent=1 // loop_header_branch
      %19 = sbr.rel (%p17) target = $region8
    $region5: #{decoder_forward.4} parent=1 // loop_body
      %s21 = ssub.s32 %s16, 1
      %s22 = ssub.s32 %s16, 2
      %s23 = sadd.s32 %s16, 1
      %s24 = ssub.s32 %s16, %s23
      %p25 = scmp.eq.s32.totalorder %s24, 0
      %s27 = sadd.s32 %s26, 1
      %s28 = scalar_select %p25, %s26, %s27
      %p31 = pneg %p25
      %p32 = scmp.eq.s32.totalorder %s16, 1
      %p33 = por %p31, %p32
      %p34 = scmp.ne.s32.totalorder %s26, %s29
      %p35 = scmp.eq.s32.totalorder %s16, 0
      %p36 = por %p34, %p35
      %p37 = scmp.ne.s32.totalorder %s26, %s29
      %p38 = scmp.eq.s32.totalorder %s21, 1
      %p39 = por %p37, %p38
      %p40 = scmp.ne.s32.totalorder %s29, %s30
      %p41 = scmp.eq.s32.totalorder %s21, 0
      %p42 = por %p40, %p41
      %p43 = scmp.ne.s32.totalorder %s29, %s30
      %p44 = scmp.eq.s32.totalorder %s22, 1
      %p45 = por %p43, %p44
      %p47 = scmp.ne.s32.totalorder %s30, %s46
      %p48 = scmp.eq.s32.totalorder %s22, 0
      %p49 = por %p47, %p48
      %s51 = sadd.s32 %s50, 1
      %p54 = scmp.eq.s32.totalorder %s16, 1
      %p55 = scmp.ne.s32.totalorder %s50, %s52
      %p56 = scmp.eq.s32.totalorder %s16, 0
      %p57 = por %p55, %p56
      %p58 = scmp.ne.s32.totalorder %s50, %s52
      %p59 = scmp.eq.s32.totalorder %s21, 1
      %p60 = por %p58, %p59
      %p61 = scmp.ne.s32.totalorder %s52, %s53
      %p62 = scmp.eq.s32.totalorder %s21, 0
      %p63 = por %p61, %p62
      %p64 = scmp.ne.s32.totalorder %s52, %s53
      %p65 = scmp.eq.s32.totalorder %s22, 1
      %p66 = por %p64, %p65
      %p68 = scmp.ne.s32.totalorder %s53, %s67
      %p69 = scmp.eq.s32.totalorder %s22, 0
      %p70 = por %p68, %p69
      %s72 = sadd.s32 %s71, 1
      %p75 = scmp.eq.s32.totalorder %s16, 1
      %p76 = scmp.ne.s32.totalorder %s71, %s73
      %p77 = scmp.eq.s32.totalorder %s16, 0
      %p78 = por %p76, %p77
      %p79 = scmp.ne.s32.totalorder %s71, %s73
      %p80 = scmp.eq.s32.totalorder %s21, 1
      %p81 = por %p79, %p80
      %p82 = scmp.ne.s32.totalorder %s73, %s74
      %p83 = scmp.eq.s32.totalorder %s21, 0
      %p84 = por %p82, %p83
      %p85 = scmp.ne.s32.totalorder %s73, %s74
      %p86 = scmp.eq.s32.totalorder %s22, 1
      %p87 = por %p85, %p86
      %p89 = scmp.ne.s32.totalorder %s74, %s88
      %p90 = scmp.eq.s32.totalorder %s22, 0
      %p91 = por %p89, %p90
      %s92 = ssub.s32 %s16, %s23
      %p93 = scmp.eq.s32.totalorder %s92, 0
      %s95 = sadd.s32 %s94, 1
      %s96 = scalar_select %p93, %s94, %s95
      %p99 = pneg %p93
      %p100 = scmp.eq.s32.totalorder %s16, 1
      %p101 = por %p99, %p100
      %p102 = scmp.ne.s32.totalorder %s94, %s97
      %p103 = scmp.eq.s32.totalorder %s16, 0
      %p104 = por %p102, %p103
      %p105 = scmp.ne.s32.totalorder %s94, %s97
      %p106 = scmp.eq.s32.totalorder %s21, 1
      %p107 = por %p105, %p106
      %p108 = scmp.ne.s32.totalorder %s97, %s98
      %p109 = scmp.eq.s32.totalorder %s21, 0
      %p110 = por %p108, %p109
      %p111 = scmp.ne.s32.totalorder %s97, %s98
      %p112 = scmp.eq.s32.totalorder %s22, 1
      %p113 = por %p111, %p112
      %p115 = scmp.ne.s32.totalorder %s98, %s114
      %p116 = scmp.eq.s32.totalorder %s22, 0
      %p117 = por %p115, %p116
      %p118 = scmp.le.s32.totalorder 1, %s16
      %p119 = scmp.lt.s32.totalorder %s16, 3
      %p120 = pnand %p118, %p119
      %p121 = pneg %p120
      // Predicated region
      $region9: #{decoder_forward.4} parent=5 // pred_check
        _
      $region10: #{decoder_forward.4} parent=5 // pred_check_branch
        %123 = sbr.rel (%p120) target = $region12
      $region11: #{decoder_forward.4} parent=5 // pred_region
        %s124 = ssub.s32 %s16, 1
        // Predicated region
        $region13: #{decoder_forward.4} parent=11 // pred_check
          %p125 = pneg %p63
        $region14: #{decoder_forward.4} parent=11 // pred_check_branch
          %127 = sbr.rel (%p125) target = $region16
        $region15: #{decoder_forward.4} parent=11 // pred_region
          %s129 = ssub.s32 256, 256
          %130 = vsyncadd [#allocation6], %s129
          %s131 = sshll.u32 [#allocation5], 4
          %s132 = int_to_ptr.vmem [resolvable:$true] %s131
          %137 = dma.hbm_to_vmem [thread:$0]  %s1, 256, %s132, [#allocation6], 64, 64, 4
        $region16: #{decoder_forward.4} parent=11 // pred_fallthru
          _
        // Predicated region
        $region17: #{decoder_forward.4} parent=11 // pred_check
          %p138 = pneg %p84
        $region18: #{decoder_forward.4} parent=11 // pred_check_branch
          %140 = sbr.rel (%p138) target = $region20
        $region19: #{decoder_forward.4} parent=11 // pred_region
          %s142 = ssub.s32 16, 16
          %143 = vsyncadd [#allocation6], %s142
          %s145 = sshll.u32 [#allocation7], 4
          %s146 = int_to_ptr.vmem [resolvable:$true] %s145
          %148 = dma.hbm_to_vmem [thread:$0]  %s2, 16, %s146, [#allocation6]
        $region20: #{decoder_forward.4} parent=11 // pred_fallthru
          _
      $region12: #{decoder_forward.4} parent=5 // pred_fallthru
        _
      %p149 = scmp.lt.s32.totalorder %s16, 2
      // Predicated region
      $region21: #{decoder_forward.4} parent=5 // pred_check
        %p150 = pneg %p149
      $region22: #{decoder_forward.4} parent=5 // pred_check_branch
        %152 = sbr.rel (%p150) target = $region24
      $region23: #{decoder_forward.4} parent=5 // pred_region
        // Predicated region
        $region25: #{decoder_forward.4} parent=23 // pred_check
          %p153 = pneg %p36
        $region26: #{decoder_forward.4} parent=23 // pred_check_branch
          %155 = sbr.rel (%p153) target = $region28
        $region27: #{decoder_forward.4} parent=23 // pred_region
          %s156 = sand.u32 %s26, 1
          %s157 = scalar_lea.sflag [#allocation3], %s156
          %s158 = sand.u32 %s26, 1
          %s159 = smul.addr %s158, 20
          %s160 = scalar_lea.vmem [#allocation2], %s159
          %s162 = ssub.s32 320, 320
          %163 = vsyncadd %s157, %s162
          %s164 = smul.addr %s16, 5
          %s165 = smul.addr %s164, 64
          %s166 = scalar_lea.hbm %s0, %s165
          %s167 = sshll.u32 %s160, 4
          %s168 = int_to_ptr.vmem [resolvable:$true] %s167
          %173 = dma.hbm_to_vmem [thread:$0]  %s166, 320, %s168, %s157, 64, 64, 4
        $region28: #{decoder_forward.4} parent=23 // pred_fallthru
          _
      $region24: #{decoder_forward.4} parent=5 // pred_fallthru
        _
      %p174 = scmp.le.s32.totalorder 1, %s16
      %p175 = scmp.lt.s32.totalorder %s16, 3
      %p176 = pnand %p174, %p175
      %p177 = pneg %p176
      // Predicated region
      $region29: #{decoder_forward.4} parent=5 // pred_check
        _
      $region30: #{decoder_forward.4} parent=5 // pred_check_branch
        %179 = sbr.rel (%p176) target = $region32
      $region31: #{decoder_forward.4} parent=5 // pred_region
        %s180 = ssub.s32 %s16, 1
        %s181 = sand.u32 %s29, 1
        %s182 = scalar_lea.sflag [#allocation3], %s181
        %s183 = sand.u32 %s29, 1
        %s184 = smul.addr %s183, 20
        %s185 = scalar_lea.vmem [#allocation2], %s184
        // Predicated region
        $region33: #{decoder_forward.4} parent=31 // pred_check
          %p186 = pneg %p42
        $region34: #{decoder_forward.4} parent=31 // pred_check_branch
          %188 = sbr.rel (%p186) target = $region36
        $region35: #{decoder_forward.4} parent=31 // pred_region
          %189 = dma.done %s182, 320
        $region36: #{decoder_forward.4} parent=31 // pred_fallthru
          _
        // Predicated region
        $region37: #{decoder_forward.4} parent=31 // pred_check
          %p190 = pneg %p63
        $region38: #{decoder_forward.4} parent=31 // pred_check_branch
          %192 = sbr.rel (%p190) target = $region40
        $region39: #{decoder_forward.4} parent=31 // pred_region
          %193 = dma.done [#allocation6], 256
        $region40: #{decoder_forward.4} parent=31 // pred_fallthru
          _
        // Predicated region
        $region41: #{decoder_forward.4} parent=31 // pred_check
          %p194 = pneg %p84
        $region42: #{decoder_forward.4} parent=31 // pred_check_branch
          %196 = sbr.rel (%p194) target = $region44
        $region43: #{decoder_forward.4} parent=31 // pred_region
          %197 = dma.done [#allocation6], 16
        $region44: #{decoder_forward.4} parent=31 // pred_fallthru
          _
        %s198 = sand.u32 %s29, 1
        %s199 = scalar_lea.sflag [#allocation3], %s198
        %s200 = sand.u32 %s29, 1
        %s201 = smul.addr %s200, 20
        %s202 = scalar_lea.vmem [#allocation2], %s201
        %p203 = pneg %p42
        %p204 = pneg %p39
        %p205 = pneg %p63
        %p206 = pneg %p60
        %p207 = pneg %p84
        %p208 = pneg %p81
        %p209 = pneg %p110
        %p210 = pneg %p107
        %s211 = sand.u32 %s97, 1
        %s212 = scalar_lea.sflag [#allocation4], %s211
        %s213 = sand.u32 %s97, 1
        %s214 = smul.addr %s213, 20
        %s215 = scalar_lea.vmem [#allocation8], %s214
        %v217 = vld [vmem:[%s185] sm:$0xf]
        %v218 = vld [vmem:[%s185 + $0x4] sm:$0xf]
        %v219 = vld [vmem:[%s185 + $0x8] sm:$0xf]
        %v220 = vld [vmem:[%s185 + $0xc] sm:$0xf]
        %v221 = vld [vmem:[%s185 + $0x10] sm:$0x3]
        %v222 = vld [vmem:[#allocation5] sm:$0xf]
        %v223 = vld [vmem:[#allocation5 + $0x4] sm:$0xf]
        %v224 = vld [vmem:[#allocation5 + $0x8] sm:$0xf]
        %v225 = vld [vmem:[#allocation5 + $0xc] sm:$0xf]
        %v226 = vld [vmem:[#allocation7] sm:$0x1]
        %v228 = vlaneseq
        %v229 = vshrl.u32 %v228, 7
        %v230 = vsub.s32 0, %v229
        %v231 = vrot.slane %v226, %v230
        %v238 = vunpack.c.l.b16 %v217
        %v239 = vunpack.c.l.b16 %v218
        %v240 = vunpack.c.l.b16 %v219
        %v241 = vunpack.c.l.b16 %v220
        %v242 = vunpack.c.l.b16 %v221
        %v243 = vpack.c.b16 %v239, %v238
        %v244 = vpack.c.b16 %v241, %v240
        %v245 = vpack.c.b16 %v242, %v242
        %v250 = vunpack.c.l.b16 %v222
        %v251 = vunpack.c.l.b16 %v223
        %v252 = vunpack.c.l.b16 %v224
        %v253 = vunpack.c.l.b16 %v225
        %v254 = vpack.c.b16 %v251, %v250
        %v255 = vpack.c.b16 %v253, %v252
        %vm258 = vcmask 261120
        %v260 = vsel %vm258, %v243, 0
        %v263 = vsel %vm258, %v244, 0
        %v266 = vsel %vm258, %v245, 0
        %268 = vmatprep.subr.bf16.mxu0 0
        %269 = vmatpush1.bf16.msra.mxu0 %v254
        %270 = vmatprep.subr.bf16.mxu0 0
        %271 = vmatpush1.bf16.msra.mxu0 %v255
        %272 = vmatprep.subr.bf16.mxu0 0
        %273 = vmatpush1.bf16.msra.mxu0 0
        %274 = vmatprep.subr.bf16.mxu0 0
        %275 = vmatpush1.bf16.msra.mxu0 0
        %276 = vmatprep.subr.bf16.mxu0 0
        %277 = vmatpush1.bf16.msra.mxu0 0
        %278 = vmatprep.subr.bf16.mxu0 0
        %279 = vmatpush1.bf16.msra.mxu0 0
        %280 = vmatprep.subr.bf16.mxu0 0
        %281 = vmatpush1.bf16.msra.mxu0 0
        %282 = vmatprep.subr.bf16.mxu0 0
        %283 = vmatpush1.bf16.msra.mxu0 0
        %284 = vmatprep.subr.bf16.mxu0 0
        %285 = vmatpush1.bf16.msra.mxu0 0
        %286 = vmatprep.subr.bf16.mxu0 0
        %287 = vmatpush1.bf16.msra.mxu0 0
        %288 = vmatprep.subr.bf16.mxu0 0
        %289 = vmatpush1.bf16.msra.mxu0 0
        %290 = vmatprep.subr.bf16.mxu0 0
        %291 = vmatpush1.bf16.msra.mxu0 0
        %292 = vmatprep.subr.bf16.mxu0 0
        %293 = vmatpush1.bf16.msra.mxu0 0
        %294 = vmatprep.subr.bf16.mxu0 0
        %295 = vmatpush1.bf16.msra.mxu0 0
        %296 = vmatprep.subr.bf16.mxu0 0
        %297 = vmatpush1.bf16.msra.mxu0 0
        %298 = vmatprep.subr.bf16.mxu0 0
        %299 = vmatpush1.bf16.msra.mxu0 0
        %300 = vmatprep.mubr.bf16.mxu0 0
        %301 = vmatmul.mubr.bf16.gmra.mrb[0].mxu0 %v260
        %v302 = vpop.f32.mrb[0].mxu0
        %v303 = vadd.f32 %v231, %v302
        %v304 = vpop.f32.mrb[0].mxu0
        %v305 = vpop.f32.mrb[0].mxu0
        %v306 = vadd.f32 %v231, %v305
        %v307 = vpop.f32.mrb[0].mxu0
        %308 = vmatprep.mubr.bf16.mxu0 0
        %309 = vmatmul.mubr.bf16.gmra.mrb[0].mxu0 %v263
        %v310 = vpop.f32.mrb[0].mxu0
        %v311 = vadd.f32 %v231, %v310
        %v312 = vpop.f32.mrb[0].mxu0
        %v313 = vpop.f32.mrb[0].mxu0
        %v314 = vadd.f32 %v231, %v313
        %v315 = vpop.f32.mrb[0].mxu0
        %316 = vmatprep.mubr.bf16.mxu0 0
        %317 = vmatmul.mubr.bf16.gmra.mrb[0].mxu0 %v266
        %v318 = vpop.f32.mrb[0].mxu0
        %v319 = vadd.f32 %v231, %v318
        %v320 = vpop.f32.mrb[0].mxu0
        %v321 = vpop.f32.mrb[0].mxu0
        %v322 = vpop.f32.mrb[0].mxu0
        %323 = vdwg.mxu0
        %v324 = vpack.c.bf16 %v306, %v303
        %v325 = vpack.c.bf16 %v314, %v311
        %v326 = vpack.c.bf16 %v319, %v319
        %v330 = vunpack.c.l.b16 %v324
        %v331 = vunpack.c.h.b16 %v324
        %v332 = vunpack.c.l.b16 %v325
        %v333 = vunpack.c.h.b16 %v325
        %v334 = vunpack.c.l.b16 %v326
        %v335 = vpack.c.b16 %v330, %v330
        %v336 = vpack.c.b16 %v331, %v331
        %v337 = vpack.c.b16 %v332, %v332
        %v338 = vpack.c.b16 %v333, %v333
        %v339 = vpack.c.b16 %v334, %v334
        %vm345 = vcmask 519168
        %346 = vst.msk [vmem:[%s215] sm:$0xf] %vm345, %v335
        %347 = vst.msk [vmem:[%s215 + $0x4] sm:$0xf] %vm345, %v336
        %348 = vst.msk [vmem:[%s215 + $0x8] sm:$0xf] %vm345, %v337
        %349 = vst.msk [vmem:[%s215 + $0xc] sm:$0xf] %vm345, %v338
        %vm350 = vcmask 517120
        %351 = vst.msk [vmem:[%s215 + $0x10] sm:$0x3] %vm350, %v339
        %s352 = sand.u32 %s97, 1
        %s353 = scalar_lea.sflag [#allocation4], %s352
        %s354 = sand.u32 %s97, 1
        %s355 = smul.addr %s354, 20
        %s356 = scalar_lea.vmem [#allocation8], %s355
        // Predicated region
        $region45: #{decoder_forward.4} parent=31 // pred_check
          %p357 = pneg %p107
        $region46: #{decoder_forward.4} parent=31 // pred_check_branch
          %359 = sbr.rel (%p357) target = $region48
        $region47: #{decoder_forward.4} parent=31 // pred_region
          %s361 = ssub.s32 320, 320
          %362 = vsyncadd %s353, %s361
          %s363 = smul.addr %s21, 5
          %s364 = smul.addr %s363, 64
          %s365 = scalar_lea.hbm %s3, %s364
          %s366 = sshll.u32 %s356, 4
          %s367 = int_to_ptr.vmem [resolvable:$true] %s366
          %372 = dma.vmem_to_hbm [thread:$0]  %s367, 320, %s365, %s353, 64, 64, 4
        $region48: #{decoder_forward.4} parent=31 // pred_fallthru
          _
      $region32: #{decoder_forward.4} parent=5 // pred_fallthru
        _
      %p373 = scmp.le.s32.totalorder 2, %s16
      // Predicated region
      $region49: #{decoder_forward.4} parent=5 // pred_check
        %p374 = pneg %p373
      $region50: #{decoder_forward.4} parent=5 // pred_check_branch
        %376 = sbr.rel (%p374) target = $region52
      $region51: #{decoder_forward.4} parent=5 // pred_region
        %s377 = ssub.s32 %s16, 2
        // Predicated region
        $region53: #{decoder_forward.4} parent=51 // pred_check
          %p378 = pneg %p113
        $region54: #{decoder_forward.4} parent=51 // pred_check_branch
          %380 = sbr.rel (%p378) target = $region56
        $region55: #{decoder_forward.4} parent=51 // pred_region
          %s381 = sand.u32 %s98, 1
          %s382 = scalar_lea.sflag [#allocation4], %s381
          %s383 = sand.u32 %s98, 1
          %s384 = smul.addr %s383, 20
          %s385 = scalar_lea.vmem [#allocation8], %s384
          %386 = dma.done %s382, 320
        $region56: #{decoder_forward.4} parent=51 // pred_fallthru
          _
      $region52: #{decoder_forward.4} parent=5 // pred_fallthru
        _
    $region6: #{decoder_forward.4} parent=1 // loop_footer
      %s20 = sadd.s32 1, %s16
    $region7: #{decoder_forward.4} parent=1 // loop_footer_branch
      %15 = sbr.rel target = $region3
    $region8: #{decoder_forward.4} parent=1 // loop_exit
      _
    %387 = vsyncpa [#allocation3], 1
    %s388 = scalar_lea.sflag [#allocation3], 1
    %389 = vsyncpa %s388, 1
    %390 = vsyncpa [#allocation6], 1
    %391 = vsyncpa [#allocation4], 1
    %s392 = scalar_lea.sflag [#allocation4], 1
    %393 = vsyncpa %s392, 1

// kernel: tile.18
$region0: #{tile.18}
  #allocation0 [shape = 's32[1]{0}', space=sflag, size = 0x4, scoped, tag = 'scoped memory for tile.18']
  %s0 = inlined_call_operand.vmem [shape: f32[8], index: 0, kind: input, shape index: {}]
  %s1 = inlined_call_operand.vmem [shape: f32[4,8], index: 1, kind: output, shape index: {}]
  // Predicated region
  $region2: #{tile.18} parent=0 // pred_check
    _
  $region3: #{tile.18} parent=0 // pred_check_branch
    %3 = sbr.rel (0) target = $region5
  $region4: #{tile.18} parent=0 // pred_region
    _
  $region5: #{tile.18} parent=0 // pred_fallthru
    _
  %v4 = vld [vmem:[%s0] ss:$0 sm:$0xff]
  %5 = vst [vmem:[%s1] sm:$0xf] %v4

// kernel: tile.19
$region0: #{tile.19}
  %s0 = inlined_call_operand.vmem [shape: f32[4,8], index: 0, kind: input, shape index: {}]
  %s1 = inlined_call_operand.hbm [shape: f32[1,32], index: 1, kind: output, shape index: {}]
  $region1: #{tile.19} parent=0
    #allocation0 [shape = 'u8[512]{0}', space=vmem, size = 0x400, scoped, tag = 'operand span for operand 1']
    #allocation1 [shape = 's32[1]{0}', space=sflag, size = 0x4, scoped, tag = 'scoped memory for tile.19']
    #allocation2 [shape = 'u8[4096]{0}', space=vmem, size = 0x1000, scoped, tag = 'scoped mem for output reshape']
    #allocation3 [shape = 'u8[4096]{0}', space=vmem, size = 0x1000, scoped, tag = 'scoped mem for input reshape']
    %2 = vsyncpa [#allocation1], 0
    %s4 = sshllo.u32 0, 4
    %v5 = vld [vmem:[%s0] sm:%s4]
    %6 = vst [vmem:[#allocation3] sm:%s4] %v5
    %v7 = vld [vmem:[#allocation3] sm:$0x1]
    %vm8 = vcmask 64512
    %9 = vst.msk [vmem:[#allocation2] sm:$0x1] %vm8, %v7
    %s10 = scalar_lea.vmem [#allocation3], 3
    %v11 = vld [vmem:[%s10] sm:$0x1]
    %12 = vrot.lane.b32.xlu0 %v11, 24
    %v13 = vpop.permute.xlu0 %12
    %vm14 = vcmask 261312
    %15 = vst.msk [vmem:[#allocation2] sm:$0x1] %vm14, %v13
    %s16 = scalar_lea.vmem [#allocation3], 2
    %v17 = vld [vmem:[%s16] sm:$0x1]
    %18 = vrot.lane.b32.xlu0 %v17, 16
    %v19 = vpop.permute.xlu0 %18
    %vm20 = vcmask 195712
    %21 = vst.msk [vmem:[#allocation2] sm:$0x1] %vm20, %v19
    %s22 = scalar_lea.vmem [#allocation3], 1
    %v23 = vld [vmem:[%s22] sm:$0x1]
    %24 = vrot.lane.b32.xlu0 %v23, 8
    %v25 = vpop.permute.xlu0 %24
    %vm26 = vcmask 130112
    %27 = vst.msk [vmem:[#allocation2] sm:$0x1] %vm26, %v25
    %s29 = sshllo.u32 0, 1
    %v31 = vld [vmem:[#allocation2] sm:%s29]
    %s32 = sshllo.u32 0, 1
    %33 = vst [vmem:[#allocation0] sm:%s32] %v31
    %s35 = ssub.s32 16, 16
    %36 = vsyncadd [#allocation1], %s35
    %s38 = sshll.u32 [#allocation0], 4
    %s39 = int_to_ptr.vmem [resolvable:$true] %s38
    %41 = dma.vmem_to_hbm [thread:$0]  %s39, 16, %s1, [#allocation1]
    %42 = dma.done [#allocation1], 16
    %43 = vsyncpa [#allocation1], 1

// kernel: decoder_forward.6
$region0: #{decoder_forward.6}
  #allocation0 [shape = 'u32[]', space=smem, size = 0x4, offset = 0x4, fixed_abs, tag = 'smem constant byte address 0x4 - core index']
  #allocation1 [shape = 'u32[144,128]{1,0:T(1,128)}', space=vmem, size = 0x12000, scoped, tag = 'internal scratch']
  %s0 = inlined_call_operand.hbm [shape: bf16[2,96,16], index: 0, kind: input, shape index: {}]
  %s1 = inlined_call_operand.hbm [shape: bf16[16,32], index: 1, kind: input, shape index: {}]
  %s2 = inlined_call_operand.hbm [shape: f32[1,32], index: 2, kind: input, shape index: {}]
  %s3 = inlined_call_operand.hbm [shape: bf16[2,96,32], index: 3, kind: output, shape index: {}]
  %s4 = sld [smem:[#allocation0]]
  $region57: #{decoder_forward.6} parent=0
    _
  %s6 = ssub.s32 1, %s4
  %s7 = scalar_select 0, %s6, %s4
  $region1: #{decoder_forward.6} parent=0
    #allocation2 [shape = 'u8[49152]{0}', space=vmem, size = 0xc000, scoped, tag = 'input window, operand 0']
    #allocation3 [shape = 's32[2]{0}', space=sflag, size = 0x8, scoped, tag = 'scoped memory for decoder_forward.6']
    #allocation4 [shape = 's32[2]{0}', space=sflag, size = 0x8, scoped, tag = 'scoped memory for decoder_forward.6']
    #allocation5 [shape = 'u8[4096]{0}', space=vmem, size = 0x1000, scoped, tag = 'input window, operand 1, single buffered']
    #allocation6 [shape = 's32[1]{0}', space=sflag, size = 0x4, scoped, tag = 'scoped memory for decoder_forward.6']
    #allocation7 [shape = 'u8[512]{0}', space=vmem, size = 0x400, scoped, tag = 'input window, operand 2, single buffered']
    #allocation8 [shape = 'u8[49152]{0}', space=vmem, size = 0xc000, scoped, tag = 'output window, operand 0']
    %8 = vsyncpa [#allocation3], 0
    %s9 = scalar_lea.sflag [#allocation3], 1
    %10 = vsyncpa %s9, 0
    %11 = vsyncpa [#allocation6], 0
    %12 = vsyncpa [#allocation4], 0
    %s13 = scalar_lea.sflag [#allocation4], 1
    %14 = vsyncpa %s13, 0
    loop: start=0, step=1, limit=4
    $region2: #{decoder_forward.6} parent=1 // loop_pre_header
      _
    $region3: #{decoder_forward.6} parent=1 // loop_header
      %s16 = sphi 0, %s20
      %p17 = scmp.ge.s32.totalorder %s16, 4
      %s26 = sphi 0, %s28
      %s29 = sphi 0, %s26
      %s30 = sphi 0, %s29
      %s46 = sphi 0, %s30
      %s50 = sphi 0, %s50
      %s52 = sphi 0, %s50
      %s53 = sphi 0, %s52
      %s67 = sphi 0, %s53
      %s71 = sphi 0, %s71
      %s73 = sphi 0, %s71
      %s74 = sphi 0, %s73
      %s88 = sphi 0, %s74
      %s94 = sphi 0, %s96
      %s97 = sphi 0, %s94
      %s98 = sphi 0, %s97
      %s114 = sphi 0, %s98
    $region4: #{decoder_forward.6} parent=1 // loop_header_branch
      %19 = sbr.rel (%p17) target = $region8
    $region5: #{decoder_forward.6} parent=1 // loop_body
      %s21 = ssub.s32 %s16, 1
      %s22 = ssub.s32 %s16, 2
      %s23 = sadd.s32 %s16, 1
      %s24 = ssub.s32 %s16, %s23
      %p25 = scmp.eq.s32.totalorder %s24, 0
      %s27 = sadd.s32 %s26, 1
      %s28 = scalar_select %p25, %s26, %s27
      %p31 = pneg %p25
      %p32 = scmp.eq.s32.totalorder %s16, 1
      %p33 = por %p31, %p32
      %p34 = scmp.ne.s32.totalorder %s26, %s29
      %p35 = scmp.eq.s32.totalorder %s16, 0
      %p36 = por %p34, %p35
      %p37 = scmp.ne.s32.totalorder %s26, %s29
      %p38 = scmp.eq.s32.totalorder %s21, 1
      %p39 = por %p37, %p38
      %p40 = scmp.ne.s32.totalorder %s29, %s30
      %p41 = scmp.eq.s32.totalorder %s21, 0
      %p42 = por %p40, %p41
      %p43 = scmp.ne.s32.totalorder %s29, %s30
      %p44 = scmp.eq.s32.totalorder %s22, 1
      %p45 = por %p43, %p44
      %p47 = scmp.ne.s32.totalorder %s30, %s46
      %p48 = scmp.eq.s32.totalorder %s22, 0
      %p49 = por %p47, %p48
      %s51 = sadd.s32 %s50, 1
      %p54 = scmp.eq.s32.totalorder %s16, 1
      %p55 = scmp.ne.s32.totalorder %s50, %s52
      %p56 = scmp.eq.s32.totalorder %s16, 0
      %p57 = por %p55, %p56
      %p58 = scmp.ne.s32.totalorder %s50, %s52
      %p59 = scmp.eq.s32.totalorder %s21, 1
      %p60 = por %p58, %p59
      %p61 = scmp.ne.s32.totalorder %s52, %s53
      %p62 = scmp.eq.s32.totalorder %s21, 0
      %p63 = por %p61, %p62
      %p64 = scmp.ne.s32.totalorder %s52, %s53
      %p65 = scmp.eq.s32.totalorder %s22, 1
      %p66 = por %p64, %p65
      %p68 = scmp.ne.s32.totalorder %s53, %s67
      %p69 = scmp.eq.s32.totalorder %s22, 0
      %p70 = por %p68, %p69
      %s72 = sadd.s32 %s71, 1
      %p75 = scmp.eq.s32.totalorder %s16, 1
      %p76 = scmp.ne.s32.totalorder %s71, %s73
      %p77 = scmp.eq.s32.totalorder %s16, 0
      %p78 = por %p76, %p77
      %p79 = scmp.ne.s32.totalorder %s71, %s73
      %p80 = scmp.eq.s32.totalorder %s21, 1
      %p81 = por %p79, %p80
      %p82 = scmp.ne.s32.totalorder %s73, %s74
      %p83 = scmp.eq.s32.totalorder %s21, 0
      %p84 = por %p82, %p83
      %p85 = scmp.ne.s32.totalorder %s73, %s74
      %p86 = scmp.eq.s32.totalorder %s22, 1
      %p87 = por %p85, %p86
      %p89 = scmp.ne.s32.totalorder %s74, %s88
      %p90 = scmp.eq.s32.totalorder %s22, 0
      %p91 = por %p89, %p90
      %s92 = ssub.s32 %s16, %s23
      %p93 = scmp.eq.s32.totalorder %s92, 0
      %s95 = sadd.s32 %s94, 1
      %s96 = scalar_select %p93, %s94, %s95
      %p99 = pneg %p93
      %p100 = scmp.eq.s32.totalorder %s16, 1
      %p101 = por %p99, %p100
      %p102 = scmp.ne.s32.totalorder %s94, %s97
      %p103 = scmp.eq.s32.totalorder %s16, 0
      %p104 = por %p102, %p103
      %p105 = scmp.ne.s32.totalorder %s94, %s97
      %p106 = scmp.eq.s32.totalorder %s21, 1
      %p107 = por %p105, %p106
      %p108 = scmp.ne.s32.totalorder %s97, %s98
      %p109 = scmp.eq.s32.totalorder %s21, 0
      %p110 = por %p108, %p109
      %p111 = scmp.ne.s32.totalorder %s97, %s98
      %p112 = scmp.eq.s32.totalorder %s22, 1
      %p113 = por %p111, %p112
      %p115 = scmp.ne.s32.totalorder %s98, %s114
      %p116 = scmp.eq.s32.totalorder %s22, 0
      %p117 = por %p115, %p116
      %p118 = scmp.le.s32.totalorder 1, %s16
      %p119 = scmp.lt.s32.totalorder %s16, 3
      %p120 = pnand %p118, %p119
      %p121 = pneg %p120
      // Predicated region
      $region9: #{decoder_forward.6} parent=5 // pred_check
        _
      $region10: #{decoder_forward.6} parent=5 // pred_check_branch
        %123 = sbr.rel (%p120) target = $region12
      $region11: #{decoder_forward.6} parent=5 // pred_region
        %s124 = ssub.s32 %s16, 1
        // Predicated region
        $region13: #{decoder_forward.6} parent=11 // pred_check
          %p125 = pneg %p63
        $region14: #{decoder_forward.6} parent=11 // pred_check_branch
          %127 = sbr.rel (%p125) target = $region16
        $region15: #{decoder_forward.6} parent=11 // pred_region
          %s129 = ssub.s32 128, 128
          %130 = vsyncadd [#allocation6], %s129
          %s131 = sshll.u32 [#allocation5], 4
          %s132 = int_to_ptr.vmem [resolvable:$true] %s131
          %137 = dma.hbm_to_vmem [thread:$0]  %s1, 128, %s132, [#allocation6], 64, 64, 4
        $region16: #{decoder_forward.6} parent=11 // pred_fallthru
          _
        // Predicated region
        $region17: #{decoder_forward.6} parent=11 // pred_check
          %p138 = pneg %p84
        $region18: #{decoder_forward.6} parent=11 // pred_check_branch
          %140 = sbr.rel (%p138) target = $region20
        $region19: #{decoder_forward.6} parent=11 // pred_region
          %s142 = ssub.s32 16, 16
          %143 = vsyncadd [#allocation6], %s142
          %s145 = sshll.u32 [#allocation7], 4
          %s146 = int_to_ptr.vmem [resolvable:$true] %s145
          %148 = dma.hbm_to_vmem [thread:$0]  %s2, 16, %s146, [#allocation6]
        $region20: #{decoder_forward.6} parent=11 // pred_fallthru
          _
      $region12: #{decoder_forward.6} parent=5 // pred_fallthru
        _
      %p149 = scmp.lt.s32.totalorder %s16, 2
      // Predicated region
      $region21: #{decoder_forward.6} parent=5 // pred_check
        %p150 = pneg %p149
      $region22: #{decoder_forward.6} parent=5 // pred_check_branch
        %152 = sbr.rel (%p150) target = $region24
      $region23: #{decoder_forward.6} parent=5 // pred_region
        // Predicated region
        $region25: #{decoder_forward.6} parent=23 // pred_check
          %p153 = pneg %p36
        $region26: #{decoder_forward.6} parent=23 // pred_check_branch
          %155 = sbr.rel (%p153) target = $region28
        $region27: #{decoder_forward.6} parent=23 // pred_region
          %s156 = sand.u32 %s26, 1
          %s157 = scalar_lea.sflag [#allocation3], %s156
          %s158 = sand.u32 %s26, 1
          %s159 = smul.addr %s158, 48
          %s160 = scalar_lea.vmem [#allocation2], %s159
          %s162 = ssub.s32 768, 768
          %163 = vsyncadd %s157, %s162
          %s164 = smul.addr %s16, 12
          %s165 = smul.addr %s164, 64
          %s166 = scalar_lea.hbm %s0, %s165
          %s167 = sshll.u32 %s160, 4
          %s168 = int_to_ptr.vmem [resolvable:$true] %s167
          %173 = dma.hbm_to_vmem [thread:$0]  %s166, 768, %s168, %s157, 64, 64, 4
        $region28: #{decoder_forward.6} parent=23 // pred_fallthru
          _
      $region24: #{decoder_forward.6} parent=5 // pred_fallthru
        _
      %p174 = scmp.le.s32.totalorder 1, %s16
      %p175 = scmp.lt.s32.totalorder %s16, 3
      %p176 = pnand %p174, %p175
      %p177 = pneg %p176
      // Predicated region
      $region29: #{decoder_forward.6} parent=5 // pred_check
        _
      $region30: #{decoder_forward.6} parent=5 // pred_check_branch
        %179 = sbr.rel (%p176) target = $region32
      $region31: #{decoder_forward.6} parent=5 // pred_region
        %s180 = ssub.s32 %s16, 1
        %s181 = sand.u32 %s29, 1
        %s182 = scalar_lea.sflag [#allocation3], %s181
        %s183 = sand.u32 %s29, 1
        %s184 = smul.addr %s183, 48
        %s185 = scalar_lea.vmem [#allocation2], %s184
        // Predicated region
        $region33: #{decoder_forward.6} parent=31 // pred_check
          %p186 = pneg %p42
        $region34: #{decoder_forward.6} parent=31 // pred_check_branch
          %188 = sbr.rel (%p186) target = $region36
        $region35: #{decoder_forward.6} parent=31 // pred_region
          %189 = dma.done %s182, 768
        $region36: #{decoder_forward.6} parent=31 // pred_fallthru
          _
        // Predicated region
        $region37: #{decoder_forward.6} parent=31 // pred_check
          %p190 = pneg %p63
        $region38: #{decoder_forward.6} parent=31 // pred_check_branch
          %192 = sbr.rel (%p190) target = $region40
        $region39: #{decoder_forward.6} parent=31 // pred_region
          %193 = dma.done [#allocation6], 128
        $region40: #{decoder_forward.6} parent=31 // pred_fallthru
          _
        // Predicated region
        $region41: #{decoder_forward.6} parent=31 // pred_check
          %p194 = pneg %p84
        $region42: #{decoder_forward.6} parent=31 // pred_check_branch
          %196 = sbr.rel (%p194) target = $region44
        $region43: #{decoder_forward.6} parent=31 // pred_region
          %197 = dma.done [#allocation6], 16
        $region44: #{decoder_forward.6} parent=31 // pred_fallthru
          _
        %s198 = sand.u32 %s29, 1
        %s199 = scalar_lea.sflag [#allocation3], %s198
        %s200 = sand.u32 %s29, 1
        %s201 = smul.addr %s200, 48
        %s202 = scalar_lea.vmem [#allocation2], %s201
        %p203 = pneg %p42
        %p204 = pneg %p39
        %p205 = pneg %p63
        %p206 = pneg %p60
        %p207 = pneg %p84
        %p208 = pneg %p81
        %p209 = pneg %p110
        %p210 = pneg %p107
        %s211 = sand.u32 %s97, 1
        %s212 = scalar_lea.sflag [#allocation4], %s211
        %s213 = sand.u32 %s97, 1
        %s214 = smul.addr %s213, 48
        %s215 = scalar_lea.vmem [#allocation8], %s214
        %v217 = vld [vmem:[%s185] sm:$0xf]
        %v218 = vld [vmem:[%s185 + $0x4] sm:$0xf]
        %v219 = vld [vmem:[%s185 + $0x8] sm:$0xf]
        %v220 = vld [vmem:[%s185 + $0xc] sm:$0xf]
        %v221 = vld [vmem:[%s185 + $0x10] sm:$0xf]
        %v222 = vld [vmem:[%s185 + $0x14] sm:$0xf]
        %v223 = vld [vmem:[%s185 + $0x18] sm:$0xf]
        %v224 = vld [vmem:[%s185 + $0x1c] sm:$0xf]
        %v225 = vld [vmem:[%s185 + $0x20] sm:$0xf]
        %v226 = vld [vmem:[%s185 + $0x24] sm:$0xf]
        %v227 = vld [vmem:[%s185 + $0x28] sm:$0xf]
        %v228 = vld [vmem:[%s185 + $0x2c] sm:$0xf]
        %v229 = vld [vmem:[#allocation5] sm:$0xf]
        %v230 = vld [vmem:[#allocation5 + $0x4] sm:$0xf]
        %v231 = vld [vmem:[#allocation7] sm:$0x1]
        %v233 = vlaneseq
        %v234 = vshrl.u32 %v233, 7
        %v235 = vsub.s32 0, %v234
        %v236 = vrot.slane %v231, %v235
        %v250 = vunpack.c.l.b16 %v217
        %v251 = vunpack.c.l.b16 %v218
        %v252 = vunpack.c.l.b16 %v219
        %v253 = vunpack.c.l.b16 %v220
        %v254 = vunpack.c.l.b16 %v221
        %v255 = vunpack.c.l.b16 %v222
        %v256 = vunpack.c.l.b16 %v223
        %v257 = vunpack.c.l.b16 %v224
        %v258 = vunpack.c.l.b16 %v225
        %v259 = vunpack.c.l.b16 %v226
        %v260 = vunpack.c.l.b16 %v227
        %v261 = vunpack.c.l.b16 %v228
        %v262 = vpack.c.b16 %v251, %v250
        %v263 = vpack.c.b16 %v253, %v252
        %v264 = vpack.c.b16 %v255, %v254
        %v265 = vpack.c.b16 %v257, %v256
        %v266 = vpack.c.b16 %v259, %v258
        %v267 = vpack.c.b16 %v261, %v260
        %v270 = vunpack.c.l.b16 %v229
        %v271 = vunpack.c.l.b16 %v230
        %v272 = vpack.c.b16 %v271, %v270
        %vm274 = vcmask 130048
        %v276 = vsel %vm274, %v262, 0
        %v279 = vsel %vm274, %v263, 0
        %v282 = vsel %vm274, %v264, 0
        %v285 = vsel %vm274, %v265, 0
        %v288 = vsel %vm274, %v266, 0
        %v291 = vsel %vm274, %v267, 0
        %293 = vmatprep.subr.bf16.mxu0 0
        %294 = vmatpush1.bf16.msra.mxu0 %v272
        %295 = vmatprep.subr.bf16.mxu0 0
        %296 = vmatpush1.bf16.msra.mxu0 0
        %297 = vmatprep.subr.bf16.mxu0 0
        %298 = vmatpush1.bf16.msra.mxu0 0
        %299 = vmatprep.subr.bf16.mxu0 0
        %300 = vmatpush1.bf16.msra.mxu0 0
        %301 = vmatprep.subr.bf16.mxu0 0
        %302 = vmatpush1.bf16.msra.mxu0 0
        %303 = vmatprep.subr.bf16.mxu0 0
        %304 = vmatpush1.bf16.msra.mxu0 0
        %305 = vmatprep.subr.bf16.mxu0 0
        %306 = vmatpush1.bf16.msra.mxu0 0
        %307 = vmatprep.subr.bf16.mxu0 0
        %308 = vmatpush1.bf16.msra.mxu0 0
        %309 = vmatprep.subr.bf16.mxu0 0
        %310 = vmatpush1.bf16.msra.mxu0 0
        %311 = vmatprep.subr.bf16.mxu0 0
        %312 = vmatpush1.bf16.msra.mxu0 0
        %313 = vmatprep.subr.bf16.mxu0 0
        %314 = vmatpush1.bf16.msra.mxu0 0
        %315 = vmatprep.subr.bf16.mxu0 0
        %316 = vmatpush1.bf16.msra.mxu0 0
        %317 = vmatprep.subr.bf16.mxu0 0
        %318 = vmatpush1.bf16.msra.mxu0 0
        %319 = vmatprep.subr.bf16.mxu0 0
        %320 = vmatpush1.bf16.msra.mxu0 0
        %321 = vmatprep.subr.bf16.mxu0 0
        %322 = vmatpush1.bf16.msra.mxu0 0
        %323 = vmatprep.subr.bf16.mxu0 0
        %324 = vmatpush1.bf16.msra.mxu0 0
        %325 = vmatprep.mubr.bf16.mxu0 0
        %326 = vmatmul.mubr.bf16.gmra.mrb[0].mxu0 %v276
        %v327 = vpop.f32.mrb[0].mxu0
        %v328 = vadd.f32 %v236, %v327
        %v329 = vpop.f32.mrb[0].mxu0
        %v330 = vpop.f32.mrb[0].mxu0
        %v331 = vadd.f32 %v236, %v330
        %v332 = vpop.f32.mrb[0].mxu0
        %333 = vmatprep.mubr.bf16.mxu0 0
        %334 = vmatmul.mubr.bf16.gmra.mrb[0].mxu0 %v279
        %v335 = vpop.f32.mrb[0].mxu0
        %v336 = vadd.f32 %v236, %v335
        %v337 = vpop.f32.mrb[0].mxu0
        %v338 = vpop.f32.mrb[0].mxu0
        %v339 = vadd.f32 %v236, %v338
        %v340 = vpop.f32.mrb[0].mxu0
        %341 = vmatprep.mubr.bf16.mxu0 0
        %342 = vmatmul.mubr.bf16.gmra.mrb[0].mxu0 %v282
        %v343 = vpop.f32.mrb[0].mxu0
        %v344 = vadd.f32 %v236, %v343
        %v345 = vpop.f32.mrb[0].mxu0
        %v346 = vpop.f32.mrb[0].mxu0
        %v347 = vadd.f32 %v236, %v346
        %v348 = vpop.f32.mrb[0].mxu0
        %349 = vmatprep.mubr.bf16.mxu0 0
        %350 = vmatmul.mubr.bf16.gmra.mrb[0].mxu0 %v285
        %v351 = vpop.f32.mrb[0].mxu0
        %v352 = vadd.f32 %v236, %v351
        %v353 = vpop.f32.mrb[0].mxu0
        %v354 = vpop.f32.mrb[0].mxu0
        %v355 = vadd.f32 %v236, %v354
        %v356 = vpop.f32.mrb[0].mxu0
        %357 = vmatprep.mubr.bf16.mxu0 0
        %358 = vmatmul.mubr.bf16.gmra.mrb[0].mxu0 %v288
        %v359 = vpop.f32.mrb[0].mxu0
        %v360 = vadd.f32 %v236, %v359
        %v361 = vpop.f32.mrb[0].mxu0
        %v362 = vpop.f32.mrb[0].mxu0
        %v363 = vadd.f32 %v236, %v362
        %v364 = vpop.f32.mrb[0].mxu0
        %365 = vmatprep.mubr.bf16.mxu0 0
        %366 = vmatmul.mubr.bf16.gmra.mrb[0].mxu0 %v291
        %v367 = vpop.f32.mrb[0].mxu0
        %v368 = vadd.f32 %v236, %v367
        %v369 = vpop.f32.mrb[0].mxu0
        %v370 = vpop.f32.mrb[0].mxu0
        %v371 = vadd.f32 %v236, %v370
        %v372 = vpop.f32.mrb[0].mxu0
        %373 = vdwg.mxu0
        %v374 = vpack.c.bf16 %v331, %v328
        %v375 = vpack.c.bf16 %v339, %v336
        %v376 = vpack.c.bf16 %v347, %v344
        %v377 = vpack.c.bf16 %v355, %v352
        %v378 = vpack.c.bf16 %v363, %v360
        %v379 = vpack.c.bf16 %v371, %v368
        %v386 = vunpack.c.l.b16 %v374
        %v387 = vunpack.c.h.b16 %v374
        %v388 = vunpack.c.l.b16 %v375
        %v389 = vunpack.c.h.b16 %v375
        %v390 = vunpack.c.l.b16 %v376
        %v391 = vunpack.c.h.b16 %v376
        %v392 = vunpack.c.l.b16 %v377
        %v393 = vunpack.c.h.b16 %v377
        %v394 = vunpack.c.l.b16 %v378
        %v395 = vunpack.c.h.b16 %v378
        %v396 = vunpack.c.l.b16 %v379
        %v397 = vunpack.c.h.b16 %v379
        %v398 = vpack.c.b16 %v386, %v386
        %v399 = vpack.c.b16 %v387, %v387
        %v400 = vpack.c.b16 %v388, %v388
        %v401 = vpack.c.b16 %v389, %v389
        %v402 = vpack.c.b16 %v390, %v390
        %v403 = vpack.c.b16 %v391, %v391
        %v404 = vpack.c.b16 %v392, %v392
        %v405 = vpack.c.b16 %v393, %v393
        %v406 = vpack.c.b16 %v394, %v394
        %v407 = vpack.c.b16 %v395, %v395
        %v408 = vpack.c.b16 %v396, %v396
        %v409 = vpack.c.b16 %v397, %v397
        %vm422 = vcmask 257024
        %423 = vst.msk [vmem:[%s215] sm:$0xf] %vm422, %v398
        %424 = vst.msk [vmem:[%s215 + $0x4] sm:$0xf] %vm422, %v399
        %425 = vst.msk [vmem:[%s215 + $0x8] sm:$0xf] %vm422, %v400
        %426 = vst.msk [vmem:[%s215 + $0xc] sm:$0xf] %vm422, %v401
        %427 = vst.msk [vmem:[%s215 + $0x10] sm:$0xf] %vm422, %v402
        %428 = vst.msk [vmem:[%s215 + $0x14] sm:$0xf] %vm422, %v403
        %429 = vst.msk [vmem:[%s215 + $0x18] sm:$0xf] %vm422, %v404
        %430 = vst.msk [vmem:[%s215 + $0x1c] sm:$0xf] %vm422, %v405
        %431 = vst.msk [vmem:[%s215 + $0x20] sm:$0xf] %vm422, %v406
        %432 = vst.msk [vmem:[%s215 + $0x24] sm:$0xf] %vm422, %v407
        %433 = vst.msk [vmem:[%s215 + $0x28] sm:$0xf] %vm422, %v408
        %434 = vst.msk [vmem:[%s215 + $0x2c] sm:$0xf] %vm422, %v409
        %s435 = sand.u32 %s97, 1
        %s436 = scalar_lea.sflag [#allocation4], %s435
        %s437 = sand.u32 %s97, 1
        %s438 = smul.addr %s437, 48
        %s439 = scalar_lea.vmem [#allocation8], %s438
        // Predicated region
        $region45: #{decoder_forward.6} parent=31 // pred_check
          %p440 = pneg %p107
        $region46: #{decoder_forward.6} parent=31 // pred_check_branch
          %442 = sbr.rel (%p440) target = $region48
        $region47: #{decoder_forward.6} parent=31 // pred_region
          %s444 = ssub.s32 768, 768
          %445 = vsyncadd %s436, %s444
          %s446 = smul.addr %s21, 12
          %s447 = smul.addr %s446, 64
          %s448 = scalar_lea.hbm %s3, %s447
          %s449 = sshll.u32 %s439, 4
          %s450 = int_to_ptr.vmem [resolvable:$true] %s449
          %455 = dma.vmem_to_hbm [thread:$0]  %s450, 768, %s448, %s436, 64, 64, 4
        $region48: #{decoder_forward.6} parent=31 // pred_fallthru
          _
      $region32: #{decoder_forward.6} parent=5 // pred_fallthru
        _
      %p456 = scmp.le.s32.totalorder 2, %s16
      // Predicated region
      $region49: #{decoder_forward.6} parent=5 // pred_check
        %p457 = pneg %p456
      $region50: #{decoder_forward.6} parent=5 // pred_check_branch
        %459 = sbr.rel (%p457) target = $region52
      $region51: #{decoder_forward.6} parent=5 // pred_region
        %s460 = ssub.s32 %s16, 2
        // Predicated region
        $region53: #{decoder_forward.6} parent=51 // pred_check
          %p461 = pneg %p113
        $region54: #{decoder_forward.6} parent=51 // pred_check_branch
          %463 = sbr.rel (%p461) target = $region56
        $region55: #{decoder_forward.6} parent=51 // pred_region
          %s464 = sand.u32 %s98, 1
          %s465 = scalar_lea.sflag [#allocation4], %s464
          %s466 = sand.u32 %s98, 1
          %s467 = smul.addr %s466, 48
          %s468 = scalar_lea.vmem [#allocation8], %s467
          %469 = dma.done %s465, 768
        $region56: #{decoder_forward.6} parent=51 // pred_fallthru
          _
      $region52: #{decoder_forward.6} parent=5 // pred_fallthru
        _
    $region6: #{decoder_forward.6} parent=1 // loop_footer
      %s20 = sadd.s32 1, %s16
    $region7: #{decoder_forward.6} parent=1 // loop_footer_branch
      %15 = sbr.rel target = $region3
    $region8: #{decoder_forward.6} parent=1 // loop_exit
      _
    %470 = vsyncpa [#allocation3], 1
    %s471 = scalar_lea.sflag [#allocation3], 1
    %472 = vsyncpa %s471, 1
    %473 = vsyncpa [#allocation6], 1
    %474 = vsyncpa [#allocation4], 1
    %s475 = scalar_lea.sflag [#allocation4], 1
    %476 = vsyncpa %s475, 1

// kernel: decoder_forward.5
$region0: #{decoder_forward.5}
  #allocation0 [shape = 'u32[]', space=smem, size = 0x4, offset = 0x4, fixed_abs, tag = 'smem constant byte address 0x4 - core index']
  #allocation1 [shape = 'u32[144,128]{1,0:T(1,128)}', space=vmem, size = 0x12000, scoped, tag = 'internal scratch']
  #allocation2 [shape = 'bf16[128,16]{1,0:T(16,128)(2,1)}', space=vmem, size = 0x8000, scoped, tag = 'scratch operand']
  %s0 = inlined_call_operand.hbm [shape: bf16[2,152,16], index: 0, kind: input, shape index: {}]
  %s1 = inlined_call_operand.hbm [shape: bf16[2,152,16], index: 1, kind: input, shape index: {}]
  %s2 = inlined_call_operand.hbm [shape: bf16[3,96,16], index: 2, kind: input, shape index: {}]
  %s3 = inlined_call_operand.hbm [shape: f32[1,16], index: 3, kind: input, shape index: {}]
  %s4 = inlined_call_operand.hbm [shape: bf16[3,48,16], index: 4, kind: input, shape index: {}]
  %s5 = inlined_call_operand.hbm [shape: f32[1,16], index: 5, kind: input, shape index: {}]
  %s6 = inlined_call_operand.hbm [shape: bf16[2,96,16], index: 6, kind: output, shape index: {}]
  %s7 = sld [smem:[#allocation0]]
  $region81: #{decoder_forward.5} parent=0
    _
  %s9 = ssub.s32 1, %s7
  %s10 = scalar_select 0, %s9, %s7
  $region1: #{decoder_forward.5} parent=0
    #allocation3 [shape = 'u8[77824]{0}', space=vmem, size = 0x13000, scoped, tag = 'input window, operand 0']
    #allocation4 [shape = 's32[2]{0}', space=sflag, size = 0x8, scoped, tag = 'scoped memory for decoder_forward.5']
    #allocation5 [shape = 's32[2]{0}', space=sflag, size = 0x8, scoped, tag = 'scoped memory for decoder_forward.5']
    #allocation6 [shape = 'u8[77824]{0}', space=vmem, size = 0x13000, scoped, tag = 'input window, operand 1']
    #allocation7 [shape = 's32[2]{0}', space=sflag, size = 0x8, scoped, tag = 'scoped memory for decoder_forward.5']
    #allocation8 [shape = 'u8[73728]{0}', space=vmem, size = 0x12000, scoped, tag = 'input window, operand 2, single buffered']
    #allocation9 [shape = 'u8[512]{0}', space=vmem, size = 0x400, scoped, tag = 'input window, operand 3, single buffered']
    #allocation10 [shape = 's32[1]{0}', space=sflag, size = 0x4, scoped, tag = 'scoped memory for decoder_forward.5']
    #allocation11 [shape = 'u8[36864]{0}', space=vmem, size = 0x9000, scoped, tag = 'input window, operand 4, single buffered']
    #allocation12 [shape = 'u8[512]{0}', space=vmem, size = 0x400, scoped, tag = 'input window, operand 5, single buffered']
    #allocation13 [shape = 's32[1]{0}', space=sflag, size = 0x4, scoped, tag = 'scoped memory for decoder_forward.5']
    #allocation14 [shape = 'u8[49152]{0}', space=vmem, size = 0xc000, scoped, tag = 'output window, operand 0']
    %11 = vsyncpa [#allocation4], 0
    %s12 = scalar_lea.sflag [#allocation4], 1
    %13 = vsyncpa %s12, 0
    %14 = vsyncpa [#allocation7], 0
    %s15 = scalar_lea.sflag [#allocation7], 1
    %16 = vsyncpa %s15, 0
    %17 = vsyncpa [#allocation10], 0
    %18 = vsyncpa [#allocation13], 0
    %19 = vsyncpa [#allocation5], 0
    %s20 = scalar_lea.sflag [#allocation5], 1
    %21 = vsyncpa %s20, 0
    loop: start=0, step=1, limit=4
    $region2: #{decoder_forward.5} parent=1 // loop_pre_header
      _
    $region3: #{decoder_forward.5} parent=1 // loop_header
      %s23 = sphi 0, %s27
      %p24 = scmp.ge.s32.totalorder %s23, 4
      %s33 = sphi 0, %s35
      %s36 = sphi 0, %s33
      %s37 = sphi 0, %s36
      %s53 = sphi 0, %s37
      %s59 = sphi 0, %s61
      %s62 = sphi 0, %s59
      %s63 = sphi 0, %s62
      %s79 = sphi 0, %s63
      %s83 = sphi 0, %s83
      %s85 = sphi 0, %s83
      %s86 = sphi 0, %s85
      %s100 = sphi 0, %s86
      %s104 = sphi 0, %s104
      %s106 = sphi 0, %s104
      %s107 = sphi 0, %s106
      %s121 = sphi 0, %s107
      %s125 = sphi 0, %s125
      %s127 = sphi 0, %s125
      %s128 = sphi 0, %s127
      %s142 = sphi 0, %s128
      %s146 = sphi 0, %s146
      %s148 = sphi 0, %s146
      %s149 = sphi 0, %s148
      %s163 = sphi 0, %s149
      %s169 = sphi 0, %s171
      %s172 = sphi 0, %s169
      %s173 = sphi 0, %s172
      %s189 = sphi 0, %s173
    $region4: #{decoder_forward.5} parent=1 // loop_header_branch
      %26 = sbr.rel (%p24) target = $region8
    $region5: #{decoder_forward.5} parent=1 // loop_body
      %s28 = ssub.s32 %s23, 1
      %s29 = ssub.s32 %s23, 2
      %s30 = sadd.s32 %s23, 1
      %s31 = ssub.s32 %s23, %s30
      %p32 = scmp.eq.s32.totalorder %s31, 0
      %s34 = sadd.s32 %s33, 1
      %s35 = scalar_select %p32, %s33, %s34
      %p38 = pneg %p32
      %p39 = scmp.eq.s32.totalorder %s23, 1
      %p40 = por %p38, %p39
      %p41 = scmp.ne.s32.totalorder %s33, %s36
      %p42 = scmp.eq.s32.totalorder %s23, 0
      %p43 = por %p41, %p42
      %p44 = scmp.ne.s32.totalorder %s33, %s36
      %p45 = scmp.eq.s32.totalorder %s28, 1
      %p46 = por %p44, %p45
      %p47 = scmp.ne.s32.totalorder %s36, %s37
      %p48 = scmp.eq.s32.totalorder %s28, 0
      %p49 = por %p47, %p48
      %p50 = scmp.ne.s32.totalorder %s36, %s37
      %p51 = scmp.eq.s32.totalorder %s29, 1
      %p52 = por %p50, %p51
      %p54 = scmp.ne.s32.totalorder %s37, %s53
      %p55 = scmp.eq.s32.totalorder %s29, 0
      %p56 = por %p54, %p55
      %s57 = ssub.s32 %s23, %s30
      %p58 = scmp.eq.s32.totalorder %s57, 0
      %s60 = sadd.s32 %s59, 1
      %s61 = scalar_select %p58, %s59, %s60
      %p64 = pneg %p58
      %p65 = scmp.eq.s32.totalorder %s23, 1
      %p66 = por %p64, %p65
      %p67 = scmp.ne.s32.totalorder %s59, %s62
      %p68 = scmp.eq.s32.totalorder %s23, 0
      %p69 = por %p67, %p68
      %p70 = scmp.ne.s32.totalorder %s59, %s62
      %p71 = scmp.eq.s32.totalorder %s28, 1
      %p72 = por %p70, %p71
      %p73 = scmp.ne.s32.totalorder %s62, %s63
      %p74 = scmp.eq.s32.totalorder %s28, 0
      %p75 = por %p73, %p74
      %p76 = scmp.ne.s32.totalorder %s62, %s63
      %p77 = scmp.eq.s32.totalorder %s29, 1
      %p78 = por %p76, %p77
      %p80 = scmp.ne.s32.totalorder %s63, %s79
      %p81 = scmp.eq.s32.totalorder %s29, 0
      %p82 = por %p80, %p81
      %s84 = sadd.s32 %s83, 1
      %p87 = scmp.eq.s32.totalorder %s23, 1
      %p88 = scmp.ne.s32.totalorder %s83, %s85
      %p89 = scmp.eq.s32.totalorder %s23, 0
      %p90 = por %p88, %p89
      %p91 = scmp.ne.s32.totalorder %s83, %s85
      %p92 = scmp.eq.s32.totalorder %s28, 1
      %p93 = por %p91, %p92
      %p94 = scmp.ne.s32.totalorder %s85, %s86
      %p95 = scmp.eq.s32.totalorder %s28, 0
      %p96 = por %p94, %p95
      %p97 = scmp.ne.s32.totalorder %s85, %s86
      %p98 = scmp.eq.s32.totalorder %s29, 1
      %p99 = por %p97, %p98
      %p101 = scmp.ne.s32.totalorder %s86, %s100
      %p102 = scmp.eq.s32.totalorder %s29, 0
      %p103 = por %p101, %p102
      %s105 = sadd.s32 %s104, 1
      %p108 = scmp.eq.s32.totalorder %s23, 1
      %p109 = scmp.ne.s32.totalorder %s104, %s106
      %p110 = scmp.eq.s32.totalorder %s23, 0
      %p111 = por %p109, %p110
      %p112 = scmp.ne.s32.totalorder %s104, %s106
      %p113 = scmp.eq.s32.totalorder %s28, 1
      %p114 = por %p112, %p113
      %p115 = scmp.ne.s32.totalorder %s106, %s107
      %p116 = scmp.eq.s32.totalorder %s28, 0
      %p117 = por %p115, %p116
      %p118 = scmp.ne.s32.totalorder %s106, %s107
      %p119 = scmp.eq.s32.totalorder %s29, 1
      %p120 = por %p118, %p119
      %p122 = scmp.ne.s32.totalorder %s107, %s121
      %p123 = scmp.eq.s32.totalorder %s29, 0
      %p124 = por %p122, %p123
      %s126 = sadd.s32 %s125, 1
      %p129 = scmp.eq.s32.totalorder %s23, 1
      %p130 = scmp.ne.s32.totalorder %s125, %s127
      %p131 = scmp.eq.s32.totalorder %s23, 0
      %p132 = por %p130, %p131
      %p133 = scmp.ne.s32.totalorder %s125, %s127
      %p134 = scmp.eq.s32.totalorder %s28, 1
      %p135 = por %p133, %p134
      %p136 = scmp.ne.s32.totalorder %s127, %s128
      %p137 = scmp.eq.s32.totalorder %s28, 0
      %p138 = por %p136, %p137
      %p139 = scmp.ne.s32.totalorder %s127, %s128
      %p140 = scmp.eq.s32.totalorder %s29, 1
      %p141 = por %p139, %p140
      %p143 = scmp.ne.s32.totalorder %s128, %s142
      %p144 = scmp.eq.s32.totalorder %s29, 0
      %p145 = por %p143, %p144
      %s147 = sadd.s32 %s146, 1
      %p150 = scmp.eq.s32.totalorder %s23, 1
      %p151 = scmp.ne.s32.totalorder %s146, %s148
      %p152 = scmp.eq.s32.totalorder %s23, 0
      %p153 = por %p151, %p152
      %p154 = scmp.ne.s32.totalorder %s146, %s148
      %p155 = scmp.eq.s32.totalorder %s28, 1
      %p156 = por %p154, %p155
      %p157 = scmp.ne.s32.totalorder %s148, %s149
      %p158 = scmp.eq.s32.totalorder %s28, 0
      %p159 = por %p157, %p158
      %p160 = scmp.ne.s32.totalorder %s148, %s149
      %p161 = scmp.eq.s32.totalorder %s29, 1
      %p162 = por %p160, %p161
      %p164 = scmp.ne.s32.totalorder %s149, %s163
      %p165 = scmp.eq.s32.totalorder %s29, 0
      %p166 = por %p164, %p165
      %s167 = ssub.s32 %s23, %s30
      %p168 = scmp.eq.s32.totalorder %s167, 0
      %s170 = sadd.s32 %s169, 1
      %s171 = scalar_select %p168, %s169, %s170
      %p174 = pneg %p168
      %p175 = scmp.eq.s32.totalorder %s23, 1
      %p176 = por %p174, %p175
      %p177 = scmp.ne.s32.totalorder %s169, %s172
      %p178 = scmp.eq.s32.totalorder %s23, 0
      %p179 = por %p177, %p178
      %p180 = scmp.ne.s32.totalorder %s169, %s172
      %p181 = scmp.eq.s32.totalorder %s28, 1
      %p182 = por %p180, %p181
      %p183 = scmp.ne.s32.totalorder %s172, %s173
      %p184 = scmp.eq.s32.totalorder %s28, 0
      %p185 = por %p183, %p184
      %p186 = scmp.ne.s32.totalorder %s172, %s173
      %p187 = scmp.eq.s32.totalorder %s29, 1
      %p188 = por %p186, %p187
      %p190 = scmp.ne.s32.totalorder %s173, %s189
      %p191 = scmp.eq.s32.totalorder %s29, 0
      %p192 = por %p190, %p191
      %p193 = scmp.le.s32.totalorder 1, %s23
      %p194 = scmp.lt.s32.totalorder %s23, 3
      %p195 = pnand %p193, %p194
      %p196 = pneg %p195
      // Predicated region
      $region9: #{decoder_forward.5} parent=5 // pred_check
        _
      $region10: #{decoder_forward.5} parent=5 // pred_check_branch
        %198 = sbr.rel (%p195) target = $region12
      $region11: #{decoder_forward.5} parent=5 // pred_region
        %s199 = ssub.s32 %s23, 1
        // Predicated region
        $region13: #{decoder_forward.5} parent=11 // pred_check
          %p200 = pneg %p96
        $region14: #{decoder_forward.5} parent=11 // pred_check_branch
          %202 = sbr.rel (%p200) target = $region16
        $region15: #{decoder_forward.5} parent=11 // pred_region
          %s204 = ssub.s32 2304, 2304
          %205 = vsyncadd [#allocation7], %s204
          %s206 = sshll.u32 [#allocation8], 4
          %s207 = int_to_ptr.vmem [resolvable:$true] %s206
          %212 = dma.hbm_to_vmem [thread:$0]  %s2, 2304, %s207, [#allocation7], 64, 64, 4
        $region16: #{decoder_forward.5} parent=11 // pred_fallthru
          _
        // Predicated region
        $region17: #{decoder_forward.5} parent=11 // pred_check
          %p213 = pneg %p117
        $region18: #{decoder_forward.5} parent=11 // pred_check_branch
          %215 = sbr.rel (%p213) target = $region20
        $region19: #{decoder_forward.5} parent=11 // pred_region
          %s217 = ssub.s32 16, 16
          %218 = vsyncadd [#allocation10], %s217
          %s220 = sshll.u32 [#allocation9], 4
          %s221 = int_to_ptr.vmem [resolvable:$true] %s220
          %223 = dma.hbm_to_vmem [thread:$0]  %s3, 16, %s221, [#allocation10]
        $region20: #{decoder_forward.5} parent=11 // pred_fallthru
          _
        // Predicated region
        $region21: #{decoder_forward.5} parent=11 // pred_check
          %p224 = pneg %p138
        $region22: #{decoder_forward.5} parent=11 // pred_check_branch
          %226 = sbr.rel (%p224) target = $region24
        $region23: #{decoder_forward.5} parent=11 // pred_region
          %s228 = ssub.s32 1152, 1152
          %229 = vsyncadd [#allocation10], %s228
          %s230 = sshll.u32 [#allocation11], 4
          %s231 = int_to_ptr.vmem [resolvable:$true] %s230
          %236 = dma.hbm_to_vmem [thread:$0]  %s4, 1152, %s231, [#allocation10], 64, 64, 4
        $region24: #{decoder_forward.5} parent=11 // pred_fallthru
          _
        // Predicated region
        $region25: #{decoder_forward.5} parent=11 // pred_check
          %p237 = pneg %p159
        $region26: #{decoder_forward.5} parent=11 // pred_check_branch
          %239 = sbr.rel (%p237) target = $region28
        $region27: #{decoder_forward.5} parent=11 // pred_region
          %s241 = ssub.s32 16, 16
          %242 = vsyncadd [#allocation13], %s241
          %s244 = sshll.u32 [#allocation12], 4
          %s245 = int_to_ptr.vmem [resolvable:$true] %s244
          %247 = dma.hbm_to_vmem [thread:$0]  %s5, 16, %s245, [#allocation13]
        $region28: #{decoder_forward.5} parent=11 // pred_fallthru
          _
      $region12: #{decoder_forward.5} parent=5 // pred_fallthru
        _
      %p248 = scmp.lt.s32.totalorder %s23, 2
      // Predicated region
      $region29: #{decoder_forward.5} parent=5 // pred_check
        %p249 = pneg %p248
      $region30: #{decoder_forward.5} parent=5 // pred_check_branch
        %251 = sbr.rel (%p249) target = $region32
      $region31: #{decoder_forward.5} parent=5 // pred_region
        // Predicated region
        $region33: #{decoder_forward.5} parent=31 // pred_check
          %p252 = pneg %p43
        $region34: #{decoder_forward.5} parent=31 // pred_check_branch
          %254 = sbr.rel (%p252) target = $region36
        $region35: #{decoder_forward.5} parent=31 // pred_region
          %s255 = sand.u32 %s33, 1
          %s256 = scalar_lea.sflag [#allocation4], %s255
          %s257 = sand.u32 %s33, 1
          %s258 = smul.addr %s257, 76
          %s259 = scalar_lea.vmem [#allocation3], %s258
          %s261 = ssub.s32 1216, 1216
          %262 = vsyncadd %s256, %s261
          %s263 = smul.addr %s23, 19
          %s264 = smul.addr %s263, 64
          %s265 = scalar_lea.hbm %s0, %s264
          %s266 = sshll.u32 %s259, 4
          %s267 = int_to_ptr.vmem [resolvable:$true] %s266
          %272 = dma.hbm_to_vmem [thread:$0]  %s265, 1216, %s267, %s256, 64, 64, 4
        $region36: #{decoder_forward.5} parent=31 // pred_fallthru
          _
        // Predicated region
        $region37: #{decoder_forward.5} parent=31 // pred_check
          %p273 = pneg %p69
        $region38: #{decoder_forward.5} parent=31 // pred_check_branch
          %275 = sbr.rel (%p273) target = $region40
        $region39: #{decoder_forward.5} parent=31 // pred_region
          %s276 = sand.u32 %s23, 1
          %s277 = scalar_lea.sflag [#allocation7], %s276
          %s278 = sand.u32 %s59, 1
          %s279 = smul.addr %s278, 76
          %s280 = scalar_lea.vmem [#allocation6], %s279
          %s282 = ssub.s32 1216, 1216
          %283 = vsyncadd %s277, %s282
          %s284 = smul.addr %s23, 19
          %s285 = smul.addr %s284, 64
          %s286 = scalar_lea.hbm %s1, %s285
          %s287 = sshll.u32 %s280, 4
          %s288 = int_to_ptr.vmem [resolvable:$true] %s287
          %293 = dma.hbm_to_vmem [thread:$0]  %s286, 1216, %s288, %s277, 64, 64, 4
        $region40: #{decoder_forward.5} parent=31 // pred_fallthru
          _
      $region32: #{decoder_forward.5} parent=5 // pred_fallthru
        _
      %p294 = scmp.le.s32.totalorder 1, %s23
      %p295 = scmp.lt.s32.totalorder %s23, 3
      %p296 = pnand %p294, %p295
      %p297 = pneg %p296
      // Predicated region
      $region41: #{decoder_forward.5} parent=5 // pred_check
        _
      $region42: #{decoder_forward.5} parent=5 // pred_check_branch
        %299 = sbr.rel (%p296) target = $region44
      $region43: #{decoder_forward.5} parent=5 // pred_region
        %s300 = ssub.s32 %s23, 1
        %s301 = sand.u32 %s36, 1
        %s302 = scalar_lea.sflag [#allocation4], %s301
        %s303 = sand.u32 %s36, 1
        %s304 = smul.addr %s303, 76
        %s305 = scalar_lea.vmem [#allocation3], %s304
        // Predicated region
        $region45: #{decoder_forward.5} parent=43 // pred_check
          %p306 = pneg %p49
        $region46: #{decoder_forward.5} parent=43 // pred_check_branch
          %308 = sbr.rel (%p306) target = $region48
        $region47: #{decoder_forward.5} parent=43 // pred_region
          %309 = dma.done %s302, 1216
        $region48: #{decoder_forward.5} parent=43 // pred_fallthru
          _
        %s310 = sand.u32 %s28, 1
        %s311 = scalar_lea.sflag [#allocation7], %s310
        %s312 = sand.u32 %s62, 1
        %s313 = smul.addr %s312, 76
        %s314 = scalar_lea.vmem [#allocation6], %s313
        // Predicated region
        $region49: #{decoder_forward.5} parent=43 // pred_check
          %p315 = pneg %p75
        $region50: #{decoder_forward.5} parent=43 // pred_check_branch
          %317 = sbr.rel (%p315) target = $region52
        $region51: #{decoder_forward.5} parent=43 // pred_region
          %318 = dma.done %s311, 1216
        $region52: #{decoder_forward.5} parent=43 // pred_fallthru
          _
        // Predicated region
        $region53: #{decoder_forward.5} parent=43 // pred_check
          %p319 = pneg %p96
        $region54: #{decoder_forward.5} parent=43 // pred_check_branch
          %321 = sbr.rel (%p319) target = $region56
        $region55: #{decoder_forward.5} parent=43 // pred_region
          %322 = dma.done [#allocation7], 2304
        $region56: #{decoder_forward.5} parent=43 // pred_fallthru
          _
        // Predicated region
        $region57: #{decoder_forward.5} parent=43 // pred_check
          %p323 = pneg %p117
        $region58: #{decoder_forward.5} parent=43 // pred_check_branch
          %325 = sbr.rel (%p323) target = $region60
        $region59: #{decoder_forward.5} parent=43 // pred_region
          %326 = dma.done [#allocation10], 16
        $region60: #{decoder_forward.5} parent=43 // pred_fallthru
          _
        // Predicated region
        $region61: #{decoder_forward.5} parent=43 // pred_check
          %p327 = pneg %p138
        $region62: #{decoder_forward.5} parent=43 // pred_check_branch
          %329 = sbr.rel (%p327) target = $region64
        $region63: #{decoder_forward.5} parent=43 // pred_region
          %330 = dma.done [#allocation10], 1152
        $region64: #{decoder_forward.5} parent=43 // pred_fallthru
          _
        // Predicated region
        $region65: #{decoder_forward.5} parent=43 // pred_check
          %p331 = pneg %p159
        $region66: #{decoder_forward.5} parent=43 // pred_check_branch
          %333 = sbr.rel (%p331) target = $region68
        $region67: #{decoder_forward.5} parent=43 // pred_region
          %334 = dma.done [#allocation13], 16
        $region68: #{decoder_forward.5} parent=43 // pred_fallthru
          _
        %s335 = sand.u32 %s36, 1
        %s336 = scalar_lea.sflag [#allocation4], %s335
        %s337 = sand.u32 %s36, 1
        %s338 = smul.addr %s337, 76
        %s339 = scalar_lea.vmem [#allocation3], %s338
        %p340 = pneg %p49
        %p341 = pneg %p46
        %s342 = sand.u32 %s28, 1
        %s343 = scalar_lea.sflag [#allocation7], %s342
        %s344 = sand.u32 %s62, 1
        %s345 = smul.addr %s344, 76
        %s346 = scalar_lea.vmem [#allocation6], %s345
        %p347 = pneg %p75
        %p348 = pneg %p72
        %p349 = pneg %p96
        %p350 = pneg %p93
        %p351 = pneg %p117
        %p352 = pneg %p114
        %p353 = pneg %p138
        %p354 = pneg %p135
        %p355 = pneg %p159
        %p356 = pneg %p156
        %p357 = pneg %p185
        %p358 = pneg %p182
        %s359 = sand.u32 %s172, 1
        %s360 = scalar_lea.sflag [#allocation5], %s359
        %s361 = sand.u32 %s172, 1
        %s362 = smul.addr %s361, 48
        %s363 = scalar_lea.vmem [#allocation14], %s362
        %v365 = vld [vmem:[%s305] sm:$0xf]
        %v366 = vld [vmem:[%s305 + $0x4] sm:$0xf]
        %v367 = vld [vmem:[%s305 + $0x8] sm:$0xf]
        %v368 = vld [vmem:[%s305 + $0xc] sm:$0xf]
        %v369 = vld [vmem:[%s305 + $0x10] sm:$0xf]
        %v370 = vld [vmem:[%s305 + $0x14] sm:$0xf]
        %v371 = vld [vmem:[%s305 + $0x18] sm:$0xf]
        %v372 = vld [vmem:[%s305 + $0x1c] sm:$0xf]
        %v373 = vld [vmem:[%s305 + $0x20] sm:$0xf]
        %v374 = vld [vmem:[%s305 + $0x24] sm:$0xf]
        %v375 = vld [vmem:[%s305 + $0x28] sm:$0xf]
        %v376 = vld [vmem:[%s305 + $0x2c] sm:$0xf]
        %v377 = vld [vmem:[%s305 + $0x30] sm:$0xf]
        %v378 = vld [vmem:[%s305 + $0x34] sm:$0xf]
        %v379 = vld [vmem:[%s305 + $0x38] sm:$0xf]
        %v380 = vld [vmem:[%s305 + $0x3c] sm:$0xf]
        %v381 = vld [vmem:[%s305 + $0x40] sm:$0xf]
        %v382 = vld [vmem:[%s305 + $0x44] sm:$0xf]
        %v383 = vld [vmem:[%s305 + $0x48] sm:$0x1]
        %v384 = vld [vmem:[%s305] sm:$0xe]
        %v385 = vld [vmem:[%s314] sm:$0xf]
        %v386 = vld [vmem:[%s314 + $0x4] sm:$0xf]
        %v387 = vld [vmem:[%s314 + $0x8] sm:$0xf]
        %v388 = vld [vmem:[%s314 + $0xc] sm:$0xf]
        %v389 = vld [vmem:[%s314 + $0x10] sm:$0xf]
        %v390 = vld [vmem:[%s314 + $0x14] sm:$0xf]
        %v391 = vld [vmem:[%s314 + $0x18] sm:$0xf]
        %v392 = vld [vmem:[%s314 + $0x1c] sm:$0xf]
        %v393 = vld [vmem:[%s314 + $0x20] sm:$0xf]
        %v394 = vld [vmem:[%s314 + $0x24] sm:$0xf]
        %v395 = vld [vmem:[%s314 + $0x28] sm:$0xf]
        %v396 = vld [vmem:[%s314 + $0x2c] sm:$0xf]
        %v397 = vld [vmem:[%s314 + $0x30] sm:$0xf]
        %v398 = vld [vmem:[%s314 + $0x34] sm:$0xf]
        %v399 = vld [vmem:[%s314 + $0x38] sm:$0xf]
        %v400 = vld [vmem:[%s314 + $0x3c] sm:$0xf]
        %v401 = vld [vmem:[%s314 + $0x40] sm:$0xf]
        %v402 = vld [vmem:[%s314 + $0x44] sm:$0xf]
        %v403 = vld [vmem:[%s314 + $0x48] sm:$0x1]
        %v404 = vld [vmem:[%s314] sm:$0xe]
        %v423 = vunpack.c.l.b16 %v365
        %v424 = vunpack.c.l.b16 %v366
        %v425 = vunpack.c.l.b16 %v367
        %v426 = vunpack.c.l.b16 %v368
        %v427 = vunpack.c.l.b16 %v369
        %v428 = vunpack.c.l.b16 %v370
        %v429 = vunpack.c.l.b16 %v371
        %v430 = vunpack.c.l.b16 %v372
        %v431 = vunpack.c.l.b16 %v373
        %v432 = vunpack.c.l.b16 %v374
        %v433 = vunpack.c.l.b16 %v375
        %v434 = vunpack.c.l.b16 %v376
        %v435 = vunpack.c.l.b16 %v377
        %v436 = vunpack.c.l.b16 %v378
        %v437 = vunpack.c.l.b16 %v379
        %v438 = vunpack.c.l.b16 %v380
        %v439 = vunpack.c.l.b16 %v381
        %v440 = vunpack.c.l.b16 %v382
        %v441 = vpack.c.b16 %v424, %v423
        %v442 = vpack.c.b16 %v426, %v425
        %v443 = vpack.c.b16 %v428, %v427
        %v444 = vpack.c.b16 %v430, %v429
        %v445 = vpack.c.b16 %v432, %v431
        %v446 = vpack.c.b16 %v434, %v433
        %v447 = vpack.c.b16 %v436, %v435
        %v448 = vpack.c.b16 %v438, %v437
        %v449 = vpack.c.b16 %v440, %v439
        %v451 = vunpack.c.l.b16 %v383
        %v452 = vpack.c.b16 %v451, %v451
        %vm453 = vsmask.f32 7424
        %v455 = vshrl.u32 %v441, 16
        %v457 = vshll.u32 %v441, 16
        %v459 = vrot.slane %v457, 1
        %v460 = vor.u32 %v455, %v459
        %v462 = vshll.u32 %v442, 16
        %v464 = vrot.slane %v462, 1
        %v465 = vsel %vm453, %v460, %v464
        %v466 = vshrl.u32 %v442, 16
        %v468 = vor.u32 %v466, %v464
        %v470 = vshll.u32 %v443, 16
        %v472 = vrot.slane %v470, 1
        %v473 = vsel %vm453, %v468, %v472
        %v474 = vshrl.u32 %v443, 16
        %v476 = vor.u32 %v474, %v472
        %v478 = vshll.u32 %v444, 16
        %v480 = vrot.slane %v478, 1
        %v481 = vsel %vm453, %v476, %v480
        %v482 = vshrl.u32 %v444, 16
        %v484 = vor.u32 %v482, %v480
        %v486 = vshll.u32 %v445, 16
        %v488 = vrot.slane %v486, 1
        %v489 = vsel %vm453, %v484, %v488
        %v490 = vshrl.u32 %v445, 16
        %v492 = vor.u32 %v490, %v488
        %v494 = vshll.u32 %v446, 16
        %v496 = vrot.slane %v494, 1
        %v497 = vsel %vm453, %v492, %v496
        %v498 = vshrl.u32 %v446, 16
        %v500 = vor.u32 %v498, %v496
        %v502 = vshll.u32 %v447, 16
        %v504 = vrot.slane %v502, 1
        %v505 = vsel %vm453, %v500, %v504
        %v506 = vshrl.u32 %v447, 16
        %v508 = vor.u32 %v506, %v504
        %v510 = vshll.u32 %v448, 16
        %v512 = vrot.slane %v510, 1
        %v513 = vsel %vm453, %v508, %v512
        %v514 = vshrl.u32 %v448, 16
        %v516 = vor.u32 %v514, %v512
        %v518 = vshll.u32 %v449, 16
        %v520 = vrot.slane %v518, 1
        %v521 = vsel %vm453, %v516, %v520
        %v522 = vshrl.u32 %v449, 16
        %v524 = vor.u32 %v522, %v520
        %v526 = vshll.u32 %v452, 16
        %v528 = vrot.slane %v526, 1
        %v529 = vsel %vm453, %v524, %v528
        %530 = vrot.lane.b32.xlu0 %v465, 16
        %v531 = vpop.permute.xlu0 %530
        %532 = vrot.lane.b32.xlu0 %v473, 16
        %v533 = vpop.permute.xlu0 %532
        %534 = vrot.lane.b32.xlu0 %v481, 16
        %v535 = vpop.permute.xlu0 %534
        %536 = vrot.lane.b32.xlu0 %v489, 16
        %v537 = vpop.permute.xlu0 %536
        %538 = vrot.lane.b32.xlu0 %v497, 16
        %v539 = vpop.permute.xlu0 %538
        %540 = vrot.lane.b32.xlu0 %v505, 16
        %v541 = vpop.permute.xlu0 %540
        %542 = vrot.lane.b32.xlu0 %v513, 16
        %v543 = vpop.permute.xlu0 %542
        %544 = vrot.lane.b32.xlu0 %v521, 16
        %v545 = vpop.permute.xlu0 %544
        %546 = vrot.lane.b32.xlu0 %v529, 16
        %v547 = vpop.permute.xlu0 %546
        %v549 = vunpack.c.l.b16 %v384
        %v550 = vpack.c.b16 %v424, %v549
        %vm551 = vcmask 1046528
        %v552 = vrot.slane %v550, 1
        %v553 = vrot.slane %v442, 1
        %v554 = vsel %vm551, %v552, %v553
        %v555 = vrot.slane %v443, 1
        %v556 = vsel %vm551, %v553, %v555
        %v557 = vrot.slane %v444, 1
        %v558 = vsel %vm551, %v555, %v557
        %v559 = vrot.slane %v445, 1
        %v560 = vsel %vm551, %v557, %v559
        %v561 = vrot.slane %v446, 1
        %v562 = vsel %vm551, %v559, %v561
        %v563 = vrot.slane %v447, 1
        %v564 = vsel %vm551, %v561, %v563
        %v565 = vrot.slane %v448, 1
        %v566 = vsel %vm551, %v563, %v565
        %v567 = vrot.slane %v449, 1
        %v568 = vsel %vm551, %v565, %v567
        %v569 = vrot.slane %v452, 1
        %v570 = vsel %vm551, %v567, %v569
        %571 = vrot.lane.b32.xlu0 %v554, 32
        %v572 = vpop.permute.xlu0 %571
        %573 = vrot.lane.b32.xlu0 %v556, 32
        %v574 = vpop.permute.xlu0 %573
        %575 = vrot.lane.b32.xlu0 %v558, 32
        %v576 = vpop.permute.xlu0 %575
        %577 = vrot.lane.b32.xlu0 %v560, 32
        %v578 = vpop.permute.xlu0 %577
        %579 = vrot.lane.b32.xlu0 %v562, 32
        %v580 = vpop.permute.xlu0 %579
        %581 = vrot.lane.b32.xlu0 %v564, 32
        %v582 = vpop.permute.xlu0 %581
        %583 = vrot.lane.b32.xlu0 %v566, 32
        %v584 = vpop.permute.xlu0 %583
        %585 = vrot.lane.b32.xlu0 %v568, 32
        %v586 = vpop.permute.xlu0 %585
        %587 = vrot.lane.b32.xlu0 %v570, 32
        %v588 = vpop.permute.xlu0 %587
        %v607 = vunpack.c.l.b16 %v385
        %v608 = vunpack.c.l.b16 %v386
        %v609 = vunpack.c.l.b16 %v387
        %v610 = vunpack.c.l.b16 %v388
        %v611 = vunpack.c.l.b16 %v389
        %v612 = vunpack.c.l.b16 %v390
        %v613 = vunpack.c.l.b16 %v391
        %v614 = vunpack.c.l.b16 %v392
        %v615 = vunpack.c.l.b16 %v393
        %v616 = vunpack.c.l.b16 %v394
        %v617 = vunpack.c.l.b16 %v395
        %v618 = vunpack.c.l.b16 %v396
        %v619 = vunpack.c.l.b16 %v397
        %v620 = vunpack.c.l.b16 %v398
        %v621 = vunpack.c.l.b16 %v399
        %v622 = vunpack.c.l.b16 %v400
        %v623 = vunpack.c.l.b16 %v401
        %v624 = vunpack.c.l.b16 %v402
        %v625 = vpack.c.b16 %v608, %v607
        %v626 = vpack.c.b16 %v610, %v609
        %v627 = vpack.c.b16 %v612, %v611
        %v628 = vpack.c.b16 %v614, %v613
        %v629 = vpack.c.b16 %v616, %v615
        %v630 = vpack.c.b16 %v618, %v617
        %v631 = vpack.c.b16 %v620, %v619
        %v632 = vpack.c.b16 %v622, %v621
        %v633 = vpack.c.b16 %v624, %v623
        %634 = vrot.lane.b32.xlu0 %v625, 48
        %v635 = vpop.permute.xlu0 %634
        %636 = vrot.lane.b32.xlu0 %v626, 48
        %v637 = vpop.permute.xlu0 %636
        %638 = vrot.lane.b32.xlu0 %v627, 48
        %v639 = vpop.permute.xlu0 %638
        %640 = vrot.lane.b32.xlu0 %v628, 48
        %v641 = vpop.permute.xlu0 %640
        %642 = vrot.lane.b32.xlu0 %v629, 48
        %v643 = vpop.permute.xlu0 %642
        %644 = vrot.lane.b32.xlu0 %v630, 48
        %v645 = vpop.permute.xlu0 %644
        %646 = vrot.lane.b32.xlu0 %v631, 48
        %v647 = vpop.permute.xlu0 %646
        %648 = vrot.lane.b32.xlu0 %v632, 48
        %v649 = vpop.permute.xlu0 %648
        %650 = vrot.lane.b32.xlu0 %v633, 48
        %v651 = vpop.permute.xlu0 %650
        %v653 = vunpack.c.l.b16 %v403
        %v654 = vpack.c.b16 %v653, %v653
        %v656 = vshrl.u32 %v625, 16
        %v658 = vshll.u32 %v625, 16
        %v660 = vrot.slane %v658, 1
        %v661 = vor.u32 %v656, %v660
        %v663 = vshll.u32 %v626, 16
        %v665 = vrot.slane %v663, 1
        %v666 = vsel %vm453, %v661, %v665
        %v667 = vshrl.u32 %v626, 16
        %v669 = vor.u32 %v667, %v665
        %v671 = vshll.u32 %v627, 16
        %v673 = vrot.slane %v671, 1
        %v674 = vsel %vm453, %v669, %v673
        %v675 = vshrl.u32 %v627, 16
        %v677 = vor.u32 %v675, %v673
        %v679 = vshll.u32 %v628, 16
        %v681 = vrot.slane %v679, 1
        %v682 = vsel %vm453, %v677, %v681
        %v683 = vshrl.u32 %v628, 16
        %v685 = vor.u32 %v683, %v681
        %v687 = vshll.u32 %v629, 16
        %v689 = vrot.slane %v687, 1
        %v690 = vsel %vm453, %v685, %v689
        %v691 = vshrl.u32 %v629, 16
        %v693 = vor.u32 %v691, %v689
        %v695 = vshll.u32 %v630, 16
        %v697 = vrot.slane %v695, 1
        %v698 = vsel %vm453, %v693, %v697
        %v699 = vshrl.u32 %v630, 16
        %v701 = vor.u32 %v699, %v697
        %v703 = vshll.u32 %v631, 16
        %v705 = vrot.slane %v703, 1
        %v706 = vsel %vm453, %v701, %v705
        %v707 = vshrl.u32 %v631, 16
        %v709 = vor.u32 %v707, %v705
        %v711 = vshll.u32 %v632, 16
        %v713 = vrot.slane %v711, 1
        %v714 = vsel %vm453, %v709, %v713
        %v715 = vshrl.u32 %v632, 16
        %v717 = vor.u32 %v715, %v713
        %v719 = vshll.u32 %v633, 16
        %v721 = vrot.slane %v719, 1
        %v722 = vsel %vm453, %v717, %v721
        %v723 = vshrl.u32 %v633, 16
        %v725 = vor.u32 %v723, %v721
        %v727 = vshll.u32 %v654, 16
        %v729 = vrot.slane %v727, 1
        %v730 = vsel %vm453, %v725, %v729
        %731 = vrot.lane.b32.xlu0 %v666, 64
        %v732 = vpop.permute.xlu0 %731
        %733 = vrot.lane.b32.xlu0 %v674, 64
        %v734 = vpop.permute.xlu0 %733
        %735 = vrot.lane.b32.xlu0 %v682, 64
        %v736 = vpop.permute.xlu0 %735
        %737 = vrot.lane.b32.xlu0 %v690, 64
        %v738 = vpop.permute.xlu0 %737
        %739 = vrot.lane.b32.xlu0 %v698, 64
        %v740 = vpop.permute.xlu0 %739
        %741 = vrot.lane.b32.xlu0 %v706, 64
        %v742 = vpop.permute.xlu0 %741
        %743 = vrot.lane.b32.xlu0 %v714, 64
        %v744 = vpop.permute.xlu0 %743
        %745 = vrot.lane.b32.xlu0 %v722, 64
        %v746 = vpop.permute.xlu0 %745
        %747 = vrot.lane.b32.xlu0 %v730, 64
        %v748 = vpop.permute.xlu0 %747
        %v750 = vunpack.c.l.b16 %v404
        %v751 = vpack.c.b16 %v608, %v750
        %v752 = vrot.slane %v751, 1
        %v753 = vrot.slane %v626, 1
        %v754 = vsel %vm551, %v752, %v753
        %v755 = vrot.slane %v627, 1
        %v756 = vsel %vm551, %v753, %v755
        %v757 = vrot.slane %v628, 1
        %v758 = vsel %vm551, %v755, %v757
        %v759 = vrot.slane %v629, 1
        %v760 = vsel %vm551, %v757, %v759
        %v761 = vrot.slane %v630, 1
        %v762 = vsel %vm551, %v759, %v761
        %v763 = vrot.slane %v631, 1
        %v764 = vsel %vm551, %v761, %v763
        %v765 = vrot.slane %v632, 1
        %v766 = vsel %vm551, %v763, %v765
        %v767 = vrot.slane %v633, 1
        %v768 = vsel %vm551, %v765, %v767
        %v769 = vrot.slane %v654, 1
        %v770 = vsel %vm551, %v767, %v769
        %771 = vrot.lane.b32.xlu0 %v754, 80
        %v772 = vpop.permute.xlu0 %771
        %773 = vrot.lane.b32.xlu0 %v756, 80
        %v774 = vpop.permute.xlu0 %773
        %775 = vrot.lane.b32.xlu0 %v758, 80
        %v776 = vpop.permute.xlu0 %775
        %777 = vrot.lane.b32.xlu0 %v760, 80
        %v778 = vpop.permute.xlu0 %777
        %779 = vrot.lane.b32.xlu0 %v762, 80
        %v780 = vpop.permute.xlu0 %779
        %781 = vrot.lane.b32.xlu0 %v764, 80
        %v782 = vpop.permute.xlu0 %781
        %783 = vrot.lane.b32.xlu0 %v766, 80
        %v784 = vpop.permute.xlu0 %783
        %785 = vrot.lane.b32.xlu0 %v768, 80
        %v786 = vpop.permute.xlu0 %785
        %787 = vrot.lane.b32.xlu0 %v770, 80
        %v788 = vpop.permute.xlu0 %787
        %vm789 = vcmask 130048
        %v791 = vsel %vm789, %v441, %v531
        %v793 = vsel %vm789, %v442, %v533
        %v795 = vsel %vm789, %v443, %v535
        %v797 = vsel %vm789, %v444, %v537
        %v799 = vsel %vm789, %v445, %v539
        %v801 = vsel %vm789, %v446, %v541
        %v803 = vsel %vm789, %v447, %v543
        %v805 = vsel %vm789, %v448, %v545
        %v807 = vsel %vm789, %v449, %v547
        %vm808 = vcmask 261120
        %v810 = vsel %vm808, %v791, %v572
        %v812 = vsel %vm808, %v793, %v574
        %v814 = vsel %vm808, %v795, %v576
        %v816 = vsel %vm808, %v797, %v578
        %v818 = vsel %vm808, %v799, %v580
        %v820 = vsel %vm808, %v801, %v582
        %v822 = vsel %vm808, %v803, %v584
        %v824 = vsel %vm808, %v805, %v586
        %v826 = vsel %vm808, %v807, %v588
        %vm827 = vcmask 392192
        %v829 = vsel %vm827, %v810, %v635
        %v831 = vsel %vm827, %v812, %v637
        %v833 = vsel %vm827, %v814, %v639
        %v835 = vsel %vm827, %v816, %v641
        %v837 = vsel %vm827, %v818, %v643
        %v839 = vsel %vm827, %v820, %v645
        %v841 = vsel %vm827, %v822, %v647
        %v843 = vsel %vm827, %v824, %v649
        %v845 = vsel %vm827, %v826, %v651
        %vm846 = vcmask 523264
        %v848 = vsel %vm846, %v829, %v732
        %v850 = vsel %vm846, %v831, %v734
        %v852 = vsel %vm846, %v833, %v736
        %v854 = vsel %vm846, %v835, %v738
        %v856 = vsel %vm846, %v837, %v740
        %v858 = vsel %vm846, %v839, %v742
        %v860 = vsel %vm846, %v841, %v744
        %v862 = vsel %vm846, %v843, %v746
        %v864 = vsel %vm846, %v845, %v748
        %vm865 = vcmask 654336
        %v867 = vsel %vm865, %v848, %v772
        %v869 = vsel %vm865, %v850, %v774
        %v871 = vsel %vm865, %v852, %v776
        %v873 = vsel %vm865, %v854, %v778
        %v875 = vsel %vm865, %v856, %v780
        %v877 = vsel %vm865, %v858, %v782
        %v879 = vsel %vm865, %v860, %v784
        %v881 = vsel %vm865, %v862, %v786
        %v883 = vsel %vm865, %v864, %v788
        %v884 = vld [vmem:[#allocation8] sm:$0xf]
        %v885 = vld [vmem:[#allocation8 + $0x4] sm:$0xf]
        %v886 = vld [vmem:[#allocation8 + $0x8] sm:$0xf]
        %v887 = vld [vmem:[#allocation8 + $0xc] sm:$0xf]
        %v888 = vld [vmem:[#allocation8 + $0x10] sm:$0xf]
        %v889 = vld [vmem:[#allocation8 + $0x14] sm:$0xf]
        %v890 = vld [vmem:[#allocation8 + $0x18] sm:$0xf]
        %v891 = vld [vmem:[#allocation8 + $0x1c] sm:$0xf]
        %v892 = vld [vmem:[#allocation8 + $0x20] sm:$0xf]
        %v893 = vld [vmem:[#allocation8 + $0x24] sm:$0xf]
        %v894 = vld [vmem:[#allocation8 + $0x28] sm:$0xf]
        %v895 = vld [vmem:[#allocation8 + $0x2c] sm:$0xf]
        %s896 = scalar_lea.vmem [#allocation8], 48
        %v897 = vld [vmem:[%s896] sm:$0xf]
        %v898 = vld [vmem:[%s896 + $0x4] sm:$0xf]
        %v899 = vld [vmem:[%s896 + $0x8] sm:$0xf]
        %v900 = vld [vmem:[%s896 + $0xc] sm:$0xf]
        %v901 = vld [vmem:[%s896 + $0x10] sm:$0xf]
        %v902 = vld [vmem:[%s896 + $0x14] sm:$0xf]
        %v903 = vld [vmem:[%s896 + $0x18] sm:$0xf]
        %v904 = vld [vmem:[%s896 + $0x1c] sm:$0xf]
        %v905 = vld [vmem:[%s896 + $0x20] sm:$0xf]
        %v906 = vld [vmem:[%s896 + $0x24] sm:$0xf]
        %v907 = vld [vmem:[%s896 + $0x28] sm:$0xf]
        %v908 = vld [vmem:[%s896 + $0x2c] sm:$0xf]
        %vm918 = vcmask 1041408
        %v919 = vrot.slane %v867, 6
        %v920 = vrot.slane %v869, 6
        %v921 = vsel %vm918, %v919, %v920
        %v922 = vrot.slane %v871, 6
        %v923 = vsel %vm918, %v920, %v922
        %v924 = vrot.slane %v873, 6
        %v925 = vsel %vm918, %v922, %v924
        %v926 = vrot.slane %v875, 6
        %v927 = vsel %vm918, %v924, %v926
        %v928 = vrot.slane %v877, 6
        %v929 = vsel %vm918, %v926, %v928
        %v930 = vrot.slane %v879, 6
        %v931 = vsel %vm918, %v928, %v930
        %v932 = vrot.slane %v881, 6
        %v933 = vsel %vm918, %v930, %v932
        %v934 = vrot.slane %v883, 6
        %v935 = vsel %vm918, %v932, %v934
        %v948 = vunpack.c.l.b16 %v897
        %v949 = vunpack.c.l.b16 %v898
        %v950 = vunpack.c.l.b16 %v899
        %v951 = vunpack.c.l.b16 %v900
        %v952 = vunpack.c.l.b16 %v901
        %v953 = vunpack.c.l.b16 %v902
        %v954 = vunpack.c.l.b16 %v903
        %v955 = vunpack.c.l.b16 %v904
        %v956 = vunpack.c.l.b16 %v905
        %v957 = vunpack.c.l.b16 %v906
        %v958 = vunpack.c.l.b16 %v907
        %v959 = vunpack.c.l.b16 %v908
        %v960 = vpack.c.b16 %v949, %v948
        %v961 = vpack.c.b16 %v951, %v950
        %v962 = vpack.c.b16 %v953, %v952
        %v963 = vpack.c.b16 %v955, %v954
        %v964 = vpack.c.b16 %v957, %v956
        %v965 = vpack.c.b16 %v959, %v958
        %vm972 = vcmask 785408
        %v974 = vsel %vm972, %v921, 0
        %v977 = vsel %vm972, %v923, 0
        %v980 = vsel %vm972, %v925, 0
        %v983 = vsel %vm972, %v927, 0
        %v986 = vsel %vm972, %v929, 0
        %v989 = vsel %vm972, %v931, 0
        %v992 = vsel %vm972, %v933, 0
        %v995 = vsel %vm972, %v935, 0
        %997 = vmatprep.subr.bf16.mxu0 0
        %998 = vmatpush1.bf16.msra.mxu0 %v960
        %999 = vmatprep.subr.bf16.mxu0 0
        %1000 = vmatpush1.bf16.msra.mxu0 %v961
        %1001 = vmatprep.subr.bf16.mxu0 0
        %1002 = vmatpush1.bf16.msra.mxu0 %v962
        %1003 = vmatprep.subr.bf16.mxu0 0
        %1004 = vmatpush1.bf16.msra.mxu0 %v963
        %1005 = vmatprep.subr.bf16.mxu0 0
        %1006 = vmatpush1.bf16.msra.mxu0 %v964
        %1007 = vmatprep.subr.bf16.mxu0 0
        %1008 = vmatpush1.bf16.msra.mxu0 %v965
        %1009 = vmatprep.subr.bf16.mxu0 0
        %1010 = vmatpush1.bf16.msra.mxu0 0
        %1011 = vmatprep.subr.bf16.mxu0 0
        %1012 = vmatpush1.bf16.msra.mxu0 0
        %1013 = vmatprep.subr.bf16.mxu0 0
        %1014 = vmatpush1.bf16.msra.mxu0 0
        %1015 = vmatprep.subr.bf16.mxu0 0
        %1016 = vmatpush1.bf16.msra.mxu0 0
        %1017 = vmatprep.subr.bf16.mxu0 0
        %1018 = vmatpush1.bf16.msra.mxu0 0
        %1019 = vmatprep.subr.bf16.mxu0 0
        %1020 = vmatpush1.bf16.msra.mxu0 0
        %1021 = vmatprep.subr.bf16.mxu0 0
        %1022 = vmatpush1.bf16.msra.mxu0 0
        %1023 = vmatprep.subr.bf16.mxu0 0
        %1024 = vmatpush1.bf16.msra.mxu0 0
        %1025 = vmatprep.subr.bf16.mxu0 0
        %1026 = vmatpush1.bf16.msra.mxu0 0
        %1027 = vmatprep.subr.bf16.mxu0 0
        %1028 = vmatpush1.bf16.msra.mxu0 0
        %1029 = vmatprep.mubr.bf16.mxu0 0
        %1030 = vmatmul.mubr.bf16.gmra.mrb[0].mxu0 %v974
        %v1031 = vpop.f32.mrb[0].mxu0
        %v1032 = vadd.f32 0.0, %v1031
        %v1033 = vpop.f32.mrb[0].mxu0
        %v1034 = vpop.f32.mrb[0].mxu0
        %v1035 = vadd.f32 0.0, %v1034
        %v1036 = vpop.f32.mrb[0].mxu0
        %1037 = vmatprep.mubr.bf16.mxu0 0
        %1038 = vmatmul.mubr.bf16.gmra.mrb[0].mxu0 %v977
        %v1039 = vpop.f32.mrb[0].mxu0
        %v1040 = vadd.f32 0.0, %v1039
        %v1041 = vpop.f32.mrb[0].mxu0
        %v1042 = vpop.f32.mrb[0].mxu0
        %v1043 = vadd.f32 0.0, %v1042
        %v1044 = vpop.f32.mrb[0].mxu0
        %1045 = vmatprep.mubr.bf16.mxu0 0
        %1046 = vmatmul.mubr.bf16.gmra.mrb[0].mxu0 %v980
        %v1047 = vpop.f32.mrb[0].mxu0
        %v1048 = vadd.f32 0.0, %v1047
        %v1049 = vpop.f32.mrb[0].mxu0
        %v1050 = vpop.f32.mrb[0].mxu0
        %v1051 = vadd.f32 0.0, %v1050
        %v1052 = vpop.f32.mrb[0].mxu0
        %1053 = vmatprep.mubr.bf16.mxu0 0
        %1054 = vmatmul.mubr.bf16.gmra.mrb[0].mxu0 %v983
        %v1055 = vpop.f32.mrb[0].mxu0
        %v1056 = vadd.f32 0.0, %v1055
        %v1057 = vpop.f32.mrb[0].mxu0
        %v1058 = vpop.f32.mrb[0].mxu0
        %v1059 = vadd.f32 0.0, %v1058
        %v1060 = vpop.f32.mrb[0].mxu0
        %1061 = vmatprep.mubr.bf16.mxu0 0
        %1062 = vmatmul.mubr.bf16.gmra.mrb[0].mxu0 %v986
        %v1063 = vpop.f32.mrb[0].mxu0
        %v1064 = vadd.f32 0.0, %v1063
        %v1065 = vpop.f32.mrb[0].mxu0
        %v1066 = vpop.f32.mrb[0].mxu0
        %v1067 = vadd.f32 0.0, %v1066
        %v1068 = vpop.f32.mrb[0].mxu0
        %1069 = vmatprep.mubr.bf16.mxu0 0
        %1070 = vmatmul.mubr.bf16.gmra.mrb[0].mxu0 %v989
        %v1071 = vpop.f32.mrb[0].mxu0
        %v1072 = vadd.f32 0.0, %v1071
        %v1073 = vpop.f32.mrb[0].mxu0
        %v1074 = vpop.f32.mrb[0].mxu0
        %v1075 = vadd.f32 0.0, %v1074
        %v1076 = vpop.f32.mrb[0].mxu0
        %1077 = vmatprep.mubr.bf16.mxu0 0
        %1078 = vmatmul.mubr.bf16.gmra.mrb[0].mxu0 %v992
        %v1079 = vpop.f32.mrb[0].mxu0
        %v1080 = vadd.f32 0.0, %v1079
        %v1081 = vpop.f32.mrb[0].mxu0
        %v1082 = vpop.f32.mrb[0].mxu0
        %v1083 = vadd.f32 0.0, %v1082
        %v1084 = vpop.f32.mrb[0].mxu0
        %1085 = vmatprep.mubr.bf16.mxu0 0
        %1086 = vmatmul.mubr.bf16.gmra.mrb[0].mxu0 %v995
        %v1087 = vpop.f32.mrb[0].mxu0
        %v1088 = vadd.f32 0.0, %v1087
        %v1089 = vpop.f32.mrb[0].mxu0
        %v1090 = vpop.f32.mrb[0].mxu0
        %v1091 = vpop.f32.mrb[0].mxu0
        %1092 = vdwg.mxu0
        %v1105 = vunpack.c.l.b16 %v884
        %v1106 = vunpack.c.l.b16 %v885
        %v1107 = vunpack.c.l.b16 %v886
        %v1108 = vunpack.c.l.b16 %v887
        %v1109 = vunpack.c.l.b16 %v888
        %v1110 = vunpack.c.l.b16 %v889
        %v1111 = vunpack.c.l.b16 %v890
        %v1112 = vunpack.c.l.b16 %v891
        %v1113 = vunpack.c.l.b16 %v892
        %v1114 = vunpack.c.l.b16 %v893
        %v1115 = vunpack.c.l.b16 %v894
        %v1116 = vunpack.c.l.b16 %v895
        %v1117 = vpack.c.b16 %v1106, %v1105
        %v1118 = vpack.c.b16 %v1108, %v1107
        %v1119 = vpack.c.b16 %v1110, %v1109
        %v1120 = vpack.c.b16 %v1112, %v1111
        %v1121 = vpack.c.b16 %v1114, %v1113
        %v1122 = vpack.c.b16 %v1116, %v1115
        %v1129 = vsel %vm972, %v867, 0
        %v1131 = vsel %vm972, %v869, 0
        %v1133 = vsel %vm972, %v871, 0
        %v1135 = vsel %vm972, %v873, 0
        %v1137 = vsel %vm972, %v875, 0
        %v1139 = vsel %vm972, %v877, 0
        %v1141 = vsel %vm972, %v879, 0
        %v1143 = vsel %vm972, %v881, 0
        %1145 = vmatprep.subr.bf16.mxu0 0
        %1146 = vmatpush1.bf16.msra.mxu0 %v1117
        %1147 = vmatprep.subr.bf16.mxu0 0
        %1148 = vmatpush1.bf16.msra.mxu0 %v1118
        %1149 = vmatprep.subr.bf16.mxu0 0
        %1150 = vmatpush1.bf16.msra.mxu0 %v1119
        %1151 = vmatprep.subr.bf16.mxu0 0
        %1152 = vmatpush1.bf16.msra.mxu0 %v1120
        %1153 = vmatprep.subr.bf16.mxu0 0
        %1154 = vmatpush1.bf16.msra.mxu0 %v1121
        %1155 = vmatprep.subr.bf16.mxu0 0
        %1156 = vmatpush1.bf16.msra.mxu0 %v1122
        %1157 = vmatprep.subr.bf16.mxu0 0
        %1158 = vmatpush1.bf16.msra.mxu0 0
        %1159 = vmatprep.subr.bf16.mxu0 0
        %1160 = vmatpush1.bf16.msra.mxu0 0
        %1161 = vmatprep.subr.bf16.mxu0 0
        %1162 = vmatpush1.bf16.msra.mxu0 0
        %1163 = vmatprep.subr.bf16.mxu0 0
        %1164 = vmatpush1.bf16.msra.mxu0 0
        %1165 = vmatprep.subr.bf16.mxu0 0
        %1166 = vmatpush1.bf16.msra.mxu0 0
        %1167 = vmatprep.subr.bf16.mxu0 0
        %1168 = vmatpush1.bf16.msra.mxu0 0
        %1169 = vmatprep.subr.bf16.mxu0 0
        %1170 = vmatpush1.bf16.msra.mxu0 0
        %1171 = vmatprep.subr.bf16.mxu0 0
        %1172 = vmatpush1.bf16.msra.mxu0 0
        %1173 = vmatprep.subr.bf16.mxu0 0
        %1174 = vmatpush1.bf16.msra.mxu0 0
        %1175 = vmatprep.subr.bf16.mxu0 0
        %1176 = vmatpush1.bf16.msra.mxu0 0
        %1177 = vmatprep.mubr.bf16.mxu0 0
        %1178 = vmatmul.mubr.bf16.gmra.mrb[0].mxu0 %v1129
        %v1179 = vpop.f32.mrb[0].mxu0
        %v1180 = vadd.f32 %v1032, %v1179
        %v1181 = vpop.f32.mrb[0].mxu0
        %v1182 = vpop.f32.mrb[0].mxu0
        %v1183 = vadd.f32 %v1035, %v1182
        %v1184 = vpop.f32.mrb[0].mxu0
        %1185 = vmatprep.mubr.bf16.mxu0 0
        %1186 = vmatmul.mubr.bf16.gmra.mrb[0].mxu0 %v1131
        %v1187 = vpop.f32.mrb[0].mxu0
        %v1188 = vadd.f32 %v1040, %v1187
        %v1189 = vpop.f32.mrb[0].mxu0
        %v1190 = vpop.f32.mrb[0].mxu0
        %v1191 = vadd.f32 %v1043, %v1190
        %v1192 = vpop.f32.mrb[0].mxu0
        %1193 = vmatprep.mubr.bf16.mxu0 0
        %1194 = vmatmul.mubr.bf16.gmra.mrb[0].mxu0 %v1133
        %v1195 = vpop.f32.mrb[0].mxu0
        %v1196 = vadd.f32 %v1048, %v1195
        %v1197 = vpop.f32.mrb[0].mxu0
        %v1198 = vpop.f32.mrb[0].mxu0
        %v1199 = vadd.f32 %v1051, %v1198
        %v1200 = vpop.f32.mrb[0].mxu0
        %1201 = vmatprep.mubr.bf16.mxu0 0
        %1202 = vmatmul.mubr.bf16.gmra.mrb[0].mxu0 %v1135
        %v1203 = vpop.f32.mrb[0].mxu0
        %v1204 = vadd.f32 %v1056, %v1203
        %v1205 = vpop.f32.mrb[0].mxu0
        %v1206 = vpop.f32.mrb[0].mxu0
        %v1207 = vadd.f32 %v1059, %v1206
        %v1208 = vpop.f32.mrb[0].mxu0
        %1209 = vmatprep.mubr.bf16.mxu0 0
        %1210 = vmatmul.mubr.bf16.gmra.mrb[0].mxu0 %v1137
        %v1211 = vpop.f32.mrb[0].mxu0
        %v1212 = vadd.f32 %v1064, %v1211
        %v1213 = vpop.f32.mrb[0].mxu0
        %v1214 = vpop.f32.mrb[0].mxu0
        %v1215 = vadd.f32 %v1067, %v1214
        %v1216 = vpop.f32.mrb[0].mxu0
        %1217 = vmatprep.mubr.bf16.mxu0 0
        %1218 = vmatmul.mubr.bf16.gmra.mrb[0].mxu0 %v1139
        %v1219 = vpop.f32.mrb[0].mxu0
        %v1220 = vadd.f32 %v1072, %v1219
        %v1221 = vpop.f32.mrb[0].mxu0
        %v1222 = vpop.f32.mrb[0].mxu0
        %v1223 = vadd.f32 %v1075, %v1222
        %v1224 = vpop.f32.mrb[0].mxu0
        %1225 = vmatprep.mubr.bf16.mxu0 0
        %1226 = vmatmul.mubr.bf16.gmra.mrb[0].mxu0 %v1141
        %v1227 = vpop.f32.mrb[0].mxu0
        %v1228 = vadd.f32 %v1080, %v1227
        %v1229 = vpop.f32.mrb[0].mxu0
        %v1230 = vpop.f32.mrb[0].mxu0
        %v1231 = vadd.f32 %v1083, %v1230
        %v1232 = vpop.f32.mrb[0].mxu0
        %1233 = vmatprep.mubr.bf16.mxu0 0
        %1234 = vmatmul.mubr.bf16.gmra.mrb[0].mxu0 %v1143
        %v1235 = vpop.f32.mrb[0].mxu0
        %v1236 = vadd.f32 %v1088, %v1235
        %v1237 = vpop.f32.mrb[0].mxu0
        %v1238 = vpop.f32.mrb[0].mxu0
        %v1239 = vpop.f32.mrb[0].mxu0
        %1240 = vdwg.mxu0
        %s1241 = scalar_lea.vmem [#allocation8], 96
        %v1242 = vld [vmem:[%s1241] sm:$0xf]
        %v1243 = vld [vmem:[%s1241 + $0x4] sm:$0xf]
        %v1244 = vld [vmem:[%s1241 + $0x8] sm:$0xf]
        %v1245 = vld [vmem:[%s1241 + $0xc] sm:$0xf]
        %v1246 = vld [vmem:[%s1241 + $0x10] sm:$0xf]
        %v1247 = vld [vmem:[%s1241 + $0x14] sm:$0xf]
        %v1248 = vld [vmem:[%s1241 + $0x18] sm:$0xf]
        %v1249 = vld [vmem:[%s1241 + $0x1c] sm:$0xf]
        %v1250 = vld [vmem:[%s1241 + $0x20] sm:$0xf]
        %v1251 = vld [vmem:[%s1241 + $0x24] sm:$0xf]
        %v1252 = vld [vmem:[%s1241 + $0x28] sm:$0xf]
        %v1253 = vld [vmem:[%s1241 + $0x2c] sm:$0xf]
        %vm1254 = vcmask 1043456
        %v1255 = vrot.slane %v869, 4
        %v1256 = vrot.slane %v871, 4
        %v1257 = vsel %vm1254, %v1255, %v1256
        %v1258 = vrot.slane %v873, 4
        %v1259 = vsel %vm1254, %v1256, %v1258
        %v1260 = vrot.slane %v875, 4
        %v1261 = vsel %vm1254, %v1258, %v1260
        %v1262 = vrot.slane %v877, 4
        %v1263 = vsel %vm1254, %v1260, %v1262
        %v1264 = vrot.slane %v879, 4
        %v1265 = vsel %vm1254, %v1262, %v1264
        %v1266 = vrot.slane %v881, 4
        %v1267 = vsel %vm1254, %v1264, %v1266
        %v1268 = vrot.slane %v883, 4
        %v1269 = vsel %vm1254, %v1266, %v1268
        %v1282 = vunpack.c.l.b16 %v1242
        %v1283 = vunpack.c.l.b16 %v1243
        %v1284 = vunpack.c.l.b16 %v1244
        %v1285 = vunpack.c.l.b16 %v1245
        %v1286 = vunpack.c.l.b16 %v1246
        %v1287 = vunpack.c.l.b16 %v1247
        %v1288 = vunpack.c.l.b16 %v1248
        %v1289 = vunpack.c.l.b16 %v1249
        %v1290 = vunpack.c.l.b16 %v1250
        %v1291 = vunpack.c.l.b16 %v1251
        %v1292 = vunpack.c.l.b16 %v1252
        %v1293 = vunpack.c.l.b16 %v1253
        %v1294 = vpack.c.b16 %v1283, %v1282
        %v1295 = vpack.c.b16 %v1285, %v1284
        %v1296 = vpack.c.b16 %v1287, %v1286
        %v1297 = vpack.c.b16 %v1289, %v1288
        %v1298 = vpack.c.b16 %v1291, %v1290
        %v1299 = vpack.c.b16 %v1293, %v1292
        %v1307 = vsel %vm972, %v1257, 0
        %v1310 = vsel %vm972, %v1259, 0
        %v1313 = vsel %vm972, %v1261, 0
        %v1316 = vsel %vm972, %v1263, 0
        %v1319 = vsel %vm972, %v1265, 0
        %v1322 = vsel %vm972, %v1267, 0
        %v1325 = vsel %vm972, %v1269, 0
        %v1328 = vsel %vm972, %v1268, 0
        %1330 = vmatprep.subr.bf16.mxu0 0
        %1331 = vmatpush1.bf16.msra.mxu0 %v1294
        %1332 = vmatprep.subr.bf16.mxu0 0
        %1333 = vmatpush1.bf16.msra.mxu0 %v1295
        %1334 = vmatprep.subr.bf16.mxu0 0
        %1335 = vmatpush1.bf16.msra.mxu0 %v1296
        %1336 = vmatprep.subr.bf16.mxu0 0
        %1337 = vmatpush1.bf16.msra.mxu0 %v1297
        %1338 = vmatprep.subr.bf16.mxu0 0
        %1339 = vmatpush1.bf16.msra.mxu0 %v1298
        %1340 = vmatprep.subr.bf16.mxu0 0
        %1341 = vmatpush1.bf16.msra.mxu0 %v1299
        %1342 = vmatprep.subr.bf16.mxu0 0
        %1343 = vmatpush1.bf16.msra.mxu0 0
        %1344 = vmatprep.subr.bf16.mxu0 0
        %1345 = vmatpush1.bf16.msra.mxu0 0
        %1346 = vmatprep.subr.bf16.mxu0 0
        %1347 = vmatpush1.bf16.msra.mxu0 0
        %1348 = vmatprep.subr.bf16.mxu0 0
        %1349 = vmatpush1.bf16.msra.mxu0 0
        %1350 = vmatprep.subr.bf16.mxu0 0
        %1351 = vmatpush1.bf16.msra.mxu0 0
        %1352 = vmatprep.subr.bf16.mxu0 0
        %1353 = vmatpush1.bf16.msra.mxu0 0
        %1354 = vmatprep.subr.bf16.mxu0 0
        %1355 = vmatpush1.bf16.msra.mxu0 0
        %1356 = vmatprep.subr.bf16.mxu0 0
        %1357 = vmatpush1.bf16.msra.mxu0 0
        %1358 = vmatprep.subr.bf16.mxu0 0
        %1359 = vmatpush1.bf16.msra.mxu0 0
        %1360 = vmatprep.subr.bf16.mxu0 0
        %1361 = vmatpush1.bf16.msra.mxu0 0
        %1362 = vmatprep.mubr.bf16.mxu0 0
        %1363 = vmatmul.mubr.bf16.gmra.mrb[0].mxu0 %v1307
        %v1364 = vpop.f32.mrb[0].mxu0
        %v1365 = vadd.f32 0.0, %v1364
        %v1366 = vpop.f32.mrb[0].mxu0
        %v1367 = vpop.f32.mrb[0].mxu0
        %v1368 = vadd.f32 0.0, %v1367
        %v1369 = vpop.f32.mrb[0].mxu0
        %1370 = vmatprep.mubr.bf16.mxu0 0
        %1371 = vmatmul.mubr.bf16.gmra.mrb[0].mxu0 %v1310
        %v1372 = vpop.f32.mrb[0].mxu0
        %v1373 = vadd.f32 0.0, %v1372
        %v1374 = vpop.f32.mrb[0].mxu0
        %v1375 = vpop.f32.mrb[0].mxu0
        %v1376 = vadd.f32 0.0, %v1375
        %v1377 = vpop.f32.mrb[0].mxu0
        %1378 = vmatprep.mubr.bf16.mxu0 0
        %1379 = vmatmul.mubr.bf16.gmra.mrb[0].mxu0 %v1313
        %v1380 = vpop.f32.mrb[0].mxu0
        %v1381 = vadd.f32 0.0, %v1380
        %v1382 = vpop.f32.mrb[0].mxu0
        %v1383 = vpop.f32.mrb[0].mxu0
        %v1384 = vadd.f32 0.0, %v1383
        %v1385 = vpop.f32.mrb[0].mxu0
        %1386 = vmatprep.mubr.bf16.mxu0 0
        %1387 = vmatmul.mubr.bf16.gmra.mrb[0].mxu0 %v1316
        %v1388 = vpop.f32.mrb[0].mxu0
        %v1389 = vadd.f32 0.0, %v1388
        %v1390 = vpop.f32.mrb[0].mxu0
        %v1391 = vpop.f32.mrb[0].mxu0
        %v1392 = vadd.f32 0.0, %v1391
        %v1393 = vpop.f32.mrb[0].mxu0
        %1394 = vmatprep.mubr.bf16.mxu0 0
        %1395 = vmatmul.mubr.bf16.gmra.mrb[0].mxu0 %v1319
        %v1396 = vpop.f32.mrb[0].mxu0
        %v1397 = vadd.f32 0.0, %v1396
        %v1398 = vpop.f32.mrb[0].mxu0
        %v1399 = vpop.f32.mrb[0].mxu0
        %v1400 = vadd.f32 0.0, %v1399
        %v1401 = vpop.f32.mrb[0].mxu0
        %1402 = vmatprep.mubr.bf16.mxu0 0
        %1403 = vmatmul.mubr.bf16.gmra.mrb[0].mxu0 %v1322
        %v1404 = vpop.f32.mrb[0].mxu0
        %v1405 = vadd.f32 0.0, %v1404
        %v1406 = vpop.f32.mrb[0].mxu0
        %v1407 = vpop.f32.mrb[0].mxu0
        %v1408 = vadd.f32 0.0, %v1407
        %v1409 = vpop.f32.mrb[0].mxu0
        %1410 = vmatprep.mubr.bf16.mxu0 0
        %1411 = vmatmul.mubr.bf16.gmra.mrb[0].mxu0 %v1325
        %v1412 = vpop.f32.mrb[0].mxu0
        %v1413 = vadd.f32 0.0, %v1412
        %v1414 = vpop.f32.mrb[0].mxu0
        %v1415 = vpop.f32.mrb[0].mxu0
        %v1416 = vadd.f32 0.0, %v1415
        %v1417 = vpop.f32.mrb[0].mxu0
        %1418 = vmatprep.mubr.bf16.mxu0 0
        %1419 = vmatmul.mubr.bf16.gmra.mrb[0].mxu0 %v1328
        %v1420 = vpop.f32.mrb[0].mxu0
        %v1421 = vadd.f32 0.0, %v1420
        %v1422 = vpop.f32.mrb[0].mxu0
        %v1423 = vpop.f32.mrb[0].mxu0
        %v1424 = vpop.f32.mrb[0].mxu0
        %1425 = vdwg.mxu0
        %v1426 = vadd.f32 %v1180, %v1365
        %v1427 = vadd.f32 %v1183, %v1368
        %v1428 = vadd.f32 %v1188, %v1373
        %v1429 = vadd.f32 %v1191, %v1376
        %v1430 = vadd.f32 %v1196, %v1381
        %v1431 = vadd.f32 %v1199, %v1384
        %v1432 = vadd.f32 %v1204, %v1389
        %v1433 = vadd.f32 %v1207, %v1392
        %v1434 = vadd.f32 %v1212, %v1397
        %v1435 = vadd.f32 %v1215, %v1400
        %v1436 = vadd.f32 %v1220, %v1405
        %v1437 = vadd.f32 %v1223, %v1408
        %v1438 = vadd.f32 %v1228, %v1413
        %v1439 = vadd.f32 %v1231, %v1416
        %v1440 = vadd.f32 %v1236, %v1421
        %v1441 = vld [vmem:[#allocation9] sm:$0x1]
        %v1443 = vlaneseq
        %v1444 = vshrl.u32 %v1443, 7
        %v1445 = vsub.s32 0, %v1444
        %v1446 = vrot.slane %v1441, %v1445
        %v1448 = vadd.f32 %v1426, %v1446
        %v1449 = vadd.f32 %v1427, %v1446
        %v1450 = vadd.f32 %v1428, %v1446
        %v1451 = vadd.f32 %v1429, %v1446
        %v1452 = vadd.f32 %v1430, %v1446
        %v1453 = vadd.f32 %v1431, %v1446
        %v1454 = vadd.f32 %v1432, %v1446
        %v1455 = vadd.f32 %v1433, %v1446
        %v1456 = vadd.f32 %v1434, %v1446
        %v1457 = vadd.f32 %v1435, %v1446
        %v1458 = vadd.f32 %v1436, %v1446
        %v1459 = vadd.f32 %v1437, %v1446
        %v1460 = vadd.f32 %v1438, %v1446
        %v1461 = vadd.f32 %v1439, %v1446
        %v1462 = vadd.f32 %v1440, %v1446
        %v1463 = vmax.f32 %v1448, 0.0
        %v1464 = vmax.f32 %v1449, 0.0
        %v1465 = vmax.f32 %v1450, 0.0
        %v1466 = vmax.f32 %v1451, 0.0
        %v1467 = vmax.f32 %v1452, 0.0
        %v1468 = vmax.f32 %v1453, 0.0
        %v1469 = vmax.f32 %v1454, 0.0
        %v1470 = vmax.f32 %v1455, 0.0
        %v1471 = vmax.f32 %v1456, 0.0
        %v1472 = vmax.f32 %v1457, 0.0
        %v1473 = vmax.f32 %v1458, 0.0
        %v1474 = vmax.f32 %v1459, 0.0
        %v1475 = vmax.f32 %v1460, 0.0
        %v1476 = vmax.f32 %v1461, 0.0
        %v1477 = vmax.f32 %v1462, 0.0
        %v1478 = vpack.c.bf16 %v1464, %v1463
        %v1479 = vpack.c.bf16 %v1466, %v1465
        %v1480 = vpack.c.bf16 %v1468, %v1467
        %v1481 = vpack.c.bf16 %v1470, %v1469
        %v1482 = vpack.c.bf16 %v1472, %v1471
        %v1483 = vpack.c.bf16 %v1474, %v1473
        %v1484 = vpack.c.bf16 %v1476, %v1475
        %v1485 = vpack.c.bf16 %v1477, %v1477
        %1486 = vst.msk [vmem:[#allocation2] sm:$0xff] %vm789, %v1478
        %1487 = vst.msk [vmem:[#allocation2 + $0x8] sm:$0xff] %vm789, %v1479
        %1488 = vst.msk [vmem:[#allocation2 + $0x10] sm:$0xff] %vm789, %v1480
        %1489 = vst.msk [vmem:[#allocation2 + $0x18] sm:$0xff] %vm789, %v1481
        %1490 = vst.msk [vmem:[#allocation2 + $0x20] sm:$0xff] %vm789, %v1482
        %1491 = vst.msk [vmem:[#allocation2 + $0x28] sm:$0xff] %vm789, %v1483
        %1492 = vst.msk [vmem:[#allocation2 + $0x30] sm:$0xff] %vm789, %v1484
        %vm1493 = vcmask 125952
        %1494 = vst.msk [vmem:[#allocation2 + $0x38] sm:$0xf] %vm1493, %v1485
        %vm1495 = vcmask 130052
        %1496 = vst.msk [vmem:[#allocation2 + $0x38] sm:$0xf0] %vm1495, 0
        %v1497 = vld [vmem:[#allocation2] sm:$0xff]
        %v1498 = vld [vmem:[#allocation2 + $0x8] sm:$0xff]
        %v1499 = vld [vmem:[#allocation2 + $0x10] sm:$0xff]
        %v1500 = vld [vmem:[#allocation2 + $0x18] sm:$0xff]
        %v1501 = vld [vmem:[#allocation2 + $0x20] sm:$0xff]
        %v1502 = vld [vmem:[#allocation2 + $0x28] sm:$0xff]
        %v1503 = vld [vmem:[#allocation2 + $0x30] sm:$0xff]
        %v1504 = vld [vmem:[#allocation2 + $0x38] sm:$0xf]
        %v1505 = vld [vmem:[#allocation2 + $0x38] sm:$0x1f]
        %v1506 = vld [vmem:[#allocation2] sm:$0xfe]
        %v1508 = vshrl.u32 %v1497, 16
        %v1510 = vshll.u32 %v1497, 16
        %v1512 = vrot.slane %v1510, 1
        %v1513 = vor.u32 %v1508, %v1512
        %v1515 = vshll.u32 %v1498, 16
        %v1517 = vrot.slane %v1515, 1
        %v1518 = vsel %vm453, %v1513, %v1517
        %v1519 = vshrl.u32 %v1498, 16
        %v1521 = vor.u32 %v1519, %v1517
        %v1523 = vshll.u32 %v1499, 16
        %v1525 = vrot.slane %v1523, 1
        %v1526 = vsel %vm453, %v1521, %v1525
        %v1527 = vshrl.u32 %v1499, 16
        %v1529 = vor.u32 %v1527, %v1525
        %v1531 = vshll.u32 %v1500, 16
        %v1533 = vrot.slane %v1531, 1
        %v1534 = vsel %vm453, %v1529, %v1533
        %v1535 = vshrl.u32 %v1500, 16
        %v1537 = vor.u32 %v1535, %v1533
        %v1539 = vshll.u32 %v1501, 16
        %v1541 = vrot.slane %v1539, 1
        %v1542 = vsel %vm453, %v1537, %v1541
        %v1543 = vshrl.u32 %v1501, 16
        %v1545 = vor.u32 %v1543, %v1541
        %v1547 = vshll.u32 %v1502, 16
        %v1549 = vrot.slane %v1547, 1
        %v1550 = vsel %vm453, %v1545, %v1549
        %v1551 = vshrl.u32 %v1502, 16
        %v1553 = vor.u32 %v1551, %v1549
        %v1555 = vshll.u32 %v1503, 16
        %v1557 = vrot.slane %v1555, 1
        %v1558 = vsel %vm453, %v1553, %v1557
        %v1559 = vshrl.u32 %v1503, 16
        %v1561 = vor.u32 %v1559, %v1557
        %v1563 = vshll.u32 %v1505, 16
        %v1565 = vrot.slane %v1563, 1
        %v1566 = vsel %vm453, %v1561, %v1565
        %v1567 = vshrl.u32 %v1505, 16
        %v1569 = vor.u32 %v1567, %v1565
        %1570 = vrot.lane.b32.xlu0 %v1518, 16
        %v1571 = vpop.permute.xlu0 %1570
        %1572 = vrot.lane.b32.xlu0 %v1526, 16
        %v1573 = vpop.permute.xlu0 %1572
        %1574 = vrot.lane.b32.xlu0 %v1534, 16
        %v1575 = vpop.permute.xlu0 %1574
        %1576 = vrot.lane.b32.xlu0 %v1542, 16
        %v1577 = vpop.permute.xlu0 %1576
        %1578 = vrot.lane.b32.xlu0 %v1550, 16
        %v1579 = vpop.permute.xlu0 %1578
        %1580 = vrot.lane.b32.xlu0 %v1558, 16
        %v1581 = vpop.permute.xlu0 %1580
        %1582 = vrot.lane.b32.xlu0 %v1566, 16
        %v1583 = vpop.permute.xlu0 %1582
        %1584 = vrot.lane.b32.xlu0 %v1569, 16
        %v1585 = vpop.permute.xlu0 %1584
        %v1594 = vrot.slane %v1506, 1
        %v1595 = vrot.slane %v1498, 1
        %v1596 = vsel %vm551, %v1594, %v1595
        %v1597 = vrot.slane %v1499, 1
        %v1598 = vsel %vm551, %v1595, %v1597
        %v1599 = vrot.slane %v1500, 1
        %v1600 = vsel %vm551, %v1597, %v1599
        %v1601 = vrot.slane %v1501, 1
        %v1602 = vsel %vm551, %v1599, %v1601
        %v1603 = vrot.slane %v1502, 1
        %v1604 = vsel %vm551, %v1601, %v1603
        %v1605 = vrot.slane %v1503, 1
        %v1606 = vsel %vm551, %v1603, %v1605
        %v1607 = vrot.slane %v1505, 1
        %v1608 = vsel %vm551, %v1605, %v1607
        %1609 = vrot.lane.b32.xlu0 %v1596, 32
        %v1610 = vpop.permute.xlu0 %1609
        %1611 = vrot.lane.b32.xlu0 %v1598, 32
        %v1612 = vpop.permute.xlu0 %1611
        %1613 = vrot.lane.b32.xlu0 %v1600, 32
        %v1614 = vpop.permute.xlu0 %1613
        %1615 = vrot.lane.b32.xlu0 %v1602, 32
        %v1616 = vpop.permute.xlu0 %1615
        %1617 = vrot.lane.b32.xlu0 %v1604, 32
        %v1618 = vpop.permute.xlu0 %1617
        %1619 = vrot.lane.b32.xlu0 %v1606, 32
        %v1620 = vpop.permute.xlu0 %1619
        %1621 = vrot.lane.b32.xlu0 %v1608, 32
        %v1622 = vpop.permute.xlu0 %1621
        %1623 = vrot.lane.b32.xlu0 %v1607, 32
        %v1624 = vpop.permute.xlu0 %1623
        %v1626 = vsel %vm789, %v1497, %v1571
        %v1628 = vsel %vm789, %v1498, %v1573
        %v1630 = vsel %vm789, %v1499, %v1575
        %v1632 = vsel %vm789, %v1500, %v1577
        %v1634 = vsel %vm789, %v1501, %v1579
        %v1636 = vsel %vm789, %v1502, %v1581
        %v1638 = vsel %vm789, %v1503, %v1583
        %v1641 = vsel %vm789, %v1504, %v1585
        %v1643 = vsel %vm808, %v1626, %v1610
        %v1645 = vsel %vm808, %v1628, %v1612
        %v1647 = vsel %vm808, %v1630, %v1614
        %v1649 = vsel %vm808, %v1632, %v1616
        %v1651 = vsel %vm808, %v1634, %v1618
        %v1653 = vsel %vm808, %v1636, %v1620
        %v1655 = vsel %vm808, %v1638, %v1622
        %v1657 = vsel %vm808, %v1641, %v1624
        %v1658 = vld [vmem:[#allocation11] sm:$0xf]
        %v1659 = vld [vmem:[#allocation11 + $0x4] sm:$0xf]
        %v1660 = vld [vmem:[#allocation11 + $0x8] sm:$0xf]
        %v1661 = vld [vmem:[#allocation11 + $0xc] sm:$0xf]
        %v1662 = vld [vmem:[#allocation11 + $0x10] sm:$0xf]
        %v1663 = vld [vmem:[#allocation11 + $0x14] sm:$0xf]
        %s1664 = scalar_lea.vmem [#allocation11], 24
        %v1665 = vld [vmem:[%s1664] sm:$0xf]
        %v1666 = vld [vmem:[%s1664 + $0x4] sm:$0xf]
        %v1667 = vld [vmem:[%s1664 + $0x8] sm:$0xf]
        %v1668 = vld [vmem:[%s1664 + $0xc] sm:$0xf]
        %v1669 = vld [vmem:[%s1664 + $0x10] sm:$0xf]
        %v1670 = vld [vmem:[%s1664 + $0x14] sm:$0xf]
        %v1678 = vrot.slane %v1643, 6
        %v1679 = vrot.slane %v1645, 6
        %v1680 = vsel %vm918, %v1678, %v1679
        %v1681 = vrot.slane %v1647, 6
        %v1682 = vsel %vm918, %v1679, %v1681
        %v1683 = vrot.slane %v1649, 6
        %v1684 = vsel %vm918, %v1681, %v1683
        %v1685 = vrot.slane %v1651, 6
        %v1686 = vsel %vm918, %v1683, %v1685
        %v1687 = vrot.slane %v1653, 6
        %v1688 = vsel %vm918, %v1685, %v1687
        %v1689 = vrot.slane %v1655, 6
        %v1690 = vsel %vm918, %v1687, %v1689
        %v1697 = vunpack.c.l.b16 %v1665
        %v1698 = vunpack.c.l.b16 %v1666
        %v1699 = vunpack.c.l.b16 %v1667
        %v1700 = vunpack.c.l.b16 %v1668
        %v1701 = vunpack.c.l.b16 %v1669
        %v1702 = vunpack.c.l.b16 %v1670
        %v1703 = vpack.c.b16 %v1698, %v1697
        %v1704 = vpack.c.b16 %v1700, %v1699
        %v1705 = vpack.c.b16 %v1702, %v1701
        %v1710 = vsel %vm827, %v1680, 0
        %v1713 = vsel %vm827, %v1682, 0
        %v1716 = vsel %vm827, %v1684, 0
        %v1719 = vsel %vm827, %v1686, 0
        %v1722 = vsel %vm827, %v1688, 0
        %v1725 = vsel %vm827, %v1690, 0
        %1727 = vmatprep.subr.bf16.mxu0 0
        %1728 = vmatpush1.bf16.msra.mxu0 %v1703
        %1729 = vmatprep.subr.bf16.mxu0 0
        %1730 = vmatpush1.bf16.msra.mxu0 %v1704
        %1731 = vmatprep.subr.bf16.mxu0 0
        %1732 = vmatpush1.bf16.msra.mxu0 %v1705
        %1733 = vmatprep.subr.bf16.mxu0 0
        %1734 = vmatpush1.bf16.msra.mxu0 0
        %1735 = vmatprep.subr.bf16.mxu0 0
        %1736 = vmatpush1.bf16.msra.mxu0 0
        %1737 = vmatprep.subr.bf16.mxu0 0
        %1738 = vmatpush1.bf16.msra.mxu0 0
        %1739 = vmatprep.subr.bf16.mxu0 0
        %1740 = vmatpush1.bf16.msra.mxu0 0
        %1741 = vmatprep.subr.bf16.mxu0 0
        %1742 = vmatpush1.bf16.msra.mxu0 0
        %1743 = vmatprep.subr.bf16.mxu0 0
        %1744 = vmatpush1.bf16.msra.mxu0 0
        %1745 = vmatprep.subr.bf16.mxu0 0
        %1746 = vmatpush1.bf16.msra.mxu0 0
        %1747 = vmatprep.subr.bf16.mxu0 0
        %1748 = vmatpush1.bf16.msra.mxu0 0
        %1749 = vmatprep.subr.bf16.mxu0 0
        %1750 = vmatpush1.bf16.msra.mxu0 0
        %1751 = vmatprep.subr.bf16.mxu0 0
        %1752 = vmatpush1.bf16.msra.mxu0 0
        %1753 = vmatprep.subr.bf16.mxu0 0
        %1754 = vmatpush1.bf16.msra.mxu0 0
        %1755 = vmatprep.subr.bf16.mxu0 0
        %1756 = vmatpush1.bf16.msra.mxu0 0
        %1757 = vmatprep.subr.bf16.mxu0 0
        %1758 = vmatpush1.bf16.msra.mxu0 0
        %1759 = vmatprep.mubr.bf16.mxu0 0
        %1760 = vmatmul.mubr.bf16.gmra.mrb[0].mxu0 %v1710
        %v1761 = vpop.f32.mrb[0].mxu0
        %v1762 = vadd.f32 0.0, %v1761
        %v1763 = vpop.f32.mrb[0].mxu0
        %v1764 = vpop.f32.mrb[0].mxu0
        %v1765 = vadd.f32 0.0, %v1764
        %v1766 = vpop.f32.mrb[0].mxu0
        %1767 = vmatprep.mubr.bf16.mxu0 0
        %1768 = vmatmul.mubr.bf16.gmra.mrb[0].mxu0 %v1713
        %v1769 = vpop.f32.mrb[0].mxu0
        %v1770 = vadd.f32 0.0, %v1769
        %v1771 = vpop.f32.mrb[0].mxu0
        %v1772 = vpop.f32.mrb[0].mxu0
        %v1773 = vadd.f32 0.0, %v1772
        %v1774 = vpop.f32.mrb[0].mxu0
        %1775 = vmatprep.mubr.bf16.mxu0 0
        %1776 = vmatmul.mubr.bf16.gmra.mrb[0].mxu0 %v1716
        %v1777 = vpop.f32.mrb[0].mxu0
        %v1778 = vadd.f32 0.0, %v1777
        %v1779 = vpop.f32.mrb[0].mxu0
        %v1780 = vpop.f32.mrb[0].mxu0
        %v1781 = vadd.f32 0.0, %v1780
        %v1782 = vpop.f32.mrb[0].mxu0
        %1783 = vmatprep.mubr.bf16.mxu0 0
        %1784 = vmatmul.mubr.bf16.gmra.mrb[0].mxu0 %v1719
        %v1785 = vpop.f32.mrb[0].mxu0
        %v1786 = vadd.f32 0.0, %v1785
        %v1787 = vpop.f32.mrb[0].mxu0
        %v1788 = vpop.f32.mrb[0].mxu0
        %v1789 = vadd.f32 0.0, %v1788
        %v1790 = vpop.f32.mrb[0].mxu0
        %1791 = vmatprep.mubr.bf16.mxu0 0
        %1792 = vmatmul.mubr.bf16.gmra.mrb[0].mxu0 %v1722
        %v1793 = vpop.f32.mrb[0].mxu0
        %v1794 = vadd.f32 0.0, %v1793
        %v1795 = vpop.f32.mrb[0].mxu0
        %v1796 = vpop.f32.mrb[0].mxu0
        %v1797 = vadd.f32 0.0, %v1796
        %v1798 = vpop.f32.mrb[0].mxu0
        %1799 = vmatprep.mubr.bf16.mxu0 0
        %1800 = vmatmul.mubr.bf16.gmra.mrb[0].mxu0 %v1725
        %v1801 = vpop.f32.mrb[0].mxu0
        %v1802 = vadd.f32 0.0, %v1801
        %v1803 = vpop.f32.mrb[0].mxu0
        %v1804 = vpop.f32.mrb[0].mxu0
        %v1805 = vadd.f32 0.0, %v1804
        %v1806 = vpop.f32.mrb[0].mxu0
        %1807 = vdwg.mxu0
        %v1814 = vunpack.c.l.b16 %v1658
        %v1815 = vunpack.c.l.b16 %v1659
        %v1816 = vunpack.c.l.b16 %v1660
        %v1817 = vunpack.c.l.b16 %v1661
        %v1818 = vunpack.c.l.b16 %v1662
        %v1819 = vunpack.c.l.b16 %v1663
        %v1820 = vpack.c.b16 %v1815, %v1814
        %v1821 = vpack.c.b16 %v1817, %v1816
        %v1822 = vpack.c.b16 %v1819, %v1818
        %v1826 = vsel %vm827, %v1643, 0
        %v1828 = vsel %vm827, %v1645, 0
        %v1830 = vsel %vm827, %v1647, 0
        %v1832 = vsel %vm827, %v1649, 0
        %v1834 = vsel %vm827, %v1651, 0
        %v1836 = vsel %vm827, %v1653, 0
        %1838 = vmatprep.subr.bf16.mxu0 0
        %1839 = vmatpush1.bf16.msra.mxu0 %v1820
        %1840 = vmatprep.subr.bf16.mxu0 0
        %1841 = vmatpush1.bf16.msra.mxu0 %v1821
        %1842 = vmatprep.subr.bf16.mxu0 0
        %1843 = vmatpush1.bf16.msra.mxu0 %v1822
        %1844 = vmatprep.subr.bf16.mxu0 0
        %1845 = vmatpush1.bf16.msra.mxu0 0
        %1846 = vmatprep.subr.bf16.mxu0 0
        %1847 = vmatpush1.bf16.msra.mxu0 0
        %1848 = vmatprep.subr.bf16.mxu0 0
        %1849 = vmatpush1.bf16.msra.mxu0 0
        %1850 = vmatprep.subr.bf16.mxu0 0
        %1851 = vmatpush1.bf16.msra.mxu0 0
        %1852 = vmatprep.subr.bf16.mxu0 0
        %1853 = vmatpush1.bf16.msra.mxu0 0
        %1854 = vmatprep.subr.bf16.mxu0 0
        %1855 = vmatpush1.bf16.msra.mxu0 0
        %1856 = vmatprep.subr.bf16.mxu0 0
        %1857 = vmatpush1.bf16.msra.mxu0 0
        %1858 = vmatprep.subr.bf16.mxu0 0
        %1859 = vmatpush1.bf16.msra.mxu0 0
        %1860 = vmatprep.subr.bf16.mxu0 0
        %1861 = vmatpush1.bf16.msra.mxu0 0
        %1862 = vmatprep.subr.bf16.mxu0 0
        %1863 = vmatpush1.bf16.msra.mxu0 0
        %1864 = vmatprep.subr.bf16.mxu0 0
        %1865 = vmatpush1.bf16.msra.mxu0 0
        %1866 = vmatprep.subr.bf16.mxu0 0
        %1867 = vmatpush1.bf16.msra.mxu0 0
        %1868 = vmatprep.subr.bf16.mxu0 0
        %1869 = vmatpush1.bf16.msra.mxu0 0
        %1870 = vmatprep.mubr.bf16.mxu0 0
        %1871 = vmatmul.mubr.bf16.gmra.mrb[0].mxu0 %v1826
        %v1872 = vpop.f32.mrb[0].mxu0
        %v1873 = vadd.f32 %v1762, %v1872
        %v1874 = vpop.f32.mrb[0].mxu0
        %v1875 = vpop.f32.mrb[0].mxu0
        %v1876 = vadd.f32 %v1765, %v1875
        %v1877 = vpop.f32.mrb[0].mxu0
        %1878 = vmatprep.mubr.bf16.mxu0 0
        %1879 = vmatmul.mubr.bf16.gmra.mrb[0].mxu0 %v1828
        %v1880 = vpop.f32.mrb[0].mxu0
        %v1881 = vadd.f32 %v1770, %v1880
        %v1882 = vpop.f32.mrb[0].mxu0
        %v1883 = vpop.f32.mrb[0].mxu0
        %v1884 = vadd.f32 %v1773, %v1883
        %v1885 = vpop.f32.mrb[0].mxu0
        %1886 = vmatprep.mubr.bf16.mxu0 0
        %1887 = vmatmul.mubr.bf16.gmra.mrb[0].mxu0 %v1830
        %v1888 = vpop.f32.mrb[0].mxu0
        %v1889 = vadd.f32 %v1778, %v1888
        %v1890 = vpop.f32.mrb[0].mxu0
        %v1891 = vpop.f32.mrb[0].mxu0
        %v1892 = vadd.f32 %v1781, %v1891
        %v1893 = vpop.f32.mrb[0].mxu0
        %1894 = vmatprep.mubr.bf16.mxu0 0
        %1895 = vmatmul.mubr.bf16.gmra.mrb[0].mxu0 %v1832
        %v1896 = vpop.f32.mrb[0].mxu0
        %v1897 = vadd.f32 %v1786, %v1896
        %v1898 = vpop.f32.mrb[0].mxu0
        %v1899 = vpop.f32.mrb[0].mxu0
        %v1900 = vadd.f32 %v1789, %v1899
        %v1901 = vpop.f32.mrb[0].mxu0
        %1902 = vmatprep.mubr.bf16.mxu0 0
        %1903 = vmatmul.mubr.bf16.gmra.mrb[0].mxu0 %v1834
        %v1904 = vpop.f32.mrb[0].mxu0
        %v1905 = vadd.f32 %v1794, %v1904
        %v1906 = vpop.f32.mrb[0].mxu0
        %v1907 = vpop.f32.mrb[0].mxu0
        %v1908 = vadd.f32 %v1797, %v1907
        %v1909 = vpop.f32.mrb[0].mxu0
        %1910 = vmatprep.mubr.bf16.mxu0 0
        %1911 = vmatmul.mubr.bf16.gmra.mrb[0].mxu0 %v1836
        %v1912 = vpop.f32.mrb[0].mxu0
        %v1913 = vadd.f32 %v1802, %v1912
        %v1914 = vpop.f32.mrb[0].mxu0
        %v1915 = vpop.f32.mrb[0].mxu0
        %v1916 = vadd.f32 %v1805, %v1915
        %v1917 = vpop.f32.mrb[0].mxu0
        %1918 = vdwg.mxu0
        %s1919 = scalar_lea.vmem [#allocation11], 48
        %v1920 = vld [vmem:[%s1919] sm:$0xf]
        %v1921 = vld [vmem:[%s1919 + $0x4] sm:$0xf]
        %v1922 = vld [vmem:[%s1919 + $0x8] sm:$0xf]
        %v1923 = vld [vmem:[%s1919 + $0xc] sm:$0xf]
        %v1924 = vld [vmem:[%s1919 + $0x10] sm:$0xf]
        %v1925 = vld [vmem:[%s1919 + $0x14] sm:$0xf]
        %v1927 = vrot.slane %v1645, 4
        %v1928 = vrot.slane %v1647, 4
        %v1929 = vsel %vm1254, %v1927, %v1928
        %v1930 = vrot.slane %v1649, 4
        %v1931 = vsel %vm1254, %v1928, %v1930
        %v1932 = vrot.slane %v1651, 4
        %v1933 = vsel %vm1254, %v1930, %v1932
        %v1934 = vrot.slane %v1653, 4
        %v1935 = vsel %vm1254, %v1932, %v1934
        %v1936 = vrot.slane %v1655, 4
        %v1937 = vsel %vm1254, %v1934, %v1936
        %v1938 = vrot.slane %v1657, 4
        %v1939 = vsel %vm1254, %v1936, %v1938
        %v1946 = vunpack.c.l.b16 %v1920
        %v1947 = vunpack.c.l.b16 %v1921
        %v1948 = vunpack.c.l.b16 %v1922
        %v1949 = vunpack.c.l.b16 %v1923
        %v1950 = vunpack.c.l.b16 %v1924
        %v1951 = vunpack.c.l.b16 %v1925
        %v1952 = vpack.c.b16 %v1947, %v1946
        %v1953 = vpack.c.b16 %v1949, %v1948
        %v1954 = vpack.c.b16 %v1951, %v1950
        %v1959 = vsel %vm827, %v1929, 0
        %v1962 = vsel %vm827, %v1931, 0
        %v1965 = vsel %vm827, %v1933, 0
        %v1968 = vsel %vm827, %v1935, 0
        %v1971 = vsel %vm827, %v1937, 0
        %v1974 = vsel %vm827, %v1939, 0
        %1976 = vmatprep.subr.bf16.mxu0 0
        %1977 = vmatpush1.bf16.msra.mxu0 %v1952
        %1978 = vmatprep.subr.bf16.mxu0 0
        %1979 = vmatpush1.bf16.msra.mxu0 %v1953
        %1980 = vmatprep.subr.bf16.mxu0 0
        %1981 = vmatpush1.bf16.msra.mxu0 %v1954
        %1982 = vmatprep.subr.bf16.mxu0 0
        %1983 = vmatpush1.bf16.msra.mxu0 0
        %1984 = vmatprep.subr.bf16.mxu0 0
        %1985 = vmatpush1.bf16.msra.mxu0 0
        %1986 = vmatprep.subr.bf16.mxu0 0
        %1987 = vmatpush1.bf16.msra.mxu0 0
        %1988 = vmatprep.subr.bf16.mxu0 0
        %1989 = vmatpush1.bf16.msra.mxu0 0
        %1990 = vmatprep.subr.bf16.mxu0 0
        %1991 = vmatpush1.bf16.msra.mxu0 0
        %1992 = vmatprep.subr.bf16.mxu0 0
        %1993 = vmatpush1.bf16.msra.mxu0 0
        %1994 = vmatprep.subr.bf16.mxu0 0
        %1995 = vmatpush1.bf16.msra.mxu0 0
        %1996 = vmatprep.subr.bf16.mxu0 0
        %1997 = vmatpush1.bf16.msra.mxu0 0
        %1998 = vmatprep.subr.bf16.mxu0 0
        %1999 = vmatpush1.bf16.msra.mxu0 0
        %2000 = vmatprep.subr.bf16.mxu0 0
        %2001 = vmatpush1.bf16.msra.mxu0 0
        %2002 = vmatprep.subr.bf16.mxu0 0
        %2003 = vmatpush1.bf16.msra.mxu0 0
        %2004 = vmatprep.subr.bf16.mxu0 0
        %2005 = vmatpush1.bf16.msra.mxu0 0
        %2006 = vmatprep.subr.bf16.mxu0 0
        %2007 = vmatpush1.bf16.msra.mxu0 0
        %2008 = vmatprep.mubr.bf16.mxu0 0
        %2009 = vmatmul.mubr.bf16.gmra.mrb[0].mxu0 %v1959
        %v2010 = vpop.f32.mrb[0].mxu0
        %v2011 = vadd.f32 0.0, %v2010
        %v2012 = vpop.f32.mrb[0].mxu0
        %v2013 = vpop.f32.mrb[0].mxu0
        %v2014 = vadd.f32 0.0, %v2013
        %v2015 = vpop.f32.mrb[0].mxu0
        %2016 = vmatprep.mubr.bf16.mxu0 0
        %2017 = vmatmul.mubr.bf16.gmra.mrb[0].mxu0 %v1962
        %v2018 = vpop.f32.mrb[0].mxu0
        %v2019 = vadd.f32 0.0, %v2018
        %v2020 = vpop.f32.mrb[0].mxu0
        %v2021 = vpop.f32.mrb[0].mxu0
        %v2022 = vadd.f32 0.0, %v2021
        %v2023 = vpop.f32.mrb[0].mxu0
        %2024 = vmatprep.mubr.bf16.mxu0 0
        %2025 = vmatmul.mubr.bf16.gmra.mrb[0].mxu0 %v1965
        %v2026 = vpop.f32.mrb[0].mxu0
        %v2027 = vadd.f32 0.0, %v2026
        %v2028 = vpop.f32.mrb[0].mxu0
        %v2029 = vpop.f32.mrb[0].mxu0
        %v2030 = vadd.f32 0.0, %v2029
        %v2031 = vpop.f32.mrb[0].mxu0
        %2032 = vmatprep.mubr.bf16.mxu0 0
        %2033 = vmatmul.mubr.bf16.gmra.mrb[0].mxu0 %v1968
        %v2034 = vpop.f32.mrb[0].mxu0
        %v2035 = vadd.f32 0.0, %v2034
        %v2036 = vpop.f32.mrb[0].mxu0
        %v2037 = vpop.f32.mrb[0].mxu0
        %v2038 = vadd.f32 0.0, %v2037
        %v2039 = vpop.f32.mrb[0].mxu0
        %2040 = vmatprep.mubr.bf16.mxu0 0
        %2041 = vmatmul.mubr.bf16.gmra.mrb[0].mxu0 %v1971
        %v2042 = vpop.f32.mrb[0].mxu0
        %v2043 = vadd.f32 0.0, %v2042
        %v2044 = vpop.f32.mrb[0].mxu0
        %v2045 = vpop.f32.mrb[0].mxu0
        %v2046 = vadd.f32 0.0, %v2045
        %v2047 = vpop.f32.mrb[0].mxu0
        %2048 = vmatprep.mubr.bf16.mxu0 0
        %2049 = vmatmul.mubr.bf16.gmra.mrb[0].mxu0 %v1974
        %v2050 = vpop.f32.mrb[0].mxu0
        %v2051 = vadd.f32 0.0, %v2050
        %v2052 = vpop.f32.mrb[0].mxu0
        %v2053 = vpop.f32.mrb[0].mxu0
        %v2054 = vadd.f32 0.0, %v2053
        %v2055 = vpop.f32.mrb[0].mxu0
        %2056 = vdwg.mxu0
        %v2057 = vadd.f32 %v1873, %v2011
        %v2058 = vadd.f32 %v1876, %v2014
        %v2059 = vadd.f32 %v1881, %v2019
        %v2060 = vadd.f32 %v1884, %v2022
        %v2061 = vadd.f32 %v1889, %v2027
        %v2062 = vadd.f32 %v1892, %v2030
        %v2063 = vadd.f32 %v1897, %v2035
        %v2064 = vadd.f32 %v1900, %v2038
        %v2065 = vadd.f32 %v1905, %v2043
        %v2066 = vadd.f32 %v1908, %v2046
        %v2067 = vadd.f32 %v1913, %v2051
        %v2068 = vadd.f32 %v1916, %v2054
        %v2069 = vld [vmem:[#allocation12] sm:$0x1]
        %v2071 = vlaneseq
        %v2072 = vshrl.u32 %v2071, 7
        %v2073 = vsub.s32 0, %v2072
        %v2074 = vrot.slane %v2069, %v2073
        %v2076 = vadd.f32 %v2057, %v2074
        %v2077 = vadd.f32 %v2058, %v2074
        %v2078 = vadd.f32 %v2059, %v2074
        %v2079 = vadd.f32 %v2060, %v2074
        %v2080 = vadd.f32 %v2061, %v2074
        %v2081 = vadd.f32 %v2062, %v2074
        %v2082 = vadd.f32 %v2063, %v2074
        %v2083 = vadd.f32 %v2064, %v2074
        %v2084 = vadd.f32 %v2065, %v2074
        %v2085 = vadd.f32 %v2066, %v2074
        %v2086 = vadd.f32 %v2067, %v2074
        %v2087 = vadd.f32 %v2068, %v2074
        %v2088 = vpack.c.bf16 %v2077, %v2076
        %v2089 = vpack.c.bf16 %v2079, %v2078
        %v2090 = vpack.c.bf16 %v2081, %v2080
        %v2091 = vpack.c.bf16 %v2083, %v2082
        %v2092 = vpack.c.bf16 %v2085, %v2084
        %v2093 = vpack.c.bf16 %v2087, %v2086
        %v2100 = vunpack.c.l.b16 %v2088
        %v2101 = vunpack.c.h.b16 %v2088
        %v2102 = vunpack.c.l.b16 %v2089
        %v2103 = vunpack.c.h.b16 %v2089
        %v2104 = vunpack.c.l.b16 %v2090
        %v2105 = vunpack.c.h.b16 %v2090
        %v2106 = vunpack.c.l.b16 %v2091
        %v2107 = vunpack.c.h.b16 %v2091
        %v2108 = vunpack.c.l.b16 %v2092
        %v2109 = vunpack.c.h.b16 %v2092
        %v2110 = vunpack.c.l.b16 %v2093
        %v2111 = vunpack.c.h.b16 %v2093
        %v2112 = vpack.c.b16 %v2100, %v2100
        %v2113 = vpack.c.b16 %v2101, %v2101
        %v2114 = vpack.c.b16 %v2102, %v2102
        %v2115 = vpack.c.b16 %v2103, %v2103
        %v2116 = vpack.c.b16 %v2104, %v2104
        %v2117 = vpack.c.b16 %v2105, %v2105
        %v2118 = vpack.c.b16 %v2106, %v2106
        %v2119 = vpack.c.b16 %v2107, %v2107
        %v2120 = vpack.c.b16 %v2108, %v2108
        %v2121 = vpack.c.b16 %v2109, %v2109
        %v2122 = vpack.c.b16 %v2110, %v2110
        %v2123 = vpack.c.b16 %v2111, %v2111
        %2136 = vst.msk [vmem:[%s363] sm:$0xf] %vm1493, %v2112
        %2137 = vst.msk [vmem:[%s363 + $0x4] sm:$0xf] %vm1493, %v2113
        %2138 = vst.msk [vmem:[%s363 + $0x8] sm:$0xf] %vm1493, %v2114
        %2139 = vst.msk [vmem:[%s363 + $0xc] sm:$0xf] %vm1493, %v2115
        %2140 = vst.msk [vmem:[%s363 + $0x10] sm:$0xf] %vm1493, %v2116
        %2141 = vst.msk [vmem:[%s363 + $0x14] sm:$0xf] %vm1493, %v2117
        %2142 = vst.msk [vmem:[%s363 + $0x18] sm:$0xf] %vm1493, %v2118
        %2143 = vst.msk [vmem:[%s363 + $0x1c] sm:$0xf] %vm1493, %v2119
        %2144 = vst.msk [vmem:[%s363 + $0x20] sm:$0xf] %vm1493, %v2120
        %2145 = vst.msk [vmem:[%s363 + $0x24] sm:$0xf] %vm1493, %v2121
        %2146 = vst.msk [vmem:[%s363 + $0x28] sm:$0xf] %vm1493, %v2122
        %2147 = vst.msk [vmem:[%s363 + $0x2c] sm:$0xf] %vm1493, %v2123
        %s2148 = sand.u32 %s172, 1
        %s2149 = scalar_lea.sflag [#allocation5], %s2148
        %s2150 = sand.u32 %s172, 1
        %s2151 = smul.addr %s2150, 48
        %s2152 = scalar_lea.vmem [#allocation14], %s2151
        // Predicated region
        $region69: #{decoder_forward.5} parent=43 // pred_check
          %p2153 = pneg %p182
        $region70: #{decoder_forward.5} parent=43 // pred_check_branch
          %2155 = sbr.rel (%p2153) target = $region72
        $region71: #{decoder_forward.5} parent=43 // pred_region
          %s2157 = ssub.s32 768, 768
          %2158 = vsyncadd %s2149, %s2157
          %s2159 = smul.addr %s28, 12
          %s2160 = smul.addr %s2159, 64
          %s2161 = scalar_lea.hbm %s6, %s2160
          %s2162 = sshll.u32 %s2152, 4
          %s2163 = int_to_ptr.vmem [resolvable:$true] %s2162
          %2168 = dma.vmem_to_hbm [thread:$0]  %s2163, 768, %s2161, %s2149, 64, 64, 4
        $region72: #{decoder_forward.5} parent=43 // pred_fallthru
          _
      $region44: #{decoder_forward.5} parent=5 // pred_fallthru
        _
      %p2169 = scmp.le.s32.totalorder 2, %s23
      // Predicated region
      $region73: #{decoder_forward.5} parent=5 // pred_check
        %p2170 = pneg %p2169
      $region74: #{decoder_forward.5} parent=5 // pred_check_branch
        %2172 = sbr.rel (%p2170) target = $region76
      $region75: #{decoder_forward.5} parent=5 // pred_region
        %s2173 = ssub.s32 %s23, 2
        // Predicated region
        $region77: #{decoder_forward.5} parent=75 // pred_check
          %p2174 = pneg %p188
        $region78: #{decoder_forward.5} parent=75 // pred_check_branch
          %2176 = sbr.rel (%p2174) target = $region80
        $region79: #{decoder_forward.5} parent=75 // pred_region
          %s2177 = sand.u32 %s173, 1
          %s2178 = scalar_lea.sflag [#allocation5], %s2177
          %s2179 = sand.u32 %s173, 1
          %s2180 = smul.addr %s2179, 48
          %s2181 = scalar_lea.vmem [#allocation14], %s2180
          %2182 = dma.done %s2178, 768
        $region80: #{decoder_forward.5} parent=75 // pred_fallthru
          _
      $region76: #{decoder_forward.5} parent=5 // pred_fallthru
        _
    $region6: #{decoder_forward.5} parent=1 // loop_footer
      %s27 = sadd.s32 1, %s23
    $region7: #{decoder_forward.5} parent=1 // loop_footer_branch
      %22 = sbr.rel target = $region3
    $region8: #{decoder_forward.5} parent=1 // loop_exit
      _
    %2183 = vsyncpa [#allocation4], 1
    %s2184 = scalar_lea.sflag [#allocation4], 1
    %2185 = vsyncpa %s2184, 1
    %2186 = vsyncpa [#allocation7], 1
    %s2187 = scalar_lea.sflag [#allocation7], 1
    %2188 = vsyncpa %s2187, 1
    %2189 = vsyncpa [#allocation10], 1
    %2190 = vsyncpa [#allocation13], 1
    %2191 = vsyncpa [#allocation5], 1
    %s2192 = scalar_lea.sflag [#allocation5], 1
    %2193 = vsyncpa %s2192, 1

// kernel: decoder_forward.7
$region0: #{decoder_forward.7}
  #allocation0 [shape = 'u32[]', space=smem, size = 0x4, offset = 0x4, fixed_abs, tag = 'smem constant byte address 0x4 - core index']
  #allocation1 [shape = 'u32[144,128]{1,0:T(1,128)}', space=vmem, size = 0x12000, scoped, tag = 'internal scratch']
  #allocation2 [shape = 'bf16[232,8]{1,0:T(8,128)(2,1)}', space=vmem, size = 0xe800, scoped, tag = 'scratch operand']
  %s0 = inlined_call_operand.hbm [shape: bf16[2,264,8], index: 0, kind: input, shape index: {}]
  %s1 = inlined_call_operand.hbm [shape: bf16[2,264,8], index: 1, kind: input, shape index: {}]
  %s2 = inlined_call_operand.hbm [shape: bf16[3,48,8], index: 2, kind: input, shape index: {}]
  %s3 = inlined_call_operand.hbm [shape: f32[1,8], index: 3, kind: input, shape index: {}]
  %s4 = inlined_call_operand.hbm [shape: bf16[3,24,8], index: 4, kind: input, shape index: {}]
  %s5 = inlined_call_operand.hbm [shape: f32[1,8], index: 5, kind: input, shape index: {}]
  %s6 = inlined_call_operand.hbm [shape: f32[2,192,8], index: 6, kind: output, shape index: {}]
  %s7 = sld [smem:[#allocation0]]
  $region81: #{decoder_forward.7} parent=0
    _
  %s9 = ssub.s32 1, %s7
  %s10 = scalar_select 0, %s9, %s7
  $region1: #{decoder_forward.7} parent=0
    #allocation3 [shape = 'u8[135168]{0}', space=vmem, size = 0x21000, scoped, tag = 'input window, operand 0']
    #allocation4 [shape = 's32[2]{0}', space=sflag, size = 0x8, scoped, tag = 'scoped memory for decoder_forward.7']
    #allocation5 [shape = 's32[2]{0}', space=sflag, size = 0x8, scoped, tag = 'scoped memory for decoder_forward.7']
    #allocation6 [shape = 'u8[135168]{0}', space=vmem, size = 0x21000, scoped, tag = 'input window, operand 1']
    #allocation7 [shape = 's32[2]{0}', space=sflag, size = 0x8, scoped, tag = 'scoped memory for decoder_forward.7']
    #allocation8 [shape = 'u8[36864]{0}', space=vmem, size = 0x9000, scoped, tag = 'input window, operand 2, single buffered']
    #allocation9 [shape = 'u8[512]{0}', space=vmem, size = 0x400, scoped, tag = 'input window, operand 3, single buffered']
    #allocation10 [shape = 's32[1]{0}', space=sflag, size = 0x4, scoped, tag = 'scoped memory for decoder_forward.7']
    #allocation11 [shape = 'u8[18432]{0}', space=vmem, size = 0x4800, scoped, tag = 'input window, operand 4, single buffered']
    #allocation12 [shape = 'u8[512]{0}', space=vmem, size = 0x400, scoped, tag = 'input window, operand 5, single buffered']
    #allocation13 [shape = 's32[1]{0}', space=sflag, size = 0x4, scoped, tag = 'scoped memory for decoder_forward.7']
    #allocation14 [shape = 'u8[196608]{0}', space=vmem, size = 0x30000, scoped, tag = 'output window, operand 0']
    %11 = vsyncpa [#allocation4], 0
    %s12 = scalar_lea.sflag [#allocation4], 1
    %13 = vsyncpa %s12, 0
    %14 = vsyncpa [#allocation7], 0
    %s15 = scalar_lea.sflag [#allocation7], 1
    %16 = vsyncpa %s15, 0
    %17 = vsyncpa [#allocation10], 0
    %18 = vsyncpa [#allocation13], 0
    %19 = vsyncpa [#allocation5], 0
    %s20 = scalar_lea.sflag [#allocation5], 1
    %21 = vsyncpa %s20, 0
    loop: start=0, step=1, limit=4
    $region2: #{decoder_forward.7} parent=1 // loop_pre_header
      _
    $region3: #{decoder_forward.7} parent=1 // loop_header
      %s23 = sphi 0, %s27
      %p24 = scmp.ge.s32.totalorder %s23, 4
      %s33 = sphi 0, %s35
      %s36 = sphi 0, %s33
      %s37 = sphi 0, %s36
      %s53 = sphi 0, %s37
      %s59 = sphi 0, %s61
      %s62 = sphi 0, %s59
      %s63 = sphi 0, %s62
      %s79 = sphi 0, %s63
      %s83 = sphi 0, %s83
      %s85 = sphi 0, %s83
      %s86 = sphi 0, %s85
      %s100 = sphi 0, %s86
      %s104 = sphi 0, %s104
      %s106 = sphi 0, %s104
      %s107 = sphi 0, %s106
      %s121 = sphi 0, %s107
      %s125 = sphi 0, %s125
      %s127 = sphi 0, %s125
      %s128 = sphi 0, %s127
      %s142 = sphi 0, %s128
      %s146 = sphi 0, %s146
      %s148 = sphi 0, %s146
      %s149 = sphi 0, %s148
      %s163 = sphi 0, %s149
      %s169 = sphi 0, %s171
      %s172 = sphi 0, %s169
      %s173 = sphi 0, %s172
      %s189 = sphi 0, %s173
    $region4: #{decoder_forward.7} parent=1 // loop_header_branch
      %26 = sbr.rel (%p24) target = $region8
    $region5: #{decoder_forward.7} parent=1 // loop_body
      %s28 = ssub.s32 %s23, 1
      %s29 = ssub.s32 %s23, 2
      %s30 = sadd.s32 %s23, 1
      %s31 = ssub.s32 %s23, %s30
      %p32 = scmp.eq.s32.totalorder %s31, 0
      %s34 = sadd.s32 %s33, 1
      %s35 = scalar_select %p32, %s33, %s34
      %p38 = pneg %p32
      %p39 = scmp.eq.s32.totalorder %s23, 1
      %p40 = por %p38, %p39
      %p41 = scmp.ne.s32.totalorder %s33, %s36
      %p42 = scmp.eq.s32.totalorder %s23, 0
      %p43 = por %p41, %p42
      %p44 = scmp.ne.s32.totalorder %s33, %s36
      %p45 = scmp.eq.s32.totalorder %s28, 1
      %p46 = por %p44, %p45
      %p47 = scmp.ne.s32.totalorder %s36, %s37
      %p48 = scmp.eq.s32.totalorder %s28, 0
      %p49 = por %p47, %p48
      %p50 = scmp.ne.s32.totalorder %s36, %s37
      %p51 = scmp.eq.s32.totalorder %s29, 1
      %p52 = por %p50, %p51
      %p54 = scmp.ne.s32.totalorder %s37, %s53
      %p55 = scmp.eq.s32.totalorder %s29, 0
      %p56 = por %p54, %p55
      %s57 = ssub.s32 %s23, %s30
      %p58 = scmp.eq.s32.totalorder %s57, 0
      %s60 = sadd.s32 %s59, 1
      %s61 = scalar_select %p58, %s59, %s60
      %p64 = pneg %p58
      %p65 = scmp.eq.s32.totalorder %s23, 1
      %p66 = por %p64, %p65
      %p67 = scmp.ne.s32.totalorder %s59, %s62
      %p68 = scmp.eq.s32.totalorder %s23, 0
      %p69 = por %p67, %p68
      %p70 = scmp.ne.s32.totalorder %s59, %s62
      %p71 = scmp.eq.s32.totalorder %s28, 1
      %p72 = por %p70, %p71
      %p73 = scmp.ne.s32.totalorder %s62, %s63
      %p74 = scmp.eq.s32.totalorder %s28, 0
      %p75 = por %p73, %p74
      %p76 = scmp.ne.s32.totalorder %s62, %s63
      %p77 = scmp.eq.s32.totalorder %s29, 1
      %p78 = por %p76, %p77
      %p80 = scmp.ne.s32.totalorder %s63, %s79
      %p81 = scmp.eq.s32.totalorder %s29, 0
      %p82 = por %p80, %p81
      %s84 = sadd.s32 %s83, 1
      %p87 = scmp.eq.s32.totalorder %s23, 1
      %p88 = scmp.ne.s32.totalorder %s83, %s85
      %p89 = scmp.eq.s32.totalorder %s23, 0
      %p90 = por %p88, %p89
      %p91 = scmp.ne.s32.totalorder %s83, %s85
      %p92 = scmp.eq.s32.totalorder %s28, 1
      %p93 = por %p91, %p92
      %p94 = scmp.ne.s32.totalorder %s85, %s86
      %p95 = scmp.eq.s32.totalorder %s28, 0
      %p96 = por %p94, %p95
      %p97 = scmp.ne.s32.totalorder %s85, %s86
      %p98 = scmp.eq.s32.totalorder %s29, 1
      %p99 = por %p97, %p98
      %p101 = scmp.ne.s32.totalorder %s86, %s100
      %p102 = scmp.eq.s32.totalorder %s29, 0
      %p103 = por %p101, %p102
      %s105 = sadd.s32 %s104, 1
      %p108 = scmp.eq.s32.totalorder %s23, 1
      %p109 = scmp.ne.s32.totalorder %s104, %s106
      %p110 = scmp.eq.s32.totalorder %s23, 0
      %p111 = por %p109, %p110
      %p112 = scmp.ne.s32.totalorder %s104, %s106
      %p113 = scmp.eq.s32.totalorder %s28, 1
      %p114 = por %p112, %p113
      %p115 = scmp.ne.s32.totalorder %s106, %s107
      %p116 = scmp.eq.s32.totalorder %s28, 0
      %p117 = por %p115, %p116
      %p118 = scmp.ne.s32.totalorder %s106, %s107
      %p119 = scmp.eq.s32.totalorder %s29, 1
      %p120 = por %p118, %p119
      %p122 = scmp.ne.s32.totalorder %s107, %s121
      %p123 = scmp.eq.s32.totalorder %s29, 0
      %p124 = por %p122, %p123
      %s126 = sadd.s32 %s125, 1
      %p129 = scmp.eq.s32.totalorder %s23, 1
      %p130 = scmp.ne.s32.totalorder %s125, %s127
      %p131 = scmp.eq.s32.totalorder %s23, 0
      %p132 = por %p130, %p131
      %p133 = scmp.ne.s32.totalorder %s125, %s127
      %p134 = scmp.eq.s32.totalorder %s28, 1
      %p135 = por %p133, %p134
      %p136 = scmp.ne.s32.totalorder %s127, %s128
      %p137 = scmp.eq.s32.totalorder %s28, 0
      %p138 = por %p136, %p137
      %p139 = scmp.ne.s32.totalorder %s127, %s128
      %p140 = scmp.eq.s32.totalorder %s29, 1
      %p141 = por %p139, %p140
      %p143 = scmp.ne.s32.totalorder %s128, %s142
      %p144 = scmp.eq.s32.totalorder %s29, 0
      %p145 = por %p143, %p144
      %s147 = sadd.s32 %s146, 1
      %p150 = scmp.eq.s32.totalorder %s23, 1
      %p151 = scmp.ne.s32.totalorder %s146, %s148
      %p152 = scmp.eq.s32.totalorder %s23, 0
      %p153 = por %p151, %p152
      %p154 = scmp.ne.s32.totalorder %s146, %s148
      %p155 = scmp.eq.s32.totalorder %s28, 1
      %p156 = por %p154, %p155
      %p157 = scmp.ne.s32.totalorder %s148, %s149
      %p158 = scmp.eq.s32.totalorder %s28, 0
      %p159 = por %p157, %p158
      %p160 = scmp.ne.s32.totalorder %s148, %s149
      %p161 = scmp.eq.s32.totalorder %s29, 1
      %p162 = por %p160, %p161
      %p164 = scmp.ne.s32.totalorder %s149, %s163
      %p165 = scmp.eq.s32.totalorder %s29, 0
      %p166 = por %p164, %p165
      %s167 = ssub.s32 %s23, %s30
      %p168 = scmp.eq.s32.totalorder %s167, 0
      %s170 = sadd.s32 %s169, 1
      %s171 = scalar_select %p168, %s169, %s170
      %p174 = pneg %p168
      %p175 = scmp.eq.s32.totalorder %s23, 1
      %p176 = por %p174, %p175
      %p177 = scmp.ne.s32.totalorder %s169, %s172
      %p178 = scmp.eq.s32.totalorder %s23, 0
      %p179 = por %p177, %p178
      %p180 = scmp.ne.s32.totalorder %s169, %s172
      %p181 = scmp.eq.s32.totalorder %s28, 1
      %p182 = por %p180, %p181
      %p183 = scmp.ne.s32.totalorder %s172, %s173
      %p184 = scmp.eq.s32.totalorder %s28, 0
      %p185 = por %p183, %p184
      %p186 = scmp.ne.s32.totalorder %s172, %s173
      %p187 = scmp.eq.s32.totalorder %s29, 1
      %p188 = por %p186, %p187
      %p190 = scmp.ne.s32.totalorder %s173, %s189
      %p191 = scmp.eq.s32.totalorder %s29, 0
      %p192 = por %p190, %p191
      %p193 = scmp.le.s32.totalorder 1, %s23
      %p194 = scmp.lt.s32.totalorder %s23, 3
      %p195 = pnand %p193, %p194
      %p196 = pneg %p195
      // Predicated region
      $region9: #{decoder_forward.7} parent=5 // pred_check
        _
      $region10: #{decoder_forward.7} parent=5 // pred_check_branch
        %198 = sbr.rel (%p195) target = $region12
      $region11: #{decoder_forward.7} parent=5 // pred_region
        %s199 = ssub.s32 %s23, 1
        // Predicated region
        $region13: #{decoder_forward.7} parent=11 // pred_check
          %p200 = pneg %p96
        $region14: #{decoder_forward.7} parent=11 // pred_check_branch
          %202 = sbr.rel (%p200) target = $region16
        $region15: #{decoder_forward.7} parent=11 // pred_region
          %s204 = ssub.s32 1152, 1152
          %205 = vsyncadd [#allocation7], %s204
          %s206 = sshll.u32 [#allocation8], 4
          %s207 = int_to_ptr.vmem [resolvable:$true] %s206
          %212 = dma.hbm_to_vmem [thread:$0]  %s2, 1152, %s207, [#allocation7], 64, 64, 4
        $region16: #{decoder_forward.7} parent=11 // pred_fallthru
          _
        // Predicated region
        $region17: #{decoder_forward.7} parent=11 // pred_check
          %p213 = pneg %p117
        $region18: #{decoder_forward.7} parent=11 // pred_check_branch
          %215 = sbr.rel (%p213) target = $region20
        $region19: #{decoder_forward.7} parent=11 // pred_region
          %s217 = ssub.s32 16, 16
          %218 = vsyncadd [#allocation10], %s217
          %s220 = sshll.u32 [#allocation9], 4
          %s221 = int_to_ptr.vmem [resolvable:$true] %s220
          %223 = dma.hbm_to_vmem [thread:$0]  %s3, 16, %s221, [#allocation10]
        $region20: #{decoder_forward.7} parent=11 // pred_fallthru
          _
        // Predicated region
        $region21: #{decoder_forward.7} parent=11 // pred_check
          %p224 = pneg %p138
        $region22: #{decoder_forward.7} parent=11 // pred_check_branch
          %226 = sbr.rel (%p224) target = $region24
        $region23: #{decoder_forward.7} parent=11 // pred_region
          %s228 = ssub.s32 576, 576
          %229 = vsyncadd [#allocation10], %s228
          %s230 = sshll.u32 [#allocation11], 4
          %s231 = int_to_ptr.vmem [resolvable:$true] %s230
          %236 = dma.hbm_to_vmem [thread:$0]  %s4, 576, %s231, [#allocation10], 64, 64, 4
        $region24: #{decoder_forward.7} parent=11 // pred_fallthru
          _
        // Predicated region
        $region25: #{decoder_forward.7} parent=11 // pred_check
          %p237 = pneg %p159
        $region26: #{decoder_forward.7} parent=11 // pred_check_branch
          %239 = sbr.rel (%p237) target = $region28
        $region27: #{decoder_forward.7} parent=11 // pred_region
          %s241 = ssub.s32 16, 16
          %242 = vsyncadd [#allocation13], %s241
          %s244 = sshll.u32 [#allocation12], 4
          %s245 = int_to_ptr.vmem [resolvable:$true] %s244
          %247 = dma.hbm_to_vmem [thread:$0]  %s5, 16, %s245, [#allocation13]
        $region28: #{decoder_forward.7} parent=11 // pred_fallthru
          _
      $region12: #{decoder_forward.7} parent=5 // pred_fallthru
        _
      %p248 = scmp.lt.s32.totalorder %s23, 2
      // Predicated region
      $region29: #{decoder_forward.7} parent=5 // pred_check
        %p249 = pneg %p248
      $region30: #{decoder_forward.7} parent=5 // pred_check_branch
        %251 = sbr.rel (%p249) target = $region32
      $region31: #{decoder_forward.7} parent=5 // pred_region
        // Predicated region
        $region33: #{decoder_forward.7} parent=31 // pred_check
          %p252 = pneg %p43
        $region34: #{decoder_forward.7} parent=31 // pred_check_branch
          %254 = sbr.rel (%p252) target = $region36
        $region35: #{decoder_forward.7} parent=31 // pred_region
          %s255 = sand.u32 %s33, 1
          %s256 = scalar_lea.sflag [#allocation4], %s255
          %s257 = sand.u32 %s33, 1
          %s258 = smul.addr %s257, 132
          %s259 = scalar_lea.vmem [#allocation3], %s258
          %s261 = ssub.s32 2112, 2112
          %262 = vsyncadd %s256, %s261
          %s263 = smul.addr %s23, 33
          %s264 = smul.addr %s263, 64
          %s265 = scalar_lea.hbm %s0, %s264
          %s266 = sshll.u32 %s259, 4
          %s267 = int_to_ptr.vmem [resolvable:$true] %s266
          %272 = dma.hbm_to_vmem [thread:$0]  %s265, 2112, %s267, %s256, 64, 64, 4
        $region36: #{decoder_forward.7} parent=31 // pred_fallthru
          _
        // Predicated region
        $region37: #{decoder_forward.7} parent=31 // pred_check
          %p273 = pneg %p69
        $region38: #{decoder_forward.7} parent=31 // pred_check_branch
          %275 = sbr.rel (%p273) target = $region40
        $region39: #{decoder_forward.7} parent=31 // pred_region
          %s276 = sand.u32 %s23, 1
          %s277 = scalar_lea.sflag [#allocation7], %s276
          %s278 = sand.u32 %s59, 1
          %s279 = smul.addr %s278, 132
          %s280 = scalar_lea.vmem [#allocation6], %s279
          %s282 = ssub.s32 2112, 2112
          %283 = vsyncadd %s277, %s282
          %s284 = smul.addr %s23, 33
          %s285 = smul.addr %s284, 64
          %s286 = scalar_lea.hbm %s1, %s285
          %s287 = sshll.u32 %s280, 4
          %s288 = int_to_ptr.vmem [resolvable:$true] %s287
          %293 = dma.hbm_to_vmem [thread:$0]  %s286, 2112, %s288, %s277, 64, 64, 4
        $region40: #{decoder_forward.7} parent=31 // pred_fallthru
          _
      $region32: #{decoder_forward.7} parent=5 // pred_fallthru
        _
      %p294 = scmp.le.s32.totalorder 1, %s23
      %p295 = scmp.lt.s32.totalorder %s23, 3
      %p296 = pnand %p294, %p295
      %p297 = pneg %p296
      // Predicated region
      $region41: #{decoder_forward.7} parent=5 // pred_check
        _
      $region42: #{decoder_forward.7} parent=5 // pred_check_branch
        %299 = sbr.rel (%p296) target = $region44
      $region43: #{decoder_forward.7} parent=5 // pred_region
        %s300 = ssub.s32 %s23, 1
        %s301 = sand.u32 %s36, 1
        %s302 = scalar_lea.sflag [#allocation4], %s301
        %s303 = sand.u32 %s36, 1
        %s304 = smul.addr %s303, 132
        %s305 = scalar_lea.vmem [#allocation3], %s304
        // Predicated region
        $region45: #{decoder_forward.7} parent=43 // pred_check
          %p306 = pneg %p49
        $region46: #{decoder_forward.7} parent=43 // pred_check_branch
          %308 = sbr.rel (%p306) target = $region48
        $region47: #{decoder_forward.7} parent=43 // pred_region
          %309 = dma.done %s302, 2112
        $region48: #{decoder_forward.7} parent=43 // pred_fallthru
          _
        %s310 = sand.u32 %s28, 1
        %s311 = scalar_lea.sflag [#allocation7], %s310
        %s312 = sand.u32 %s62, 1
        %s313 = smul.addr %s312, 132
        %s314 = scalar_lea.vmem [#allocation6], %s313
        // Predicated region
        $region49: #{decoder_forward.7} parent=43 // pred_check
          %p315 = pneg %p75
        $region50: #{decoder_forward.7} parent=43 // pred_check_branch
          %317 = sbr.rel (%p315) target = $region52
        $region51: #{decoder_forward.7} parent=43 // pred_region
          %318 = dma.done %s311, 2112
        $region52: #{decoder_forward.7} parent=43 // pred_fallthru
          _
        // Predicated region
        $region53: #{decoder_forward.7} parent=43 // pred_check
          %p319 = pneg %p96
        $region54: #{decoder_forward.7} parent=43 // pred_check_branch
          %321 = sbr.rel (%p319) target = $region56
        $region55: #{decoder_forward.7} parent=43 // pred_region
          %322 = dma.done [#allocation7], 1152
        $region56: #{decoder_forward.7} parent=43 // pred_fallthru
          _
        // Predicated region
        $region57: #{decoder_forward.7} parent=43 // pred_check
          %p323 = pneg %p117
        $region58: #{decoder_forward.7} parent=43 // pred_check_branch
          %325 = sbr.rel (%p323) target = $region60
        $region59: #{decoder_forward.7} parent=43 // pred_region
          %326 = dma.done [#allocation10], 16
        $region60: #{decoder_forward.7} parent=43 // pred_fallthru
          _
        // Predicated region
        $region61: #{decoder_forward.7} parent=43 // pred_check
          %p327 = pneg %p138
        $region62: #{decoder_forward.7} parent=43 // pred_check_branch
          %329 = sbr.rel (%p327) target = $region64
        $region63: #{decoder_forward.7} parent=43 // pred_region
          %330 = dma.done [#allocation10], 576
        $region64: #{decoder_forward.7} parent=43 // pred_fallthru
          _
        // Predicated region
        $region65: #{decoder_forward.7} parent=43 // pred_check
          %p331 = pneg %p159
        $region66: #{decoder_forward.7} parent=43 // pred_check_branch
          %333 = sbr.rel (%p331) target = $region68
        $region67: #{decoder_forward.7} parent=43 // pred_region
          %334 = dma.done [#allocation13], 16
        $region68: #{decoder_forward.7} parent=43 // pred_fallthru
          _
        %s335 = sand.u32 %s36, 1
        %s336 = scalar_lea.sflag [#allocation4], %s335
        %s337 = sand.u32 %s36, 1
        %s338 = smul.addr %s337, 132
        %s339 = scalar_lea.vmem [#allocation3], %s338
        %p340 = pneg %p49
        %p341 = pneg %p46
        %s342 = sand.u32 %s28, 1
        %s343 = scalar_lea.sflag [#allocation7], %s342
        %s344 = sand.u32 %s62, 1
        %s345 = smul.addr %s344, 132
        %s346 = scalar_lea.vmem [#allocation6], %s345
        %p347 = pneg %p75
        %p348 = pneg %p72
        %p349 = pneg %p96
        %p350 = pneg %p93
        %p351 = pneg %p117
        %p352 = pneg %p114
        %p353 = pneg %p138
        %p354 = pneg %p135
        %p355 = pneg %p159
        %p356 = pneg %p156
        %p357 = pneg %p185
        %p358 = pneg %p182
        %s359 = sand.u32 %s172, 1
        %s360 = scalar_lea.sflag [#allocation5], %s359
        %s361 = sand.u32 %s172, 1
        %s362 = smul.addr %s361, 192
        %s363 = scalar_lea.vmem [#allocation14], %s362
        %v365 = vld [vmem:[%s305] sm:$0xf]
        %v366 = vld [vmem:[%s305 + $0x4] sm:$0xf]
        %v367 = vld [vmem:[%s305 + $0x8] sm:$0xf]
        %v368 = vld [vmem:[%s305 + $0xc] sm:$0xf]
        %v369 = vld [vmem:[%s305 + $0x10] sm:$0xf]
        %v370 = vld [vmem:[%s305 + $0x14] sm:$0xf]
        %v371 = vld [vmem:[%s305 + $0x18] sm:$0xf]
        %v372 = vld [vmem:[%s305 + $0x1c] sm:$0xf]
        %v373 = vld [vmem:[%s305 + $0x20] sm:$0xf]
        %v374 = vld [vmem:[%s305 + $0x24] sm:$0xf]
        %v375 = vld [vmem:[%s305 + $0x28] sm:$0xf]
        %v376 = vld [vmem:[%s305 + $0x2c] sm:$0xf]
        %v377 = vld [vmem:[%s305 + $0x30] sm:$0xf]
        %v378 = vld [vmem:[%s305 + $0x34] sm:$0xf]
        %v379 = vld [vmem:[%s305 + $0x38] sm:$0xf]
        %v380 = vld [vmem:[%s305 + $0x3c] sm:$0xf]
        %v381 = vld [vmem:[%s305 + $0x40] sm:$0xf]
        %v382 = vld [vmem:[%s305 + $0x44] sm:$0xf]
        %v383 = vld [vmem:[%s305 + $0x48] sm:$0xf]
        %v384 = vld [vmem:[%s305 + $0x4c] sm:$0xf]
        %v385 = vld [vmem:[%s305 + $0x50] sm:$0xf]
        %v386 = vld [vmem:[%s305 + $0x54] sm:$0xf]
        %v387 = vld [vmem:[%s305 + $0x58] sm:$0xf]
        %v388 = vld [vmem:[%s305 + $0x5c] sm:$0xf]
        %v389 = vld [vmem:[%s305 + $0x60] sm:$0xf]
        %v390 = vld [vmem:[%s305 + $0x64] sm:$0xf]
        %v391 = vld [vmem:[%s305 + $0x68] sm:$0xf]
        %v392 = vld [vmem:[%s305 + $0x6c] sm:$0xf]
        %v393 = vld [vmem:[%s305 + $0x70] sm:$0xf]
        %v394 = vld [vmem:[%s305 + $0x74] sm:$0xf]
        %v395 = vld [vmem:[%s305 + $0x78] sm:$0xf]
        %v396 = vld [vmem:[%s305 + $0x7c] sm:$0xf]
        %v397 = vld [vmem:[%s305 + $0x80] sm:$0x1]
        %v398 = vld [vmem:[%s305] sm:$0xe]
        %v399 = vld [vmem:[%s314] sm:$0xf]
        %v400 = vld [vmem:[%s314 + $0x4] sm:$0xf]
        %v401 = vld [vmem:[%s314 + $0x8] sm:$0xf]
        %v402 = vld [vmem:[%s314 + $0xc] sm:$0xf]
        %v403 = vld [vmem:[%s314 + $0x10] sm:$0xf]
        %v404 = vld [vmem:[%s314 + $0x14] sm:$0xf]
        %v405 = vld [vmem:[%s314 + $0x18] sm:$0xf]
        %v406 = vld [vmem:[%s314 + $0x1c] sm:$0xf]
        %v407 = vld [vmem:[%s314 + $0x20] sm:$0xf]
        %v408 = vld [vmem:[%s314 + $0x24] sm:$0xf]
        %v409 = vld [vmem:[%s314 + $0x28] sm:$0xf]
        %v410 = vld [vmem:[%s314 + $0x2c] sm:$0xf]
        %v411 = vld [vmem:[%s314 + $0x30] sm:$0xf]
        %v412 = vld [vmem:[%s314 + $0x34] sm:$0xf]
        %v413 = vld [vmem:[%s314 + $0x38] sm:$0xf]
        %v414 = vld [vmem:[%s314 + $0x3c] sm:$0xf]
        %v415 = vld [vmem:[%s314 + $0x40] sm:$0xf]
        %v416 = vld [vmem:[%s314 + $0x44] sm:$0xf]
        %v417 = vld [vmem:[%s314 + $0x48] sm:$0xf]
        %v418 = vld [vmem:[%s314 + $0x4c] sm:$0xf]
        %v419 = vld [vmem:[%s314 + $0x50] sm:$0xf]
        %v420 = vld [vmem:[%s314 + $0x54] sm:$0xf]
        %v421 = vld [vmem:[%s314 + $0x58] sm:$0xf]
        %v422 = vld [vmem:[%s314 + $0x5c] sm:$0xf]
        %v423 = vld [vmem:[%s314 + $0x60] sm:$0xf]
        %v424 = vld [vmem:[%s314 + $0x64] sm:$0xf]
        %v425 = vld [vmem:[%s314 + $0x68] sm:$0xf]
        %v426 = vld [vmem:[%s314 + $0x6c] sm:$0xf]
        %v427 = vld [vmem:[%s314 + $0x70] sm:$0xf]
        %v428 = vld [vmem:[%s314 + $0x74] sm:$0xf]
        %v429 = vld [vmem:[%s314 + $0x78] sm:$0xf]
        %v430 = vld [vmem:[%s314 + $0x7c] sm:$0xf]
        %v431 = vld [vmem:[%s314 + $0x80] sm:$0x1]
        %v432 = vld [vmem:[%s314] sm:$0xe]
        %v465 = vunpack.c.l.b16 %v365
        %v466 = vunpack.c.l.b16 %v366
        %v467 = vunpack.c.l.b16 %v367
        %v468 = vunpack.c.l.b16 %v368
        %v469 = vunpack.c.l.b16 %v369
        %v470 = vunpack.c.l.b16 %v370
        %v471 = vunpack.c.l.b16 %v371
        %v472 = vunpack.c.l.b16 %v372
        %v473 = vunpack.c.l.b16 %v373
        %v474 = vunpack.c.l.b16 %v374
        %v475 = vunpack.c.l.b16 %v375
        %v476 = vunpack.c.l.b16 %v376
        %v477 = vunpack.c.l.b16 %v377
        %v478 = vunpack.c.l.b16 %v378
        %v479 = vunpack.c.l.b16 %v379
        %v480 = vunpack.c.l.b16 %v380
        %v481 = vunpack.c.l.b16 %v381
        %v482 = vunpack.c.l.b16 %v382
        %v483 = vunpack.c.l.b16 %v383
        %v484 = vunpack.c.l.b16 %v384
        %v485 = vunpack.c.l.b16 %v385
        %v486 = vunpack.c.l.b16 %v386
        %v487 = vunpack.c.l.b16 %v387
        %v488 = vunpack.c.l.b16 %v388
        %v489 = vunpack.c.l.b16 %v389
        %v490 = vunpack.c.l.b16 %v390
        %v491 = vunpack.c.l.b16 %v391
        %v492 = vunpack.c.l.b16 %v392
        %v493 = vunpack.c.l.b16 %v393
        %v494 = vunpack.c.l.b16 %v394
        %v495 = vunpack.c.l.b16 %v395
        %v496 = vunpack.c.l.b16 %v396
        %v497 = vpack.c.b16 %v466, %v465
        %v498 = vpack.c.b16 %v468, %v467
        %v499 = vpack.c.b16 %v470, %v469
        %v500 = vpack.c.b16 %v472, %v471
        %v501 = vpack.c.b16 %v474, %v473
        %v502 = vpack.c.b16 %v476, %v475
        %v503 = vpack.c.b16 %v478, %v477
        %v504 = vpack.c.b16 %v480, %v479
        %v505 = vpack.c.b16 %v482, %v481
        %v506 = vpack.c.b16 %v484, %v483
        %v507 = vpack.c.b16 %v486, %v485
        %v508 = vpack.c.b16 %v488, %v487
        %v509 = vpack.c.b16 %v490, %v489
        %v510 = vpack.c.b16 %v492, %v491
        %v511 = vpack.c.b16 %v494, %v493
        %v512 = vpack.c.b16 %v496, %v495
        %v514 = vunpack.c.l.b16 %v397
        %v515 = vpack.c.b16 %v514, %v514
        %vm516 = vsmask.f32 7424
        %v518 = vshrl.u32 %v497, 16
        %v520 = vshll.u32 %v497, 16
        %v522 = vrot.slane %v520, 1
        %v523 = vor.u32 %v518, %v522
        %v525 = vshll.u32 %v498, 16
        %v527 = vrot.slane %v525, 1
        %v528 = vsel %vm516, %v523, %v527
        %v529 = vshrl.u32 %v498, 16
        %v531 = vor.u32 %v529, %v527
        %v533 = vshll.u32 %v499, 16
        %v535 = vrot.slane %v533, 1
        %v536 = vsel %vm516, %v531, %v535
        %v537 = vshrl.u32 %v499, 16
        %v539 = vor.u32 %v537, %v535
        %v541 = vshll.u32 %v500, 16
        %v543 = vrot.slane %v541, 1
        %v544 = vsel %vm516, %v539, %v543
        %v545 = vshrl.u32 %v500, 16
        %v547 = vor.u32 %v545, %v543
        %v549 = vshll.u32 %v501, 16
        %v551 = vrot.slane %v549, 1
        %v552 = vsel %vm516, %v547, %v551
        %v553 = vshrl.u32 %v501, 16
        %v555 = vor.u32 %v553, %v551
        %v557 = vshll.u32 %v502, 16
        %v559 = vrot.slane %v557, 1
        %v560 = vsel %vm516, %v555, %v559
        %v561 = vshrl.u32 %v502, 16
        %v563 = vor.u32 %v561, %v559
        %v565 = vshll.u32 %v503, 16
        %v567 = vrot.slane %v565, 1
        %v568 = vsel %vm516, %v563, %v567
        %v569 = vshrl.u32 %v503, 16
        %v571 = vor.u32 %v569, %v567
        %v573 = vshll.u32 %v504, 16
        %v575 = vrot.slane %v573, 1
        %v576 = vsel %vm516, %v571, %v575
        %v577 = vshrl.u32 %v504, 16
        %v579 = vor.u32 %v577, %v575
        %v581 = vshll.u32 %v505, 16
        %v583 = vrot.slane %v581, 1
        %v584 = vsel %vm516, %v579, %v583
        %v585 = vshrl.u32 %v505, 16
        %v587 = vor.u32 %v585, %v583
        %v589 = vshll.u32 %v506, 16
        %v591 = vrot.slane %v589, 1
        %v592 = vsel %vm516, %v587, %v591
        %v593 = vshrl.u32 %v506, 16
        %v595 = vor.u32 %v593, %v591
        %v597 = vshll.u32 %v507, 16
        %v599 = vrot.slane %v597, 1
        %v600 = vsel %vm516, %v595, %v599
        %v601 = vshrl.u32 %v507, 16
        %v603 = vor.u32 %v601, %v599
        %v605 = vshll.u32 %v508, 16
        %v607 = vrot.slane %v605, 1
        %v608 = vsel %vm516, %v603, %v607
        %v609 = vshrl.u32 %v508, 16
        %v611 = vor.u32 %v609, %v607
        %v613 = vshll.u32 %v509, 16
        %v615 = vrot.slane %v613, 1
        %v616 = vsel %vm516, %v611, %v615
        %v617 = vshrl.u32 %v509, 16
        %v619 = vor.u32 %v617, %v615
        %v621 = vshll.u32 %v510, 16
        %v623 = vrot.slane %v621, 1
        %v624 = vsel %vm516, %v619, %v623
        %v625 = vshrl.u32 %v510, 16
        %v627 = vor.u32 %v625, %v623
        %v629 = vshll.u32 %v511, 16
        %v631 = vrot.slane %v629, 1
        %v632 = vsel %vm516, %v627, %v631
        %v633 = vshrl.u32 %v511, 16
        %v635 = vor.u32 %v633, %v631
        %v637 = vshll.u32 %v512, 16
        %v639 = vrot.slane %v637, 1
        %v640 = vsel %vm516, %v635, %v639
        %v641 = vshrl.u32 %v512, 16
        %v643 = vor.u32 %v641, %v639
        %v645 = vshll.u32 %v515, 16
        %v647 = vrot.slane %v645, 1
        %v648 = vsel %vm516, %v643, %v647
        %649 = vrot.lane.b32.xlu0 %v528, 8
        %v650 = vpop.permute.xlu0 %649
        %651 = vrot.lane.b32.xlu0 %v536, 8
        %v652 = vpop.permute.xlu0 %651
        %653 = vrot.lane.b32.xlu0 %v544, 8
        %v654 = vpop.permute.xlu0 %653
        %655 = vrot.lane.b32.xlu0 %v552, 8
        %v656 = vpop.permute.xlu0 %655
        %657 = vrot.lane.b32.xlu0 %v560, 8
        %v658 = vpop.permute.xlu0 %657
        %659 = vrot.lane.b32.xlu0 %v568, 8
        %v660 = vpop.permute.xlu0 %659
        %661 = vrot.lane.b32.xlu0 %v576, 8
        %v662 = vpop.permute.xlu0 %661
        %663 = vrot.lane.b32.xlu0 %v584, 8
        %v664 = vpop.permute.xlu0 %663
        %665 = vrot.lane.b32.xlu0 %v592, 8
        %v666 = vpop.permute.xlu0 %665
        %667 = vrot.lane.b32.xlu0 %v600, 8
        %v668 = vpop.permute.xlu0 %667
        %669 = vrot.lane.b32.xlu0 %v608, 8
        %v670 = vpop.permute.xlu0 %669
        %671 = vrot.lane.b32.xlu0 %v616, 8
        %v672 = vpop.permute.xlu0 %671
        %673 = vrot.lane.b32.xlu0 %v624, 8
        %v674 = vpop.permute.xlu0 %673
        %675 = vrot.lane.b32.xlu0 %v632, 8
        %v676 = vpop.permute.xlu0 %675
        %677 = vrot.lane.b32.xlu0 %v640, 8
        %v678 = vpop.permute.xlu0 %677
        %679 = vrot.lane.b32.xlu0 %v648, 8
        %v680 = vpop.permute.xlu0 %679
        %v682 = vunpack.c.l.b16 %v398
        %v683 = vpack.c.b16 %v466, %v682
        %vm684 = vcmask 1046528
        %v685 = vrot.slane %v683, 1
        %v686 = vrot.slane %v498, 1
        %v687 = vsel %vm684, %v685, %v686
        %v688 = vrot.slane %v499, 1
        %v689 = vsel %vm684, %v686, %v688
        %v690 = vrot.slane %v500, 1
        %v691 = vsel %vm684, %v688, %v690
        %v692 = vrot.slane %v501, 1
        %v693 = vsel %vm684, %v690, %v692
        %v694 = vrot.slane %v502, 1
        %v695 = vsel %vm684, %v692, %v694
        %v696 = vrot.slane %v503, 1
        %v697 = vsel %vm684, %v694, %v696
        %v698 = vrot.slane %v504, 1
        %v699 = vsel %vm684, %v696, %v698
        %v700 = vrot.slane %v505, 1
        %v701 = vsel %vm684, %v698, %v700
        %v702 = vrot.slane %v506, 1
        %v703 = vsel %vm684, %v700, %v702
        %v704 = vrot.slane %v507, 1
        %v705 = vsel %vm684, %v702, %v704
        %v706 = vrot.slane %v508, 1
        %v707 = vsel %vm684, %v704, %v706
        %v708 = vrot.slane %v509, 1
        %v709 = vsel %vm684, %v706, %v708
        %v710 = vrot.slane %v510, 1
        %v711 = vsel %vm684, %v708, %v710
        %v712 = vrot.slane %v511, 1
        %v713 = vsel %vm684, %v710, %v712
        %v714 = vrot.slane %v512, 1
        %v715 = vsel %vm684, %v712, %v714
        %v716 = vrot.slane %v515, 1
        %v717 = vsel %vm684, %v714, %v716
        %718 = vrot.lane.b32.xlu0 %v687, 16
        %v719 = vpop.permute.xlu0 %718
        %720 = vrot.lane.b32.xlu0 %v689, 16
        %v721 = vpop.permute.xlu0 %720
        %722 = vrot.lane.b32.xlu0 %v691, 16
        %v723 = vpop.permute.xlu0 %722
        %724 = vrot.lane.b32.xlu0 %v693, 16
        %v725 = vpop.permute.xlu0 %724
        %726 = vrot.lane.b32.xlu0 %v695, 16
        %v727 = vpop.permute.xlu0 %726
        %728 = vrot.lane.b32.xlu0 %v697, 16
        %v729 = vpop.permute.xlu0 %728
        %730 = vrot.lane.b32.xlu0 %v699, 16
        %v731 = vpop.permute.xlu0 %730
        %732 = vrot.lane.b32.xlu0 %v701, 16
        %v733 = vpop.permute.xlu0 %732
        %734 = vrot.lane.b32.xlu0 %v703, 16
        %v735 = vpop.permute.xlu0 %734
        %736 = vrot.lane.b32.xlu0 %v705, 16
        %v737 = vpop.permute.xlu0 %736
        %738 = vrot.lane.b32.xlu0 %v707, 16
        %v739 = vpop.permute.xlu0 %738
        %740 = vrot.lane.b32.xlu0 %v709, 16
        %v741 = vpop.permute.xlu0 %740
        %742 = vrot.lane.b32.xlu0 %v711, 16
        %v743 = vpop.permute.xlu0 %742
        %744 = vrot.lane.b32.xlu0 %v713, 16
        %v745 = vpop.permute.xlu0 %744
        %746 = vrot.lane.b32.xlu0 %v715, 16
        %v747 = vpop.permute.xlu0 %746
        %748 = vrot.lane.b32.xlu0 %v717, 16
        %v749 = vpop.permute.xlu0 %748
        %v782 = vunpack.c.l.b16 %v399
        %v783 = vunpack.c.l.b16 %v400
        %v784 = vunpack.c.l.b16 %v401
        %v785 = vunpack.c.l.b16 %v402
        %v786 = vunpack.c.l.b16 %v403
        %v787 = vunpack.c.l.b16 %v404
        %v788 = vunpack.c.l.b16 %v405
        %v789 = vunpack.c.l.b16 %v406
        %v790 = vunpack.c.l.b16 %v407
        %v791 = vunpack.c.l.b16 %v408
        %v792 = vunpack.c.l.b16 %v409
        %v793 = vunpack.c.l.b16 %v410
        %v794 = vunpack.c.l.b16 %v411
        %v795 = vunpack.c.l.b16 %v412
        %v796 = vunpack.c.l.b16 %v413
        %v797 = vunpack.c.l.b16 %v414
        %v798 = vunpack.c.l.b16 %v415
        %v799 = vunpack.c.l.b16 %v416
        %v800 = vunpack.c.l.b16 %v417
        %v801 = vunpack.c.l.b16 %v418
        %v802 = vunpack.c.l.b16 %v419
        %v803 = vunpack.c.l.b16 %v420
        %v804 = vunpack.c.l.b16 %v421
        %v805 = vunpack.c.l.b16 %v422
        %v806 = vunpack.c.l.b16 %v423
        %v807 = vunpack.c.l.b16 %v424
        %v808 = vunpack.c.l.b16 %v425
        %v809 = vunpack.c.l.b16 %v426
        %v810 = vunpack.c.l.b16 %v427
        %v811 = vunpack.c.l.b16 %v428
        %v812 = vunpack.c.l.b16 %v429
        %v813 = vunpack.c.l.b16 %v430
        %v814 = vpack.c.b16 %v783, %v782
        %v815 = vpack.c.b16 %v785, %v784
        %v816 = vpack.c.b16 %v787, %v786
        %v817 = vpack.c.b16 %v789, %v788
        %v818 = vpack.c.b16 %v791, %v790
        %v819 = vpack.c.b16 %v793, %v792
        %v820 = vpack.c.b16 %v795, %v794
        %v821 = vpack.c.b16 %v797, %v796
        %v822 = vpack.c.b16 %v799, %v798
        %v823 = vpack.c.b16 %v801, %v800
        %v824 = vpack.c.b16 %v803, %v802
        %v825 = vpack.c.b16 %v805, %v804
        %v826 = vpack.c.b16 %v807, %v806
        %v827 = vpack.c.b16 %v809, %v808
        %v828 = vpack.c.b16 %v811, %v810
        %v829 = vpack.c.b16 %v813, %v812
        %830 = vrot.lane.b32.xlu0 %v814, 24
        %v831 = vpop.permute.xlu0 %830
        %832 = vrot.lane.b32.xlu0 %v815, 24
        %v833 = vpop.permute.xlu0 %832
        %834 = vrot.lane.b32.xlu0 %v816, 24
        %v835 = vpop.permute.xlu0 %834
        %836 = vrot.lane.b32.xlu0 %v817, 24
        %v837 = vpop.permute.xlu0 %836
        %838 = vrot.lane.b32.xlu0 %v818, 24
        %v839 = vpop.permute.xlu0 %838
        %840 = vrot.lane.b32.xlu0 %v819, 24
        %v841 = vpop.permute.xlu0 %840
        %842 = vrot.lane.b32.xlu0 %v820, 24
        %v843 = vpop.permute.xlu0 %842
        %844 = vrot.lane.b32.xlu0 %v821, 24
        %v845 = vpop.permute.xlu0 %844
        %846 = vrot.lane.b32.xlu0 %v822, 24
        %v847 = vpop.permute.xlu0 %846
        %848 = vrot.lane.b32.xlu0 %v823, 24
        %v849 = vpop.permute.xlu0 %848
        %850 = vrot.lane.b32.xlu0 %v824, 24
        %v851 = vpop.permute.xlu0 %850
        %852 = vrot.lane.b32.xlu0 %v825, 24
        %v853 = vpop.permute.xlu0 %852
        %854 = vrot.lane.b32.xlu0 %v826, 24
        %v855 = vpop.permute.xlu0 %854
        %856 = vrot.lane.b32.xlu0 %v827, 24
        %v857 = vpop.permute.xlu0 %856
        %858 = vrot.lane.b32.xlu0 %v828, 24
        %v859 = vpop.permute.xlu0 %858
        %860 = vrot.lane.b32.xlu0 %v829, 24
        %v861 = vpop.permute.xlu0 %860
        %v863 = vunpack.c.l.b16 %v431
        %v864 = vpack.c.b16 %v863, %v863
        %v866 = vshrl.u32 %v814, 16
        %v868 = vshll.u32 %v814, 16
        %v870 = vrot.slane %v868, 1
        %v871 = vor.u32 %v866, %v870
        %v873 = vshll.u32 %v815, 16
        %v875 = vrot.slane %v873, 1
        %v876 = vsel %vm516, %v871, %v875
        %v877 = vshrl.u32 %v815, 16
        %v879 = vor.u32 %v877, %v875
        %v881 = vshll.u32 %v816, 16
        %v883 = vrot.slane %v881, 1
        %v884 = vsel %vm516, %v879, %v883
        %v885 = vshrl.u32 %v816, 16
        %v887 = vor.u32 %v885, %v883
        %v889 = vshll.u32 %v817, 16
        %v891 = vrot.slane %v889, 1
        %v892 = vsel %vm516, %v887, %v891
        %v893 = vshrl.u32 %v817, 16
        %v895 = vor.u32 %v893, %v891
        %v897 = vshll.u32 %v818, 16
        %v899 = vrot.slane %v897, 1
        %v900 = vsel %vm516, %v895, %v899
        %v901 = vshrl.u32 %v818, 16
        %v903 = vor.u32 %v901, %v899
        %v905 = vshll.u32 %v819, 16
        %v907 = vrot.slane %v905, 1
        %v908 = vsel %vm516, %v903, %v907
        %v909 = vshrl.u32 %v819, 16
        %v911 = vor.u32 %v909, %v907
        %v913 = vshll.u32 %v820, 16
        %v915 = vrot.slane %v913, 1
        %v916 = vsel %vm516, %v911, %v915
        %v917 = vshrl.u32 %v820, 16
        %v919 = vor.u32 %v917, %v915
        %v921 = vshll.u32 %v821, 16
        %v923 = vrot.slane %v921, 1
        %v924 = vsel %vm516, %v919, %v923
        %v925 = vshrl.u32 %v821, 16
        %v927 = vor.u32 %v925, %v923
        %v929 = vshll.u32 %v822, 16
        %v931 = vrot.slane %v929, 1
        %v932 = vsel %vm516, %v927, %v931
        %v933 = vshrl.u32 %v822, 16
        %v935 = vor.u32 %v933, %v931
        %v937 = vshll.u32 %v823, 16
        %v939 = vrot.slane %v937, 1
        %v940 = vsel %vm516, %v935, %v939
        %v941 = vshrl.u32 %v823, 16
        %v943 = vor.u32 %v941, %v939
        %v945 = vshll.u32 %v824, 16
        %v947 = vrot.slane %v945, 1
        %v948 = vsel %vm516, %v943, %v947
        %v949 = vshrl.u32 %v824, 16
        %v951 = vor.u32 %v949, %v947
        %v953 = vshll.u32 %v825, 16
        %v955 = vrot.slane %v953, 1
        %v956 = vsel %vm516, %v951, %v955
        %v957 = vshrl.u32 %v825, 16
        %v959 = vor.u32 %v957, %v955
        %v961 = vshll.u32 %v826, 16
        %v963 = vrot.slane %v961, 1
        %v964 = vsel %vm516, %v959, %v963
        %v965 = vshrl.u32 %v826, 16
        %v967 = vor.u32 %v965, %v963
        %v969 = vshll.u32 %v827, 16
        %v971 = vrot.slane %v969, 1
        %v972 = vsel %vm516, %v967, %v971
        %v973 = vshrl.u32 %v827, 16
        %v975 = vor.u32 %v973, %v971
        %v977 = vshll.u32 %v828, 16
        %v979 = vrot.slane %v977, 1
        %v980 = vsel %vm516, %v975, %v979
        %v981 = vshrl.u32 %v828, 16
        %v983 = vor.u32 %v981, %v979
        %v985 = vshll.u32 %v829, 16
        %v987 = vrot.slane %v985, 1
        %v988 = vsel %vm516, %v983, %v987
        %v989 = vshrl.u32 %v829, 16
        %v991 = vor.u32 %v989, %v987
        %v993 = vshll.u32 %v864, 16
        %v995 = vrot.slane %v993, 1
        %v996 = vsel %vm516, %v991, %v995
        %997 = vrot.lane.b32.xlu0 %v876, 32
        %v998 = vpop.permute.xlu0 %997
        %999 = vrot.lane.b32.xlu0 %v884, 32
        %v1000 = vpop.permute.xlu0 %999
        %1001 = vrot.lane.b32.xlu0 %v892, 32
        %v1002 = vpop.permute.xlu0 %1001
        %1003 = vrot.lane.b32.xlu0 %v900, 32
        %v1004 = vpop.permute.xlu0 %1003
        %1005 = vrot.lane.b32.xlu0 %v908, 32
        %v1006 = vpop.permute.xlu0 %1005
        %1007 = vrot.lane.b32.xlu0 %v916, 32
        %v1008 = vpop.permute.xlu0 %1007
        %1009 = vrot.lane.b32.xlu0 %v924, 32
        %v1010 = vpop.permute.xlu0 %1009
        %1011 = vrot.lane.b32.xlu0 %v932, 32
        %v1012 = vpop.permute.xlu0 %1011
        %1013 = vrot.lane.b32.xlu0 %v940, 32
        %v1014 = vpop.permute.xlu0 %1013
        %1015 = vrot.lane.b32.xlu0 %v948, 32
        %v1016 = vpop.permute.xlu0 %1015
        %1017 = vrot.lane.b32.xlu0 %v956, 32
        %v1018 = vpop.permute.xlu0 %1017
        %1019 = vrot.lane.b32.xlu0 %v964, 32
        %v1020 = vpop.permute.xlu0 %1019
        %1021 = vrot.lane.b32.xlu0 %v972, 32
        %v1022 = vpop.permute.xlu0 %1021
        %1023 = vrot.lane.b32.xlu0 %v980, 32
        %v1024 = vpop.permute.xlu0 %1023
        %1025 = vrot.lane.b32.xlu0 %v988, 32
        %v1026 = vpop.permute.xlu0 %1025
        %1027 = vrot.lane.b32.xlu0 %v996, 32
        %v1028 = vpop.permute.xlu0 %1027
        %v1030 = vunpack.c.l.b16 %v432
        %v1031 = vpack.c.b16 %v783, %v1030
        %v1032 = vrot.slane %v1031, 1
        %v1033 = vrot.slane %v815, 1
        %v1034 = vsel %vm684, %v1032, %v1033
        %v1035 = vrot.slane %v816, 1
        %v1036 = vsel %vm684, %v1033, %v1035
        %v1037 = vrot.slane %v817, 1
        %v1038 = vsel %vm684, %v1035, %v1037
        %v1039 = vrot.slane %v818, 1
        %v1040 = vsel %vm684, %v1037, %v1039
        %v1041 = vrot.slane %v819, 1
        %v1042 = vsel %vm684, %v1039, %v1041
        %v1043 = vrot.slane %v820, 1
        %v1044 = vsel %vm684, %v1041, %v1043
        %v1045 = vrot.slane %v821, 1
        %v1046 = vsel %vm684, %v1043, %v1045
        %v1047 = vrot.slane %v822, 1
        %v1048 = vsel %vm684, %v1045, %v1047
        %v1049 = vrot.slane %v823, 1
        %v1050 = vsel %vm684, %v1047, %v1049
        %v1051 = vrot.slane %v824, 1
        %v1052 = vsel %vm684, %v1049, %v1051
        %v1053 = vrot.slane %v825, 1
        %v1054 = vsel %vm684, %v1051, %v1053
        %v1055 = vrot.slane %v826, 1
        %v1056 = vsel %vm684, %v1053, %v1055
        %v1057 = vrot.slane %v827, 1
        %v1058 = vsel %vm684, %v1055, %v1057
        %v1059 = vrot.slane %v828, 1
        %v1060 = vsel %vm684, %v1057, %v1059
        %v1061 = vrot.slane %v829, 1
        %v1062 = vsel %vm684, %v1059, %v1061
        %v1063 = vrot.slane %v864, 1
        %v1064 = vsel %vm684, %v1061, %v1063
        %1065 = vrot.lane.b32.xlu0 %v1034, 40
        %v1066 = vpop.permute.xlu0 %1065
        %1067 = vrot.lane.b32.xlu0 %v1036, 40
        %v1068 = vpop.permute.xlu0 %1067
        %1069 = vrot.lane.b32.xlu0 %v1038, 40
        %v1070 = vpop.permute.xlu0 %1069
        %1071 = vrot.lane.b32.xlu0 %v1040, 40
        %v1072 = vpop.permute.xlu0 %1071
        %1073 = vrot.lane.b32.xlu0 %v1042, 40
        %v1074 = vpop.permute.xlu0 %1073
        %1075 = vrot.lane.b32.xlu0 %v1044, 40
        %v1076 = vpop.permute.xlu0 %1075
        %1077 = vrot.lane.b32.xlu0 %v1046, 40
        %v1078 = vpop.permute.xlu0 %1077
        %1079 = vrot.lane.b32.xlu0 %v1048, 40
        %v1080 = vpop.permute.xlu0 %1079
        %1081 = vrot.lane.b32.xlu0 %v1050, 40
        %v1082 = vpop.permute.xlu0 %1081
        %1083 = vrot.lane.b32.xlu0 %v1052, 40
        %v1084 = vpop.permute.xlu0 %1083
        %1085 = vrot.lane.b32.xlu0 %v1054, 40
        %v1086 = vpop.permute.xlu0 %1085
        %1087 = vrot.lane.b32.xlu0 %v1056, 40
        %v1088 = vpop.permute.xlu0 %1087
        %1089 = vrot.lane.b32.xlu0 %v1058, 40
        %v1090 = vpop.permute.xlu0 %1089
        %1091 = vrot.lane.b32.xlu0 %v1060, 40
        %v1092 = vpop.permute.xlu0 %1091
        %1093 = vrot.lane.b32.xlu0 %v1062, 40
        %v1094 = vpop.permute.xlu0 %1093
        %1095 = vrot.lane.b32.xlu0 %v1064, 40
        %v1096 = vpop.permute.xlu0 %1095
        %vm1097 = vcmask 64512
        %v1099 = vsel %vm1097, %v497, %v650
        %v1101 = vsel %vm1097, %v498, %v652
        %v1103 = vsel %vm1097, %v499, %v654
        %v1105 = vsel %vm1097, %v500, %v656
        %v1107 = vsel %vm1097, %v501, %v658
        %v1109 = vsel %vm1097, %v502, %v660
        %v1111 = vsel %vm1097, %v503, %v662
        %v1113 = vsel %vm1097, %v504, %v664
        %v1115 = vsel %vm1097, %v505, %v666
        %v1117 = vsel %vm1097, %v506, %v668
        %v1119 = vsel %vm1097, %v507, %v670
        %v1121 = vsel %vm1097, %v508, %v672
        %v1123 = vsel %vm1097, %v509, %v674
        %v1125 = vsel %vm1097, %v510, %v676
        %v1127 = vsel %vm1097, %v511, %v678
        %v1129 = vsel %vm1097, %v512, %v680
        %vm1130 = vcmask 130048
        %v1132 = vsel %vm1130, %v1099, %v719
        %v1134 = vsel %vm1130, %v1101, %v721
        %v1136 = vsel %vm1130, %v1103, %v723
        %v1138 = vsel %vm1130, %v1105, %v725
        %v1140 = vsel %vm1130, %v1107, %v727
        %v1142 = vsel %vm1130, %v1109, %v729
        %v1144 = vsel %vm1130, %v1111, %v731
        %v1146 = vsel %vm1130, %v1113, %v733
        %v1148 = vsel %vm1130, %v1115, %v735
        %v1150 = vsel %vm1130, %v1117, %v737
        %v1152 = vsel %vm1130, %v1119, %v739
        %v1154 = vsel %vm1130, %v1121, %v741
        %v1156 = vsel %vm1130, %v1123, %v743
        %v1158 = vsel %vm1130, %v1125, %v745
        %v1160 = vsel %vm1130, %v1127, %v747
        %v1162 = vsel %vm1130, %v1129, %v749
        %vm1163 = vcmask 195584
        %v1165 = vsel %vm1163, %v1132, %v831
        %v1167 = vsel %vm1163, %v1134, %v833
        %v1169 = vsel %vm1163, %v1136, %v835
        %v1171 = vsel %vm1163, %v1138, %v837
        %v1173 = vsel %vm1163, %v1140, %v839
        %v1175 = vsel %vm1163, %v1142, %v841
        %v1177 = vsel %vm1163, %v1144, %v843
        %v1179 = vsel %vm1163, %v1146, %v845
        %v1181 = vsel %vm1163, %v1148, %v847
        %v1183 = vsel %vm1163, %v1150, %v849
        %v1185 = vsel %vm1163, %v1152, %v851
        %v1187 = vsel %vm1163, %v1154, %v853
        %v1189 = vsel %vm1163, %v1156, %v855
        %v1191 = vsel %vm1163, %v1158, %v857
        %v1193 = vsel %vm1163, %v1160, %v859
        %v1195 = vsel %vm1163, %v1162, %v861
        %vm1196 = vcmask 261120
        %v1198 = vsel %vm1196, %v1165, %v998
        %v1200 = vsel %vm1196, %v1167, %v1000
        %v1202 = vsel %vm1196, %v1169, %v1002
        %v1204 = vsel %vm1196, %v1171, %v1004
        %v1206 = vsel %vm1196, %v1173, %v1006
        %v1208 = vsel %vm1196, %v1175, %v1008
        %v1210 = vsel %vm1196, %v1177, %v1010
        %v1212 = vsel %vm1196, %v1179, %v1012
        %v1214 = vsel %vm1196, %v1181, %v1014
        %v1216 = vsel %vm1196, %v1183, %v1016
        %v1218 = vsel %vm1196, %v1185, %v1018
        %v1220 = vsel %vm1196, %v1187, %v1020
        %v1222 = vsel %vm1196, %v1189, %v1022
        %v1224 = vsel %vm1196, %v1191, %v1024
        %v1226 = vsel %vm1196, %v1193, %v1026
        %v1228 = vsel %vm1196, %v1195, %v1028
        %vm1229 = vcmask 326656
        %v1231 = vsel %vm1229, %v1198, %v1066
        %v1233 = vsel %vm1229, %v1200, %v1068
        %v1235 = vsel %vm1229, %v1202, %v1070
        %v1237 = vsel %vm1229, %v1204, %v1072
        %v1239 = vsel %vm1229, %v1206, %v1074
        %v1241 = vsel %vm1229, %v1208, %v1076
        %v1243 = vsel %vm1229, %v1210, %v1078
        %v1245 = vsel %vm1229, %v1212, %v1080
        %v1247 = vsel %vm1229, %v1214, %v1082
        %v1249 = vsel %vm1229, %v1216, %v1084
        %v1251 = vsel %vm1229, %v1218, %v1086
        %v1253 = vsel %vm1229, %v1220, %v1088
        %v1255 = vsel %vm1229, %v1222, %v1090
        %v1257 = vsel %vm1229, %v1224, %v1092
        %v1259 = vsel %vm1229, %v1226, %v1094
        %v1261 = vsel %vm1229, %v1228, %v1096
        %v1262 = vld [vmem:[#allocation8] sm:$0xf]
        %v1263 = vld [vmem:[#allocation8 + $0x4] sm:$0xf]
        %v1264 = vld [vmem:[#allocation8 + $0x8] sm:$0xf]
        %v1265 = vld [vmem:[#allocation8 + $0xc] sm:$0xf]
        %v1266 = vld [vmem:[#allocation8 + $0x10] sm:$0xf]
        %v1267 = vld [vmem:[#allocation8 + $0x14] sm:$0xf]
        %s1268 = scalar_lea.vmem [#allocation8], 24
        %v1269 = vld [vmem:[%s1268] sm:$0xf]
        %v1270 = vld [vmem:[%s1268 + $0x4] sm:$0xf]
        %v1271 = vld [vmem:[%s1268 + $0x8] sm:$0xf]
        %v1272 = vld [vmem:[%s1268 + $0xc] sm:$0xf]
        %v1273 = vld [vmem:[%s1268 + $0x10] sm:$0xf]
        %v1274 = vld [vmem:[%s1268 + $0x14] sm:$0xf]
        %v1281 = vunpack.c.l.b16 %v1269
        %v1282 = vunpack.c.l.b16 %v1270
        %v1283 = vunpack.c.l.b16 %v1271
        %v1284 = vunpack.c.l.b16 %v1272
        %v1285 = vunpack.c.l.b16 %v1273
        %v1286 = vunpack.c.l.b16 %v1274
        %v1287 = vpack.c.b16 %v1282, %v1281
        %v1288 = vpack.c.b16 %v1284, %v1283
        %v1289 = vpack.c.b16 %v1286, %v1285
        %vm1293 = vcmask 392192
        %v1294 = vsel %vm1293, %v1233, 0
        %v1296 = vsel %vm1293, %v1235, 0
        %v1298 = vsel %vm1293, %v1237, 0
        %v1300 = vsel %vm1293, %v1239, 0
        %v1302 = vsel %vm1293, %v1241, 0
        %v1304 = vsel %vm1293, %v1243, 0
        %v1306 = vsel %vm1293, %v1245, 0
        %v1308 = vsel %vm1293, %v1247, 0
        %v1310 = vsel %vm1293, %v1249, 0
        %v1312 = vsel %vm1293, %v1251, 0
        %v1314 = vsel %vm1293, %v1253, 0
        %v1316 = vsel %vm1293, %v1255, 0
        %v1318 = vsel %vm1293, %v1257, 0
        %v1320 = vsel %vm1293, %v1259, 0
        %1322 = vmatprep.subr.bf16.mxu0 0
        %1323 = vmatpush1.bf16.msra.mxu0 %v1287
        %1324 = vmatprep.subr.bf16.mxu0 0
        %1325 = vmatpush1.bf16.msra.mxu0 %v1288
        %1326 = vmatprep.subr.bf16.mxu0 0
        %1327 = vmatpush1.bf16.msra.mxu0 %v1289
        %1328 = vmatprep.subr.bf16.mxu0 0
        %1329 = vmatpush1.bf16.msra.mxu0 0
        %1330 = vmatprep.subr.bf16.mxu0 0
        %1331 = vmatpush1.bf16.msra.mxu0 0
        %1332 = vmatprep.subr.bf16.mxu0 0
        %1333 = vmatpush1.bf16.msra.mxu0 0
        %1334 = vmatprep.subr.bf16.mxu0 0
        %1335 = vmatpush1.bf16.msra.mxu0 0
        %1336 = vmatprep.subr.bf16.mxu0 0
        %1337 = vmatpush1.bf16.msra.mxu0 0
        %1338 = vmatprep.subr.bf16.mxu0 0
        %1339 = vmatpush1.bf16.msra.mxu0 0
        %1340 = vmatprep.subr.bf16.mxu0 0
        %1341 = vmatpush1.bf16.msra.mxu0 0
        %1342 = vmatprep.subr.bf16.mxu0 0
        %1343 = vmatpush1.bf16.msra.mxu0 0
        %1344 = vmatprep.subr.bf16.mxu0 0
        %1345 = vmatpush1.bf16.msra.mxu0 0
        %1346 = vmatprep.subr.bf16.mxu0 0
        %1347 = vmatpush1.bf16.msra.mxu0 0
        %1348 = vmatprep.subr.bf16.mxu0 0
        %1349 = vmatpush1.bf16.msra.mxu0 0
        %1350 = vmatprep.subr.bf16.mxu0 0
        %1351 = vmatpush1.bf16.msra.mxu0 0
        %1352 = vmatprep.subr.bf16.mxu0 0
        %1353 = vmatpush1.bf16.msra.mxu0 0
        %1354 = vmatprep.mubr.bf16.mxu0 0
        %1355 = vmatmul.mubr.bf16.gmra.mrb[0].mxu0 %v1294
        %v1356 = vpop.f32.mrb[0].mxu0
        %v1357 = vadd.f32 0.0, %v1356
        %v1358 = vpop.f32.mrb[0].mxu0
        %v1359 = vpop.f32.mrb[0].mxu0
        %v1360 = vadd.f32 0.0, %v1359
        %v1361 = vpop.f32.mrb[0].mxu0
        %1362 = vmatprep.mubr.bf16.mxu0 0
        %1363 = vmatmul.mubr.bf16.gmra.mrb[0].mxu0 %v1296
        %v1364 = vpop.f32.mrb[0].mxu0
        %v1365 = vadd.f32 0.0, %v1364
        %v1366 = vpop.f32.mrb[0].mxu0
        %v1367 = vpop.f32.mrb[0].mxu0
        %v1368 = vadd.f32 0.0, %v1367
        %v1369 = vpop.f32.mrb[0].mxu0
        %1370 = vmatprep.mubr.bf16.mxu0 0
        %1371 = vmatmul.mubr.bf16.gmra.mrb[0].mxu0 %v1298
        %v1372 = vpop.f32.mrb[0].mxu0
        %v1373 = vadd.f32 0.0, %v1372
        %v1374 = vpop.f32.mrb[0].mxu0
        %v1375 = vpop.f32.mrb[0].mxu0
        %v1376 = vadd.f32 0.0, %v1375
        %v1377 = vpop.f32.mrb[0].mxu0
        %1378 = vmatprep.mubr.bf16.mxu0 0
        %1379 = vmatmul.mubr.bf16.gmra.mrb[0].mxu0 %v1300
        %v1380 = vpop.f32.mrb[0].mxu0
        %v1381 = vadd.f32 0.0, %v1380
        %v1382 = vpop.f32.mrb[0].mxu0
        %v1383 = vpop.f32.mrb[0].mxu0
        %v1384 = vadd.f32 0.0, %v1383
        %v1385 = vpop.f32.mrb[0].mxu0
        %1386 = vmatprep.mubr.bf16.mxu0 0
        %1387 = vmatmul.mubr.bf16.gmra.mrb[0].mxu0 %v1302
        %v1388 = vpop.f32.mrb[0].mxu0
        %v1389 = vadd.f32 0.0, %v1388
        %v1390 = vpop.f32.mrb[0].mxu0
        %v1391 = vpop.f32.mrb[0].mxu0
        %v1392 = vadd.f32 0.0, %v1391
        %v1393 = vpop.f32.mrb[0].mxu0
        %1394 = vmatprep.mubr.bf16.mxu0 0
        %1395 = vmatmul.mubr.bf16.gmra.mrb[0].mxu0 %v1304
        %v1396 = vpop.f32.mrb[0].mxu0
        %v1397 = vadd.f32 0.0, %v1396
        %v1398 = vpop.f32.mrb[0].mxu0
        %v1399 = vpop.f32.mrb[0].mxu0
        %v1400 = vadd.f32 0.0, %v1399
        %v1401 = vpop.f32.mrb[0].mxu0
        %1402 = vmatprep.mubr.bf16.mxu0 0
        %1403 = vmatmul.mubr.bf16.gmra.mrb[0].mxu0 %v1306
        %v1404 = vpop.f32.mrb[0].mxu0
        %v1405 = vadd.f32 0.0, %v1404
        %v1406 = vpop.f32.mrb[0].mxu0
        %v1407 = vpop.f32.mrb[0].mxu0
        %v1408 = vadd.f32 0.0, %v1407
        %v1409 = vpop.f32.mrb[0].mxu0
        %1410 = vmatprep.mubr.bf16.mxu0 0
        %1411 = vmatmul.mubr.bf16.gmra.mrb[0].mxu0 %v1308
        %v1412 = vpop.f32.mrb[0].mxu0
        %v1413 = vadd.f32 0.0, %v1412
        %v1414 = vpop.f32.mrb[0].mxu0
        %v1415 = vpop.f32.mrb[0].mxu0
        %v1416 = vadd.f32 0.0, %v1415
        %v1417 = vpop.f32.mrb[0].mxu0
        %1418 = vmatprep.mubr.bf16.mxu0 0
        %1419 = vmatmul.mubr.bf16.gmra.mrb[0].mxu0 %v1310
        %v1420 = vpop.f32.mrb[0].mxu0
        %v1421 = vadd.f32 0.0, %v1420
        %v1422 = vpop.f32.mrb[0].mxu0
        %v1423 = vpop.f32.mrb[0].mxu0
        %v1424 = vadd.f32 0.0, %v1423
        %v1425 = vpop.f32.mrb[0].mxu0
        %1426 = vmatprep.mubr.bf16.mxu0 0
        %1427 = vmatmul.mubr.bf16.gmra.mrb[0].mxu0 %v1312
        %v1428 = vpop.f32.mrb[0].mxu0
        %v1429 = vadd.f32 0.0, %v1428
        %v1430 = vpop.f32.mrb[0].mxu0
        %v1431 = vpop.f32.mrb[0].mxu0
        %v1432 = vadd.f32 0.0, %v1431
        %v1433 = vpop.f32.mrb[0].mxu0
        %1434 = vmatprep.mubr.bf16.mxu0 0
        %1435 = vmatmul.mubr.bf16.gmra.mrb[0].mxu0 %v1314
        %v1436 = vpop.f32.mrb[0].mxu0
        %v1437 = vadd.f32 0.0, %v1436
        %v1438 = vpop.f32.mrb[0].mxu0
        %v1439 = vpop.f32.mrb[0].mxu0
        %v1440 = vadd.f32 0.0, %v1439
        %v1441 = vpop.f32.mrb[0].mxu0
        %1442 = vmatprep.mubr.bf16.mxu0 0
        %1443 = vmatmul.mubr.bf16.gmra.mrb[0].mxu0 %v1316
        %v1444 = vpop.f32.mrb[0].mxu0
        %v1445 = vadd.f32 0.0, %v1444
        %v1446 = vpop.f32.mrb[0].mxu0
        %v1447 = vpop.f32.mrb[0].mxu0
        %v1448 = vadd.f32 0.0, %v1447
        %v1449 = vpop.f32.mrb[0].mxu0
        %1450 = vmatprep.mubr.bf16.mxu0 0
        %1451 = vmatmul.mubr.bf16.gmra.mrb[0].mxu0 %v1318
        %v1452 = vpop.f32.mrb[0].mxu0
        %v1453 = vadd.f32 0.0, %v1452
        %v1454 = vpop.f32.mrb[0].mxu0
        %v1455 = vpop.f32.mrb[0].mxu0
        %v1456 = vadd.f32 0.0, %v1455
        %v1457 = vpop.f32.mrb[0].mxu0
        %1458 = vmatprep.mubr.bf16.mxu0 0
        %1459 = vmatmul.mubr.bf16.gmra.mrb[0].mxu0 %v1320
        %v1460 = vpop.f32.mrb[0].mxu0
        %v1461 = vadd.f32 0.0, %v1460
        %v1462 = vpop.f32.mrb[0].mxu0
        %v1463 = vpop.f32.mrb[0].mxu0
        %v1464 = vadd.f32 0.0, %v1463
        %v1465 = vpop.f32.mrb[0].mxu0
        %1466 = vdwg.mxu0
        %v1473 = vunpack.c.l.b16 %v1262
        %v1474 = vunpack.c.l.b16 %v1263
        %v1475 = vunpack.c.l.b16 %v1264
        %v1476 = vunpack.c.l.b16 %v1265
        %v1477 = vunpack.c.l.b16 %v1266
        %v1478 = vunpack.c.l.b16 %v1267
        %v1479 = vpack.c.b16 %v1474, %v1473
        %v1480 = vpack.c.b16 %v1476, %v1475
        %v1481 = vpack.c.b16 %v1478, %v1477
        %v1485 = vsel %vm1293, %v1231, 0
        %1487 = vmatprep.subr.bf16.mxu0 0
        %1488 = vmatpush1.bf16.msra.mxu0 %v1479
        %1489 = vmatprep.subr.bf16.mxu0 0
        %1490 = vmatpush1.bf16.msra.mxu0 %v1480
        %1491 = vmatprep.subr.bf16.mxu0 0
        %1492 = vmatpush1.bf16.msra.mxu0 %v1481
        %1493 = vmatprep.subr.bf16.mxu0 0
        %1494 = vmatpush1.bf16.msra.mxu0 0
        %1495 = vmatprep.subr.bf16.mxu0 0
        %1496 = vmatpush1.bf16.msra.mxu0 0
        %1497 = vmatprep.subr.bf16.mxu0 0
        %1498 = vmatpush1.bf16.msra.mxu0 0
        %1499 = vmatprep.subr.bf16.mxu0 0
        %1500 = vmatpush1.bf16.msra.mxu0 0
        %1501 = vmatprep.subr.bf16.mxu0 0
        %1502 = vmatpush1.bf16.msra.mxu0 0
        %1503 = vmatprep.subr.bf16.mxu0 0
        %1504 = vmatpush1.bf16.msra.mxu0 0
        %1505 = vmatprep.subr.bf16.mxu0 0
        %1506 = vmatpush1.bf16.msra.mxu0 0
        %1507 = vmatprep.subr.bf16.mxu0 0
        %1508 = vmatpush1.bf16.msra.mxu0 0
        %1509 = vmatprep.subr.bf16.mxu0 0
        %1510 = vmatpush1.bf16.msra.mxu0 0
        %1511 = vmatprep.subr.bf16.mxu0 0
        %1512 = vmatpush1.bf16.msra.mxu0 0
        %1513 = vmatprep.subr.bf16.mxu0 0
        %1514 = vmatpush1.bf16.msra.mxu0 0
        %1515 = vmatprep.subr.bf16.mxu0 0
        %1516 = vmatpush1.bf16.msra.mxu0 0
        %1517 = vmatprep.subr.bf16.mxu0 0
        %1518 = vmatpush1.bf16.msra.mxu0 0
        %1519 = vmatprep.mubr.bf16.mxu0 0
        %1520 = vmatmul.mubr.bf16.gmra.mrb[0].mxu0 %v1485
        %v1521 = vpop.f32.mrb[0].mxu0
        %v1522 = vadd.f32 %v1357, %v1521
        %v1523 = vpop.f32.mrb[0].mxu0
        %v1524 = vpop.f32.mrb[0].mxu0
        %v1525 = vadd.f32 %v1360, %v1524
        %v1526 = vpop.f32.mrb[0].mxu0
        %1527 = vmatprep.mubr.bf16.mxu0 0
        %1528 = vmatmul.mubr.bf16.gmra.mrb[0].mxu0 %v1294
        %v1529 = vpop.f32.mrb[0].mxu0
        %v1530 = vadd.f32 %v1365, %v1529
        %v1531 = vpop.f32.mrb[0].mxu0
        %v1532 = vpop.f32.mrb[0].mxu0
        %v1533 = vadd.f32 %v1368, %v1532
        %v1534 = vpop.f32.mrb[0].mxu0
        %1535 = vmatprep.mubr.bf16.mxu0 0
        %1536 = vmatmul.mubr.bf16.gmra.mrb[0].mxu0 %v1296
        %v1537 = vpop.f32.mrb[0].mxu0
        %v1538 = vadd.f32 %v1373, %v1537
        %v1539 = vpop.f32.mrb[0].mxu0
        %v1540 = vpop.f32.mrb[0].mxu0
        %v1541 = vadd.f32 %v1376, %v1540
        %v1542 = vpop.f32.mrb[0].mxu0
        %1543 = vmatprep.mubr.bf16.mxu0 0
        %1544 = vmatmul.mubr.bf16.gmra.mrb[0].mxu0 %v1298
        %v1545 = vpop.f32.mrb[0].mxu0
        %v1546 = vadd.f32 %v1381, %v1545
        %v1547 = vpop.f32.mrb[0].mxu0
        %v1548 = vpop.f32.mrb[0].mxu0
        %v1549 = vadd.f32 %v1384, %v1548
        %v1550 = vpop.f32.mrb[0].mxu0
        %1551 = vmatprep.mubr.bf16.mxu0 0
        %1552 = vmatmul.mubr.bf16.gmra.mrb[0].mxu0 %v1300
        %v1553 = vpop.f32.mrb[0].mxu0
        %v1554 = vadd.f32 %v1389, %v1553
        %v1555 = vpop.f32.mrb[0].mxu0
        %v1556 = vpop.f32.mrb[0].mxu0
        %v1557 = vadd.f32 %v1392, %v1556
        %v1558 = vpop.f32.mrb[0].mxu0
        %1559 = vmatprep.mubr.bf16.mxu0 0
        %1560 = vmatmul.mubr.bf16.gmra.mrb[0].mxu0 %v1302
        %v1561 = vpop.f32.mrb[0].mxu0
        %v1562 = vadd.f32 %v1397, %v1561
        %v1563 = vpop.f32.mrb[0].mxu0
        %v1564 = vpop.f32.mrb[0].mxu0
        %v1565 = vadd.f32 %v1400, %v1564
        %v1566 = vpop.f32.mrb[0].mxu0
        %1567 = vmatprep.mubr.bf16.mxu0 0
        %1568 = vmatmul.mubr.bf16.gmra.mrb[0].mxu0 %v1304
        %v1569 = vpop.f32.mrb[0].mxu0
        %v1570 = vadd.f32 %v1405, %v1569
        %v1571 = vpop.f32.mrb[0].mxu0
        %v1572 = vpop.f32.mrb[0].mxu0
        %v1573 = vadd.f32 %v1408, %v1572
        %v1574 = vpop.f32.mrb[0].mxu0
        %1575 = vmatprep.mubr.bf16.mxu0 0
        %1576 = vmatmul.mubr.bf16.gmra.mrb[0].mxu0 %v1306
        %v1577 = vpop.f32.mrb[0].mxu0
        %v1578 = vadd.f32 %v1413, %v1577
        %v1579 = vpop.f32.mrb[0].mxu0
        %v1580 = vpop.f32.mrb[0].mxu0
        %v1581 = vadd.f32 %v1416, %v1580
        %v1582 = vpop.f32.mrb[0].mxu0
        %1583 = vmatprep.mubr.bf16.mxu0 0
        %1584 = vmatmul.mubr.bf16.gmra.mrb[0].mxu0 %v1308
        %v1585 = vpop.f32.mrb[0].mxu0
        %v1586 = vadd.f32 %v1421, %v1585
        %v1587 = vpop.f32.mrb[0].mxu0
        %v1588 = vpop.f32.mrb[0].mxu0
        %v1589 = vadd.f32 %v1424, %v1588
        %v1590 = vpop.f32.mrb[0].mxu0
        %1591 = vmatprep.mubr.bf16.mxu0 0
        %1592 = vmatmul.mubr.bf16.gmra.mrb[0].mxu0 %v1310
        %v1593 = vpop.f32.mrb[0].mxu0
        %v1594 = vadd.f32 %v1429, %v1593
        %v1595 = vpop.f32.mrb[0].mxu0
        %v1596 = vpop.f32.mrb[0].mxu0
        %v1597 = vadd.f32 %v1432, %v1596
        %v1598 = vpop.f32.mrb[0].mxu0
        %1599 = vmatprep.mubr.bf16.mxu0 0
        %1600 = vmatmul.mubr.bf16.gmra.mrb[0].mxu0 %v1312
        %v1601 = vpop.f32.mrb[0].mxu0
        %v1602 = vadd.f32 %v1437, %v1601
        %v1603 = vpop.f32.mrb[0].mxu0
        %v1604 = vpop.f32.mrb[0].mxu0
        %v1605 = vadd.f32 %v1440, %v1604
        %v1606 = vpop.f32.mrb[0].mxu0
        %1607 = vmatprep.mubr.bf16.mxu0 0
        %1608 = vmatmul.mubr.bf16.gmra.mrb[0].mxu0 %v1314
        %v1609 = vpop.f32.mrb[0].mxu0
        %v1610 = vadd.f32 %v1445, %v1609
        %v1611 = vpop.f32.mrb[0].mxu0
        %v1612 = vpop.f32.mrb[0].mxu0
        %v1613 = vadd.f32 %v1448, %v1612
        %v1614 = vpop.f32.mrb[0].mxu0
        %1615 = vmatprep.mubr.bf16.mxu0 0
        %1616 = vmatmul.mubr.bf16.gmra.mrb[0].mxu0 %v1316
        %v1617 = vpop.f32.mrb[0].mxu0
        %v1618 = vadd.f32 %v1453, %v1617
        %v1619 = vpop.f32.mrb[0].mxu0
        %v1620 = vpop.f32.mrb[0].mxu0
        %v1621 = vadd.f32 %v1456, %v1620
        %v1622 = vpop.f32.mrb[0].mxu0
        %1623 = vmatprep.mubr.bf16.mxu0 0
        %1624 = vmatmul.mubr.bf16.gmra.mrb[0].mxu0 %v1318
        %v1625 = vpop.f32.mrb[0].mxu0
        %v1626 = vadd.f32 %v1461, %v1625
        %v1627 = vpop.f32.mrb[0].mxu0
        %v1628 = vpop.f32.mrb[0].mxu0
        %v1629 = vadd.f32 %v1464, %v1628
        %v1630 = vpop.f32.mrb[0].mxu0
        %1631 = vdwg.mxu0
        %s1632 = scalar_lea.vmem [#allocation8], 48
        %v1633 = vld [vmem:[%s1632] sm:$0xf]
        %v1634 = vld [vmem:[%s1632 + $0x4] sm:$0xf]
        %v1635 = vld [vmem:[%s1632 + $0x8] sm:$0xf]
        %v1636 = vld [vmem:[%s1632 + $0xc] sm:$0xf]
        %v1637 = vld [vmem:[%s1632 + $0x10] sm:$0xf]
        %v1638 = vld [vmem:[%s1632 + $0x14] sm:$0xf]
        %v1645 = vunpack.c.l.b16 %v1633
        %v1646 = vunpack.c.l.b16 %v1634
        %v1647 = vunpack.c.l.b16 %v1635
        %v1648 = vunpack.c.l.b16 %v1636
        %v1649 = vunpack.c.l.b16 %v1637
        %v1650 = vunpack.c.l.b16 %v1638
        %v1651 = vpack.c.b16 %v1646, %v1645
        %v1652 = vpack.c.b16 %v1648, %v1647
        %v1653 = vpack.c.b16 %v1650, %v1649
        %v1657 = vsel %vm1293, %v1261, 0
        %1659 = vmatprep.subr.bf16.mxu0 0
        %1660 = vmatpush1.bf16.msra.mxu0 %v1651
        %1661 = vmatprep.subr.bf16.mxu0 0
        %1662 = vmatpush1.bf16.msra.mxu0 %v1652
        %1663 = vmatprep.subr.bf16.mxu0 0
        %1664 = vmatpush1.bf16.msra.mxu0 %v1653
        %1665 = vmatprep.subr.bf16.mxu0 0
        %1666 = vmatpush1.bf16.msra.mxu0 0
        %1667 = vmatprep.subr.bf16.mxu0 0
        %1668 = vmatpush1.bf16.msra.mxu0 0
        %1669 = vmatprep.subr.bf16.mxu0 0
        %1670 = vmatpush1.bf16.msra.mxu0 0
        %1671 = vmatprep.subr.bf16.mxu0 0
        %1672 = vmatpush1.bf16.msra.mxu0 0
        %1673 = vmatprep.subr.bf16.mxu0 0
        %1674 = vmatpush1.bf16.msra.mxu0 0
        %1675 = vmatprep.subr.bf16.mxu0 0
        %1676 = vmatpush1.bf16.msra.mxu0 0
        %1677 = vmatprep.subr.bf16.mxu0 0
        %1678 = vmatpush1.bf16.msra.mxu0 0
        %1679 = vmatprep.subr.bf16.mxu0 0
        %1680 = vmatpush1.bf16.msra.mxu0 0
        %1681 = vmatprep.subr.bf16.mxu0 0
        %1682 = vmatpush1.bf16.msra.mxu0 0
        %1683 = vmatprep.subr.bf16.mxu0 0
        %1684 = vmatpush1.bf16.msra.mxu0 0
        %1685 = vmatprep.subr.bf16.mxu0 0
        %1686 = vmatpush1.bf16.msra.mxu0 0
        %1687 = vmatprep.subr.bf16.mxu0 0
        %1688 = vmatpush1.bf16.msra.mxu0 0
        %1689 = vmatprep.subr.bf16.mxu0 0
        %1690 = vmatpush1.bf16.msra.mxu0 0
        %1691 = vmatprep.mubr.bf16.mxu0 0
        %1692 = vmatmul.mubr.bf16.gmra.mrb[0].mxu0 %v1296
        %v1693 = vpop.f32.mrb[0].mxu0
        %v1694 = vadd.f32 0.0, %v1693
        %v1695 = vpop.f32.mrb[0].mxu0
        %v1696 = vpop.f32.mrb[0].mxu0
        %v1697 = vadd.f32 0.0, %v1696
        %v1698 = vpop.f32.mrb[0].mxu0
        %1699 = vmatprep.mubr.bf16.mxu0 0
        %1700 = vmatmul.mubr.bf16.gmra.mrb[0].mxu0 %v1298
        %v1701 = vpop.f32.mrb[0].mxu0
        %v1702 = vadd.f32 0.0, %v1701
        %v1703 = vpop.f32.mrb[0].mxu0
        %v1704 = vpop.f32.mrb[0].mxu0
        %v1705 = vadd.f32 0.0, %v1704
        %v1706 = vpop.f32.mrb[0].mxu0
        %1707 = vmatprep.mubr.bf16.mxu0 0
        %1708 = vmatmul.mubr.bf16.gmra.mrb[0].mxu0 %v1300
        %v1709 = vpop.f32.mrb[0].mxu0
        %v1710 = vadd.f32 0.0, %v1709
        %v1711 = vpop.f32.mrb[0].mxu0
        %v1712 = vpop.f32.mrb[0].mxu0
        %v1713 = vadd.f32 0.0, %v1712
        %v1714 = vpop.f32.mrb[0].mxu0
        %1715 = vmatprep.mubr.bf16.mxu0 0
        %1716 = vmatmul.mubr.bf16.gmra.mrb[0].mxu0 %v1302
        %v1717 = vpop.f32.mrb[0].mxu0
        %v1718 = vadd.f32 0.0, %v1717
        %v1719 = vpop.f32.mrb[0].mxu0
        %v1720 = vpop.f32.mrb[0].mxu0
        %v1721 = vadd.f32 0.0, %v1720
        %v1722 = vpop.f32.mrb[0].mxu0
        %1723 = vmatprep.mubr.bf16.mxu0 0
        %1724 = vmatmul.mubr.bf16.gmra.mrb[0].mxu0 %v1304
        %v1725 = vpop.f32.mrb[0].mxu0
        %v1726 = vadd.f32 0.0, %v1725
        %v1727 = vpop.f32.mrb[0].mxu0
        %v1728 = vpop.f32.mrb[0].mxu0
        %v1729 = vadd.f32 0.0, %v1728
        %v1730 = vpop.f32.mrb[0].mxu0
        %1731 = vmatprep.mubr.bf16.mxu0 0
        %1732 = vmatmul.mubr.bf16.gmra.mrb[0].mxu0 %v1306
        %v1733 = vpop.f32.mrb[0].mxu0
        %v1734 = vadd.f32 0.0, %v1733
        %v1735 = vpop.f32.mrb[0].mxu0
        %v1736 = vpop.f32.mrb[0].mxu0
        %v1737 = vadd.f32 0.0, %v1736
        %v1738 = vpop.f32.mrb[0].mxu0
        %1739 = vmatprep.mubr.bf16.mxu0 0
        %1740 = vmatmul.mubr.bf16.gmra.mrb[0].mxu0 %v1308
        %v1741 = vpop.f32.mrb[0].mxu0
        %v1742 = vadd.f32 0.0, %v1741
        %v1743 = vpop.f32.mrb[0].mxu0
        %v1744 = vpop.f32.mrb[0].mxu0
        %v1745 = vadd.f32 0.0, %v1744
        %v1746 = vpop.f32.mrb[0].mxu0
        %1747 = vmatprep.mubr.bf16.mxu0 0
        %1748 = vmatmul.mubr.bf16.gmra.mrb[0].mxu0 %v1310
        %v1749 = vpop.f32.mrb[0].mxu0
        %v1750 = vadd.f32 0.0, %v1749
        %v1751 = vpop.f32.mrb[0].mxu0
        %v1752 = vpop.f32.mrb[0].mxu0
        %v1753 = vadd.f32 0.0, %v1752
        %v1754 = vpop.f32.mrb[0].mxu0
        %1755 = vmatprep.mubr.bf16.mxu0 0
        %1756 = vmatmul.mubr.bf16.gmra.mrb[0].mxu0 %v1312
        %v1757 = vpop.f32.mrb[0].mxu0
        %v1758 = vadd.f32 0.0, %v1757
        %v1759 = vpop.f32.mrb[0].mxu0
        %v1760 = vpop.f32.mrb[0].mxu0
        %v1761 = vadd.f32 0.0, %v1760
        %v1762 = vpop.f32.mrb[0].mxu0
        %1763 = vmatprep.mubr.bf16.mxu0 0
        %1764 = vmatmul.mubr.bf16.gmra.mrb[0].mxu0 %v1314
        %v1765 = vpop.f32.mrb[0].mxu0
        %v1766 = vadd.f32 0.0, %v1765
        %v1767 = vpop.f32.mrb[0].mxu0
        %v1768 = vpop.f32.mrb[0].mxu0
        %v1769 = vadd.f32 0.0, %v1768
        %v1770 = vpop.f32.mrb[0].mxu0
        %1771 = vmatprep.mubr.bf16.mxu0 0
        %1772 = vmatmul.mubr.bf16.gmra.mrb[0].mxu0 %v1316
        %v1773 = vpop.f32.mrb[0].mxu0
        %v1774 = vadd.f32 0.0, %v1773
        %v1775 = vpop.f32.mrb[0].mxu0
        %v1776 = vpop.f32.mrb[0].mxu0
        %v1777 = vadd.f32 0.0, %v1776
        %v1778 = vpop.f32.mrb[0].mxu0
        %1779 = vmatprep.mubr.bf16.mxu0 0
        %1780 = vmatmul.mubr.bf16.gmra.mrb[0].mxu0 %v1318
        %v1781 = vpop.f32.mrb[0].mxu0
        %v1782 = vadd.f32 0.0, %v1781
        %v1783 = vpop.f32.mrb[0].mxu0
        %v1784 = vpop.f32.mrb[0].mxu0
        %v1785 = vadd.f32 0.0, %v1784
        %v1786 = vpop.f32.mrb[0].mxu0
        %1787 = vmatprep.mubr.bf16.mxu0 0
        %1788 = vmatmul.mubr.bf16.gmra.mrb[0].mxu0 %v1320
        %v1789 = vpop.f32.mrb[0].mxu0
        %v1790 = vadd.f32 0.0, %v1789
        %v1791 = vpop.f32.mrb[0].mxu0
        %v1792 = vpop.f32.mrb[0].mxu0
        %v1793 = vadd.f32 0.0, %v1792
        %v1794 = vpop.f32.mrb[0].mxu0
        %1795 = vmatprep.mubr.bf16.mxu0 0
        %1796 = vmatmul.mubr.bf16.gmra.mrb[0].mxu0 %v1657
        %v1797 = vpop.f32.mrb[0].mxu0
        %v1798 = vadd.f32 0.0, %v1797
        %v1799 = vpop.f32.mrb[0].mxu0
        %v1800 = vpop.f32.mrb[0].mxu0
        %v1801 = vadd.f32 0.0, %v1800
        %v1802 = vpop.f32.mrb[0].mxu0
        %1803 = vdwg.mxu0
        %v1804 = vadd.f32 %v1522, %v1694
        %v1805 = vadd.f32 %v1525, %v1697
        %v1806 = vadd.f32 %v1530, %v1702
        %v1807 = vadd.f32 %v1533, %v1705
        %v1808 = vadd.f32 %v1538, %v1710
        %v1809 = vadd.f32 %v1541, %v1713
        %v1810 = vadd.f32 %v1546, %v1718
        %v1811 = vadd.f32 %v1549, %v1721
        %v1812 = vadd.f32 %v1554, %v1726
        %v1813 = vadd.f32 %v1557, %v1729
        %v1814 = vadd.f32 %v1562, %v1734
        %v1815 = vadd.f32 %v1565, %v1737
        %v1816 = vadd.f32 %v1570, %v1742
        %v1817 = vadd.f32 %v1573, %v1745
        %v1818 = vadd.f32 %v1578, %v1750
        %v1819 = vadd.f32 %v1581, %v1753
        %v1820 = vadd.f32 %v1586, %v1758
        %v1821 = vadd.f32 %v1589, %v1761
        %v1822 = vadd.f32 %v1594, %v1766
        %v1823 = vadd.f32 %v1597, %v1769
        %v1824 = vadd.f32 %v1602, %v1774
        %v1825 = vadd.f32 %v1605, %v1777
        %v1826 = vadd.f32 %v1610, %v1782
        %v1827 = vadd.f32 %v1613, %v1785
        %v1828 = vadd.f32 %v1618, %v1790
        %v1829 = vadd.f32 %v1621, %v1793
        %v1830 = vadd.f32 %v1626, %v1798
        %v1831 = vadd.f32 %v1629, %v1801
        %v1832 = vld [vmem:[#allocation9] sm:$0x1]
        %v1834 = vlaneseq
        %v1835 = vshrl.u32 %v1834, 7
        %v1836 = vsub.s32 0, %v1835
        %v1837 = vrot.slane %v1832, %v1836
        %v1839 = vadd.f32 %v1804, %v1837
        %v1840 = vadd.f32 %v1805, %v1837
        %v1841 = vadd.f32 %v1806, %v1837
        %v1842 = vadd.f32 %v1807, %v1837
        %v1843 = vadd.f32 %v1808, %v1837
        %v1844 = vadd.f32 %v1809, %v1837
        %v1845 = vadd.f32 %v1810, %v1837
        %v1846 = vadd.f32 %v1811, %v1837
        %v1847 = vadd.f32 %v1812, %v1837
        %v1848 = vadd.f32 %v1813, %v1837
        %v1849 = vadd.f32 %v1814, %v1837
        %v1850 = vadd.f32 %v1815, %v1837
        %v1851 = vadd.f32 %v1816, %v1837
        %v1852 = vadd.f32 %v1817, %v1837
        %v1853 = vadd.f32 %v1818, %v1837
        %v1854 = vadd.f32 %v1819, %v1837
        %v1855 = vadd.f32 %v1820, %v1837
        %v1856 = vadd.f32 %v1821, %v1837
        %v1857 = vadd.f32 %v1822, %v1837
        %v1858 = vadd.f32 %v1823, %v1837
        %v1859 = vadd.f32 %v1824, %v1837
        %v1860 = vadd.f32 %v1825, %v1837
        %v1861 = vadd.f32 %v1826, %v1837
        %v1862 = vadd.f32 %v1827, %v1837
        %v1863 = vadd.f32 %v1828, %v1837
        %v1864 = vadd.f32 %v1829, %v1837
        %v1865 = vadd.f32 %v1830, %v1837
        %v1866 = vadd.f32 %v1831, %v1837
        %v1867 = vmax.f32 %v1839, 0.0
        %v1868 = vmax.f32 %v1840, 0.0
        %v1869 = vmax.f32 %v1841, 0.0
        %v1870 = vmax.f32 %v1842, 0.0
        %v1871 = vmax.f32 %v1843, 0.0
        %v1872 = vmax.f32 %v1844, 0.0
        %v1873 = vmax.f32 %v1845, 0.0
        %v1874 = vmax.f32 %v1846, 0.0
        %v1875 = vmax.f32 %v1847, 0.0
        %v1876 = vmax.f32 %v1848, 0.0
        %v1877 = vmax.f32 %v1849, 0.0
        %v1878 = vmax.f32 %v1850, 0.0
        %v1879 = vmax.f32 %v1851, 0.0
        %v1880 = vmax.f32 %v1852, 0.0
        %v1881 = vmax.f32 %v1853, 0.0
        %v1882 = vmax.f32 %v1854, 0.0
        %v1883 = vmax.f32 %v1855, 0.0
        %v1884 = vmax.f32 %v1856, 0.0
        %v1885 = vmax.f32 %v1857, 0.0
        %v1886 = vmax.f32 %v1858, 0.0
        %v1887 = vmax.f32 %v1859, 0.0
        %v1888 = vmax.f32 %v1860, 0.0
        %v1889 = vmax.f32 %v1861, 0.0
        %v1890 = vmax.f32 %v1862, 0.0
        %v1891 = vmax.f32 %v1863, 0.0
        %v1892 = vmax.f32 %v1864, 0.0
        %v1893 = vmax.f32 %v1865, 0.0
        %v1894 = vmax.f32 %v1866, 0.0
        %v1895 = vpack.c.bf16 %v1868, %v1867
        %v1896 = vpack.c.bf16 %v1870, %v1869
        %v1897 = vpack.c.bf16 %v1872, %v1871
        %v1898 = vpack.c.bf16 %v1874, %v1873
        %v1899 = vpack.c.bf16 %v1876, %v1875
        %v1900 = vpack.c.bf16 %v1878, %v1877
        %v1901 = vpack.c.bf16 %v1880, %v1879
        %v1902 = vpack.c.bf16 %v1882, %v1881
        %v1903 = vpack.c.bf16 %v1884, %v1883
        %v1904 = vpack.c.bf16 %v1886, %v1885
        %v1905 = vpack.c.bf16 %v1888, %v1887
        %v1906 = vpack.c.bf16 %v1890, %v1889
        %v1907 = vpack.c.bf16 %v1892, %v1891
        %v1908 = vpack.c.bf16 %v1894, %v1893
        %v1923 = vunpack.c.l.b16 %v1895
        %v1924 = vunpack.c.h.b16 %v1895
        %v1925 = vunpack.c.l.b16 %v1896
        %v1926 = vunpack.c.h.b16 %v1896
        %v1927 = vunpack.c.l.b16 %v1897
        %v1928 = vunpack.c.h.b16 %v1897
        %v1929 = vunpack.c.l.b16 %v1898
        %v1930 = vunpack.c.h.b16 %v1898
        %v1931 = vunpack.c.l.b16 %v1899
        %v1932 = vunpack.c.h.b16 %v1899
        %v1933 = vunpack.c.l.b16 %v1900
        %v1934 = vunpack.c.h.b16 %v1900
        %v1935 = vunpack.c.l.b16 %v1901
        %v1936 = vunpack.c.h.b16 %v1901
        %v1937 = vunpack.c.l.b16 %v1902
        %v1938 = vunpack.c.h.b16 %v1902
        %v1939 = vunpack.c.l.b16 %v1903
        %v1940 = vunpack.c.h.b16 %v1903
        %v1941 = vunpack.c.l.b16 %v1904
        %v1942 = vunpack.c.h.b16 %v1904
        %v1943 = vunpack.c.l.b16 %v1905
        %v1944 = vunpack.c.h.b16 %v1905
        %v1945 = vunpack.c.l.b16 %v1906
        %v1946 = vunpack.c.h.b16 %v1906
        %v1947 = vunpack.c.l.b16 %v1907
        %v1948 = vunpack.c.h.b16 %v1907
        %v1949 = vunpack.c.l.b16 %v1908
        %v1950 = vunpack.c.h.b16 %v1908
        %v1951 = vpack.c.b16 %v1923, %v1923
        %v1952 = vpack.c.b16 %v1924, %v1924
        %v1953 = vpack.c.b16 %v1925, %v1925
        %v1954 = vpack.c.b16 %v1926, %v1926
        %v1955 = vpack.c.b16 %v1927, %v1927
        %v1956 = vpack.c.b16 %v1928, %v1928
        %v1957 = vpack.c.b16 %v1929, %v1929
        %v1958 = vpack.c.b16 %v1930, %v1930
        %v1959 = vpack.c.b16 %v1931, %v1931
        %v1960 = vpack.c.b16 %v1932, %v1932
        %v1961 = vpack.c.b16 %v1933, %v1933
        %v1962 = vpack.c.b16 %v1934, %v1934
        %v1963 = vpack.c.b16 %v1935, %v1935
        %v1964 = vpack.c.b16 %v1936, %v1936
        %v1965 = vpack.c.b16 %v1937, %v1937
        %v1966 = vpack.c.b16 %v1938, %v1938
        %v1967 = vpack.c.b16 %v1939, %v1939
        %v1968 = vpack.c.b16 %v1940, %v1940
        %v1969 = vpack.c.b16 %v1941, %v1941
        %v1970 = vpack.c.b16 %v1942, %v1942
        %v1971 = vpack.c.b16 %v1943, %v1943
        %v1972 = vpack.c.b16 %v1944, %v1944
        %v1973 = vpack.c.b16 %v1945, %v1945
        %v1974 = vpack.c.b16 %v1946, %v1946
        %v1975 = vpack.c.b16 %v1947, %v1947
        %v1976 = vpack.c.b16 %v1948, %v1948
        %v1977 = vpack.c.b16 %v1949, %v1949
        %v1978 = vpack.c.b16 %v1950, %v1950
        %vm2007 = vcmask 60416
        %2008 = vst.msk [vmem:[#allocation2] sm:$0xf] %vm2007, %v1951
        %2009 = vst.msk [vmem:[#allocation2 + $0x4] sm:$0xf] %vm2007, %v1952
        %2010 = vst.msk [vmem:[#allocation2 + $0x8] sm:$0xf] %vm2007, %v1953
        %2011 = vst.msk [vmem:[#allocation2 + $0xc] sm:$0xf] %vm2007, %v1954
        %2012 = vst.msk [vmem:[#allocation2 + $0x10] sm:$0xf] %vm2007, %v1955
        %2013 = vst.msk [vmem:[#allocation2 + $0x14] sm:$0xf] %vm2007, %v1956
        %2014 = vst.msk [vmem:[#allocation2 + $0x18] sm:$0xf] %vm2007, %v1957
        %2015 = vst.msk [vmem:[#allocation2 + $0x1c] sm:$0xf] %vm2007, %v1958
        %2016 = vst.msk [vmem:[#allocation2 + $0x20] sm:$0xf] %vm2007, %v1959
        %2017 = vst.msk [vmem:[#allocation2 + $0x24] sm:$0xf] %vm2007, %v1960
        %2018 = vst.msk [vmem:[#allocation2 + $0x28] sm:$0xf] %vm2007, %v1961
        %2019 = vst.msk [vmem:[#allocation2 + $0x2c] sm:$0xf] %vm2007, %v1962
        %2020 = vst.msk [vmem:[#allocation2 + $0x30] sm:$0xf] %vm2007, %v1963
        %2021 = vst.msk [vmem:[#allocation2 + $0x34] sm:$0xf] %vm2007, %v1964
        %2022 = vst.msk [vmem:[#allocation2 + $0x38] sm:$0xf] %vm2007, %v1965
        %2023 = vst.msk [vmem:[#allocation2 + $0x3c] sm:$0xf] %vm2007, %v1966
        %2024 = vst.msk [vmem:[#allocation2 + $0x40] sm:$0xf] %vm2007, %v1967
        %2025 = vst.msk [vmem:[#allocation2 + $0x44] sm:$0xf] %vm2007, %v1968
        %2026 = vst.msk [vmem:[#allocation2 + $0x48] sm:$0xf] %vm2007, %v1969
        %2027 = vst.msk [vmem:[#allocation2 + $0x4c] sm:$0xf] %vm2007, %v1970
        %2028 = vst.msk [vmem:[#allocation2 + $0x50] sm:$0xf] %vm2007, %v1971
        %2029 = vst.msk [vmem:[#allocation2 + $0x54] sm:$0xf] %vm2007, %v1972
        %2030 = vst.msk [vmem:[#allocation2 + $0x58] sm:$0xf] %vm2007, %v1973
        %2031 = vst.msk [vmem:[#allocation2 + $0x5c] sm:$0xf] %vm2007, %v1974
        %2032 = vst.msk [vmem:[#allocation2 + $0x60] sm:$0xf] %vm2007, %v1975
        %2033 = vst.msk [vmem:[#allocation2 + $0x64] sm:$0xf] %vm2007, %v1976
        %2034 = vst.msk [vmem:[#allocation2 + $0x68] sm:$0xf] %vm2007, %v1977
        %2035 = vst.msk [vmem:[#allocation2 + $0x6c] sm:$0xf] %vm2007, %v1978
        %2036 = vst.msk [vmem:[#allocation2 + $0x70] sm:$0xf] %vm2007, 0
        %v2037 = vld [vmem:[#allocation2] sm:$0xf]
        %v2038 = vld [vmem:[#allocation2 + $0x4] sm:$0xf]
        %v2039 = vld [vmem:[#allocation2 + $0x8] sm:$0xf]
        %v2040 = vld [vmem:[#allocation2 + $0xc] sm:$0xf]
        %v2041 = vld [vmem:[#allocation2 + $0x10] sm:$0xf]
        %v2042 = vld [vmem:[#allocation2 + $0x14] sm:$0xf]
        %v2043 = vld [vmem:[#allocation2 + $0x18] sm:$0xf]
        %v2044 = vld [vmem:[#allocation2 + $0x1c] sm:$0xf]
        %v2045 = vld [vmem:[#allocation2 + $0x20] sm:$0xf]
        %v2046 = vld [vmem:[#allocation2 + $0x24] sm:$0xf]
        %v2047 = vld [vmem:[#allocation2 + $0x28] sm:$0xf]
        %v2048 = vld [vmem:[#allocation2 + $0x2c] sm:$0xf]
        %v2049 = vld [vmem:[#allocation2 + $0x30] sm:$0xf]
        %v2050 = vld [vmem:[#allocation2 + $0x34] sm:$0xf]
        %v2051 = vld [vmem:[#allocation2 + $0x38] sm:$0xf]
        %v2052 = vld [vmem:[#allocation2 + $0x3c] sm:$0xf]
        %v2053 = vld [vmem:[#allocation2 + $0x40] sm:$0xf]
        %v2054 = vld [vmem:[#allocation2 + $0x44] sm:$0xf]
        %v2055 = vld [vmem:[#allocation2 + $0x48] sm:$0xf]
        %v2056 = vld [vmem:[#allocation2 + $0x4c] sm:$0xf]
        %v2057 = vld [vmem:[#allocation2 + $0x50] sm:$0xf]
        %v2058 = vld [vmem:[#allocation2 + $0x54] sm:$0xf]
        %v2059 = vld [vmem:[#allocation2 + $0x58] sm:$0xf]
        %v2060 = vld [vmem:[#allocation2 + $0x5c] sm:$0xf]
        %v2061 = vld [vmem:[#allocation2 + $0x60] sm:$0xf]
        %v2062 = vld [vmem:[#allocation2 + $0x64] sm:$0xf]
        %v2063 = vld [vmem:[#allocation2 + $0x68] sm:$0xf]
        %v2064 = vld [vmem:[#allocation2 + $0x6c] sm:$0xf]
        %v2065 = vld [vmem:[#allocation2 + $0x70] sm:$0x1]
        %v2066 = vld [vmem:[#allocation2] sm:$0xe]
        %v2095 = vunpack.c.l.b16 %v2037
        %v2096 = vunpack.c.l.b16 %v2038
        %v2097 = vunpack.c.l.b16 %v2039
        %v2098 = vunpack.c.l.b16 %v2040
        %v2099 = vunpack.c.l.b16 %v2041
        %v2100 = vunpack.c.l.b16 %v2042
        %v2101 = vunpack.c.l.b16 %v2043
        %v2102 = vunpack.c.l.b16 %v2044
        %v2103 = vunpack.c.l.b16 %v2045
        %v2104 = vunpack.c.l.b16 %v2046
        %v2105 = vunpack.c.l.b16 %v2047
        %v2106 = vunpack.c.l.b16 %v2048
        %v2107 = vunpack.c.l.b16 %v2049
        %v2108 = vunpack.c.l.b16 %v2050
        %v2109 = vunpack.c.l.b16 %v2051
        %v2110 = vunpack.c.l.b16 %v2052
        %v2111 = vunpack.c.l.b16 %v2053
        %v2112 = vunpack.c.l.b16 %v2054
        %v2113 = vunpack.c.l.b16 %v2055
        %v2114 = vunpack.c.l.b16 %v2056
        %v2115 = vunpack.c.l.b16 %v2057
        %v2116 = vunpack.c.l.b16 %v2058
        %v2117 = vunpack.c.l.b16 %v2059
        %v2118 = vunpack.c.l.b16 %v2060
        %v2119 = vunpack.c.l.b16 %v2061
        %v2120 = vunpack.c.l.b16 %v2062
        %v2121 = vunpack.c.l.b16 %v2063
        %v2122 = vunpack.c.l.b16 %v2064
        %v2123 = vpack.c.b16 %v2096, %v2095
        %v2124 = vpack.c.b16 %v2098, %v2097
        %v2125 = vpack.c.b16 %v2100, %v2099
        %v2126 = vpack.c.b16 %v2102, %v2101
        %v2127 = vpack.c.b16 %v2104, %v2103
        %v2128 = vpack.c.b16 %v2106, %v2105
        %v2129 = vpack.c.b16 %v2108, %v2107
        %v2130 = vpack.c.b16 %v2110, %v2109
        %v2131 = vpack.c.b16 %v2112, %v2111
        %v2132 = vpack.c.b16 %v2114, %v2113
        %v2133 = vpack.c.b16 %v2116, %v2115
        %v2134 = vpack.c.b16 %v2118, %v2117
        %v2135 = vpack.c.b16 %v2120, %v2119
        %v2136 = vpack.c.b16 %v2122, %v2121
        %v2138 = vunpack.c.l.b16 %v2065
        %v2139 = vpack.c.b16 %v2138, %v2138
        %v2141 = vshrl.u32 %v2123, 16
        %v2143 = vshll.u32 %v2123, 16
        %v2145 = vrot.slane %v2143, 1
        %v2146 = vor.u32 %v2141, %v2145
        %v2148 = vshll.u32 %v2124, 16
        %v2150 = vrot.slane %v2148, 1
        %v2151 = vsel %vm516, %v2146, %v2150
        %v2152 = vshrl.u32 %v2124, 16
        %v2154 = vor.u32 %v2152, %v2150
        %v2156 = vshll.u32 %v2125, 16
        %v2158 = vrot.slane %v2156, 1
        %v2159 = vsel %vm516, %v2154, %v2158
        %v2160 = vshrl.u32 %v2125, 16
        %v2162 = vor.u32 %v2160, %v2158
        %v2164 = vshll.u32 %v2126, 16
        %v2166 = vrot.slane %v2164, 1
        %v2167 = vsel %vm516, %v2162, %v2166
        %v2168 = vshrl.u32 %v2126, 16
        %v2170 = vor.u32 %v2168, %v2166
        %v2172 = vshll.u32 %v2127, 16
        %v2174 = vrot.slane %v2172, 1
        %v2175 = vsel %vm516, %v2170, %v2174
        %v2176 = vshrl.u32 %v2127, 16
        %v2178 = vor.u32 %v2176, %v2174
        %v2180 = vshll.u32 %v2128, 16
        %v2182 = vrot.slane %v2180, 1
        %v2183 = vsel %vm516, %v2178, %v2182
        %v2184 = vshrl.u32 %v2128, 16
        %v2186 = vor.u32 %v2184, %v2182
        %v2188 = vshll.u32 %v2129, 16
        %v2190 = vrot.slane %v2188, 1
        %v2191 = vsel %vm516, %v2186, %v2190
        %v2192 = vshrl.u32 %v2129, 16
        %v2194 = vor.u32 %v2192, %v2190
        %v2196 = vshll.u32 %v2130, 16
        %v2198 = vrot.slane %v2196, 1
        %v2199 = vsel %vm516, %v2194, %v2198
        %v2200 = vshrl.u32 %v2130, 16
        %v2202 = vor.u32 %v2200, %v2198
        %v2204 = vshll.u32 %v2131, 16
        %v2206 = vrot.slane %v2204, 1
        %v2207 = vsel %vm516, %v2202, %v2206
        %v2208 = vshrl.u32 %v2131, 16
        %v2210 = vor.u32 %v2208, %v2206
        %v2212 = vshll.u32 %v2132, 16
        %v2214 = vrot.slane %v2212, 1
        %v2215 = vsel %vm516, %v2210, %v2214
        %v2216 = vshrl.u32 %v2132, 16
        %v2218 = vor.u32 %v2216, %v2214
        %v2220 = vshll.u32 %v2133, 16
        %v2222 = vrot.slane %v2220, 1
        %v2223 = vsel %vm516, %v2218, %v2222
        %v2224 = vshrl.u32 %v2133, 16
        %v2226 = vor.u32 %v2224, %v2222
        %v2228 = vshll.u32 %v2134, 16
        %v2230 = vrot.slane %v2228, 1
        %v2231 = vsel %vm516, %v2226, %v2230
        %v2232 = vshrl.u32 %v2134, 16
        %v2234 = vor.u32 %v2232, %v2230
        %v2236 = vshll.u32 %v2135, 16
        %v2238 = vrot.slane %v2236, 1
        %v2239 = vsel %vm516, %v2234, %v2238
        %v2240 = vshrl.u32 %v2135, 16
        %v2242 = vor.u32 %v2240, %v2238
        %v2244 = vshll.u32 %v2136, 16
        %v2246 = vrot.slane %v2244, 1
        %v2247 = vsel %vm516, %v2242, %v2246
        %v2248 = vshrl.u32 %v2136, 16
        %v2250 = vor.u32 %v2248, %v2246
        %v2252 = vshll.u32 %v2139, 16
        %v2254 = vrot.slane %v2252, 1
        %v2255 = vsel %vm516, %v2250, %v2254
        %2256 = vrot.lane.b32.xlu0 %v2151, 8
        %v2257 = vpop.permute.xlu0 %2256
        %2258 = vrot.lane.b32.xlu0 %v2159, 8
        %v2259 = vpop.permute.xlu0 %2258
        %2260 = vrot.lane.b32.xlu0 %v2167, 8
        %v2261 = vpop.permute.xlu0 %2260
        %2262 = vrot.lane.b32.xlu0 %v2175, 8
        %v2263 = vpop.permute.xlu0 %2262
        %2264 = vrot.lane.b32.xlu0 %v2183, 8
        %v2265 = vpop.permute.xlu0 %2264
        %2266 = vrot.lane.b32.xlu0 %v2191, 8
        %v2267 = vpop.permute.xlu0 %2266
        %2268 = vrot.lane.b32.xlu0 %v2199, 8
        %v2269 = vpop.permute.xlu0 %2268
        %2270 = vrot.lane.b32.xlu0 %v2207, 8
        %v2271 = vpop.permute.xlu0 %2270
        %2272 = vrot.lane.b32.xlu0 %v2215, 8
        %v2273 = vpop.permute.xlu0 %2272
        %2274 = vrot.lane.b32.xlu0 %v2223, 8
        %v2275 = vpop.permute.xlu0 %2274
        %2276 = vrot.lane.b32.xlu0 %v2231, 8
        %v2277 = vpop.permute.xlu0 %2276
        %2278 = vrot.lane.b32.xlu0 %v2239, 8
        %v2279 = vpop.permute.xlu0 %2278
        %2280 = vrot.lane.b32.xlu0 %v2247, 8
        %v2281 = vpop.permute.xlu0 %2280
        %2282 = vrot.lane.b32.xlu0 %v2255, 8
        %v2283 = vpop.permute.xlu0 %2282
        %v2285 = vunpack.c.l.b16 %v2066
        %v2286 = vpack.c.b16 %v2096, %v2285
        %v2287 = vrot.slane %v2286, 1
        %v2288 = vrot.slane %v2124, 1
        %v2289 = vsel %vm684, %v2287, %v2288
        %v2290 = vrot.slane %v2125, 1
        %v2291 = vsel %vm684, %v2288, %v2290
        %v2292 = vrot.slane %v2126, 1
        %v2293 = vsel %vm684, %v2290, %v2292
        %v2294 = vrot.slane %v2127, 1
        %v2295 = vsel %vm684, %v2292, %v2294
        %v2296 = vrot.slane %v2128, 1
        %v2297 = vsel %vm684, %v2294, %v2296
        %v2298 = vrot.slane %v2129, 1
        %v2299 = vsel %vm684, %v2296, %v2298
        %v2300 = vrot.slane %v2130, 1
        %v2301 = vsel %vm684, %v2298, %v2300
        %v2302 = vrot.slane %v2131, 1
        %v2303 = vsel %vm684, %v2300, %v2302
        %v2304 = vrot.slane %v2132, 1
        %v2305 = vsel %vm684, %v2302, %v2304
        %v2306 = vrot.slane %v2133, 1
        %v2307 = vsel %vm684, %v2304, %v2306
        %v2308 = vrot.slane %v2134, 1
        %v2309 = vsel %vm684, %v2306, %v2308
        %v2310 = vrot.slane %v2135, 1
        %v2311 = vsel %vm684, %v2308, %v2310
        %v2312 = vrot.slane %v2136, 1
        %v2313 = vsel %vm684, %v2310, %v2312
        %v2314 = vrot.slane %v2139, 1
        %v2315 = vsel %vm684, %v2312, %v2314
        %2316 = vrot.lane.b32.xlu0 %v2289, 16
        %v2317 = vpop.permute.xlu0 %2316
        %2318 = vrot.lane.b32.xlu0 %v2291, 16
        %v2319 = vpop.permute.xlu0 %2318
        %2320 = vrot.lane.b32.xlu0 %v2293, 16
        %v2321 = vpop.permute.xlu0 %2320
        %2322 = vrot.lane.b32.xlu0 %v2295, 16
        %v2323 = vpop.permute.xlu0 %2322
        %2324 = vrot.lane.b32.xlu0 %v2297, 16
        %v2325 = vpop.permute.xlu0 %2324
        %2326 = vrot.lane.b32.xlu0 %v2299, 16
        %v2327 = vpop.permute.xlu0 %2326
        %2328 = vrot.lane.b32.xlu0 %v2301, 16
        %v2329 = vpop.permute.xlu0 %2328
        %2330 = vrot.lane.b32.xlu0 %v2303, 16
        %v2331 = vpop.permute.xlu0 %2330
        %2332 = vrot.lane.b32.xlu0 %v2305, 16
        %v2333 = vpop.permute.xlu0 %2332
        %2334 = vrot.lane.b32.xlu0 %v2307, 16
        %v2335 = vpop.permute.xlu0 %2334
        %2336 = vrot.lane.b32.xlu0 %v2309, 16
        %v2337 = vpop.permute.xlu0 %2336
        %2338 = vrot.lane.b32.xlu0 %v2311, 16
        %v2339 = vpop.permute.xlu0 %2338
        %2340 = vrot.lane.b32.xlu0 %v2313, 16
        %v2341 = vpop.permute.xlu0 %2340
        %2342 = vrot.lane.b32.xlu0 %v2315, 16
        %v2343 = vpop.permute.xlu0 %2342
        %v2345 = vsel %vm1097, %v2123, %v2257
        %v2347 = vsel %vm1097, %v2124, %v2259
        %v2349 = vsel %vm1097, %v2125, %v2261
        %v2351 = vsel %vm1097, %v2126, %v2263
        %v2353 = vsel %vm1097, %v2127, %v2265
        %v2355 = vsel %vm1097, %v2128, %v2267
        %v2357 = vsel %vm1097, %v2129, %v2269
        %v2359 = vsel %vm1097, %v2130, %v2271
        %v2361 = vsel %vm1097, %v2131, %v2273
        %v2363 = vsel %vm1097, %v2132, %v2275
        %v2365 = vsel %vm1097, %v2133, %v2277
        %v2367 = vsel %vm1097, %v2134, %v2279
        %v2369 = vsel %vm1097, %v2135, %v2281
        %v2371 = vsel %vm1097, %v2136, %v2283
        %v2373 = vsel %vm1130, %v2345, %v2317
        %v2375 = vsel %vm1130, %v2347, %v2319
        %v2377 = vsel %vm1130, %v2349, %v2321
        %v2379 = vsel %vm1130, %v2351, %v2323
        %v2381 = vsel %vm1130, %v2353, %v2325
        %v2383 = vsel %vm1130, %v2355, %v2327
        %v2385 = vsel %vm1130, %v2357, %v2329
        %v2387 = vsel %vm1130, %v2359, %v2331
        %v2389 = vsel %vm1130, %v2361, %v2333
        %v2391 = vsel %vm1130, %v2363, %v2335
        %v2393 = vsel %vm1130, %v2365, %v2337
        %v2395 = vsel %vm1130, %v2367, %v2339
        %v2397 = vsel %vm1130, %v2369, %v2341
        %v2399 = vsel %vm1130, %v2371, %v2343
        %v2400 = vld [vmem:[#allocation11] sm:$0xf]
        %v2401 = vld [vmem:[#allocation11 + $0x4] sm:$0xf]
        %v2402 = vld [vmem:[#allocation11 + $0x8] sm:$0xf]
        %s2403 = scalar_lea.vmem [#allocation11], 12
        %v2404 = vld [vmem:[%s2403] sm:$0xf]
        %v2405 = vld [vmem:[%s2403 + $0x4] sm:$0xf]
        %v2406 = vld [vmem:[%s2403 + $0x8] sm:$0xf]
        %v2410 = vunpack.c.l.b16 %v2404
        %v2411 = vunpack.c.l.b16 %v2405
        %v2412 = vunpack.c.l.b16 %v2406
        %v2413 = vpack.c.b16 %v2411, %v2410
        %v2414 = vpack.c.b16 %v2412, %v2412
        %v2416 = vsel %vm1163, %v2375, 0
        %v2418 = vsel %vm1163, %v2377, 0
        %v2420 = vsel %vm1163, %v2379, 0
        %v2422 = vsel %vm1163, %v2381, 0
        %v2424 = vsel %vm1163, %v2383, 0
        %v2426 = vsel %vm1163, %v2385, 0
        %v2428 = vsel %vm1163, %v2387, 0
        %v2430 = vsel %vm1163, %v2389, 0
        %v2432 = vsel %vm1163, %v2391, 0
        %v2434 = vsel %vm1163, %v2393, 0
        %v2436 = vsel %vm1163, %v2395, 0
        %v2438 = vsel %vm1163, %v2397, 0
        %vm2440 = vcmask 1043456
        %v2442 = vsel %vm2440, %v2414, 0
        %2444 = vmatprep.subr.bf16.mxu0 0
        %2445 = vmatpush1.bf16.msra.mxu0 %v2413
        %2446 = vmatprep.subr.bf16.mxu0 0
        %2447 = vmatpush1.bf16.msra.mxu0 %v2442
        %2448 = vmatprep.subr.bf16.mxu0 0
        %2449 = vmatpush1.bf16.msra.mxu0 0
        %2450 = vmatprep.subr.bf16.mxu0 0
        %2451 = vmatpush1.bf16.msra.mxu0 0
        %2452 = vmatprep.subr.bf16.mxu0 0
        %2453 = vmatpush1.bf16.msra.mxu0 0
        %2454 = vmatprep.subr.bf16.mxu0 0
        %2455 = vmatpush1.bf16.msra.mxu0 0
        %2456 = vmatprep.subr.bf16.mxu0 0
        %2457 = vmatpush1.bf16.msra.mxu0 0
        %2458 = vmatprep.subr.bf16.mxu0 0
        %2459 = vmatpush1.bf16.msra.mxu0 0
        %2460 = vmatprep.subr.bf16.mxu0 0
        %2461 = vmatpush1.bf16.msra.mxu0 0
        %2462 = vmatprep.subr.bf16.mxu0 0
        %2463 = vmatpush1.bf16.msra.mxu0 0
        %2464 = vmatprep.subr.bf16.mxu0 0
        %2465 = vmatpush1.bf16.msra.mxu0 0
        %2466 = vmatprep.subr.bf16.mxu0 0
        %2467 = vmatpush1.bf16.msra.mxu0 0
        %2468 = vmatprep.subr.bf16.mxu0 0
        %2469 = vmatpush1.bf16.msra.mxu0 0
        %2470 = vmatprep.subr.bf16.mxu0 0
        %2471 = vmatpush1.bf16.msra.mxu0 0
        %2472 = vmatprep.subr.bf16.mxu0 0
        %2473 = vmatpush1.bf16.msra.mxu0 0
        %2474 = vmatprep.subr.bf16.mxu0 0
        %2475 = vmatpush1.bf16.msra.mxu0 0
        %2476 = vmatprep.mubr.bf16.mxu0 0
        %2477 = vmatmul.mubr.bf16.gmra.mrb[0].mxu0 %v2416
        %v2478 = vpop.f32.mrb[0].mxu0
        %v2479 = vadd.f32 0.0, %v2478
        %v2480 = vpop.f32.mrb[0].mxu0
        %v2481 = vpop.f32.mrb[0].mxu0
        %v2482 = vadd.f32 0.0, %v2481
        %v2483 = vpop.f32.mrb[0].mxu0
        %2484 = vmatprep.mubr.bf16.mxu0 0
        %2485 = vmatmul.mubr.bf16.gmra.mrb[0].mxu0 %v2418
        %v2486 = vpop.f32.mrb[0].mxu0
        %v2487 = vadd.f32 0.0, %v2486
        %v2488 = vpop.f32.mrb[0].mxu0
        %v2489 = vpop.f32.mrb[0].mxu0
        %v2490 = vadd.f32 0.0, %v2489
        %v2491 = vpop.f32.mrb[0].mxu0
        %2492 = vmatprep.mubr.bf16.mxu0 0
        %2493 = vmatmul.mubr.bf16.gmra.mrb[0].mxu0 %v2420
        %v2494 = vpop.f32.mrb[0].mxu0
        %v2495 = vadd.f32 0.0, %v2494
        %v2496 = vpop.f32.mrb[0].mxu0
        %v2497 = vpop.f32.mrb[0].mxu0
        %v2498 = vadd.f32 0.0, %v2497
        %v2499 = vpop.f32.mrb[0].mxu0
        %2500 = vmatprep.mubr.bf16.mxu0 0
        %2501 = vmatmul.mubr.bf16.gmra.mrb[0].mxu0 %v2422
        %v2502 = vpop.f32.mrb[0].mxu0
        %v2503 = vadd.f32 0.0, %v2502
        %v2504 = vpop.f32.mrb[0].mxu0
        %v2505 = vpop.f32.mrb[0].mxu0
        %v2506 = vadd.f32 0.0, %v2505
        %v2507 = vpop.f32.mrb[0].mxu0
        %2508 = vmatprep.mubr.bf16.mxu0 0
        %2509 = vmatmul.mubr.bf16.gmra.mrb[0].mxu0 %v2424
        %v2510 = vpop.f32.mrb[0].mxu0
        %v2511 = vadd.f32 0.0, %v2510
        %v2512 = vpop.f32.mrb[0].mxu0
        %v2513 = vpop.f32.mrb[0].mxu0
        %v2514 = vadd.f32 0.0, %v2513
        %v2515 = vpop.f32.mrb[0].mxu0
        %2516 = vmatprep.mubr.bf16.mxu0 0
        %2517 = vmatmul.mubr.bf16.gmra.mrb[0].mxu0 %v2426
        %v2518 = vpop.f32.mrb[0].mxu0
        %v2519 = vadd.f32 0.0, %v2518
        %v2520 = vpop.f32.mrb[0].mxu0
        %v2521 = vpop.f32.mrb[0].mxu0
        %v2522 = vadd.f32 0.0, %v2521
        %v2523 = vpop.f32.mrb[0].mxu0
        %2524 = vmatprep.mubr.bf16.mxu0 0
        %2525 = vmatmul.mubr.bf16.gmra.mrb[0].mxu0 %v2428
        %v2526 = vpop.f32.mrb[0].mxu0
        %v2527 = vadd.f32 0.0, %v2526
        %v2528 = vpop.f32.mrb[0].mxu0
        %v2529 = vpop.f32.mrb[0].mxu0
        %v2530 = vadd.f32 0.0, %v2529
        %v2531 = vpop.f32.mrb[0].mxu0
        %2532 = vmatprep.mubr.bf16.mxu0 0
        %2533 = vmatmul.mubr.bf16.gmra.mrb[0].mxu0 %v2430
        %v2534 = vpop.f32.mrb[0].mxu0
        %v2535 = vadd.f32 0.0, %v2534
        %v2536 = vpop.f32.mrb[0].mxu0
        %v2537 = vpop.f32.mrb[0].mxu0
        %v2538 = vadd.f32 0.0, %v2537
        %v2539 = vpop.f32.mrb[0].mxu0
        %2540 = vmatprep.mubr.bf16.mxu0 0
        %2541 = vmatmul.mubr.bf16.gmra.mrb[0].mxu0 %v2432
        %v2542 = vpop.f32.mrb[0].mxu0
        %v2543 = vadd.f32 0.0, %v2542
        %v2544 = vpop.f32.mrb[0].mxu0
        %v2545 = vpop.f32.mrb[0].mxu0
        %v2546 = vadd.f32 0.0, %v2545
        %v2547 = vpop.f32.mrb[0].mxu0
        %2548 = vmatprep.mubr.bf16.mxu0 0
        %2549 = vmatmul.mubr.bf16.gmra.mrb[0].mxu0 %v2434
        %v2550 = vpop.f32.mrb[0].mxu0
        %v2551 = vadd.f32 0.0, %v2550
        %v2552 = vpop.f32.mrb[0].mxu0
        %v2553 = vpop.f32.mrb[0].mxu0
        %v2554 = vadd.f32 0.0, %v2553
        %v2555 = vpop.f32.mrb[0].mxu0
        %2556 = vmatprep.mubr.bf16.mxu0 0
        %2557 = vmatmul.mubr.bf16.gmra.mrb[0].mxu0 %v2436
        %v2558 = vpop.f32.mrb[0].mxu0
        %v2559 = vadd.f32 0.0, %v2558
        %v2560 = vpop.f32.mrb[0].mxu0
        %v2561 = vpop.f32.mrb[0].mxu0
        %v2562 = vadd.f32 0.0, %v2561
        %v2563 = vpop.f32.mrb[0].mxu0
        %2564 = vmatprep.mubr.bf16.mxu0 0
        %2565 = vmatmul.mubr.bf16.gmra.mrb[0].mxu0 %v2438
        %v2566 = vpop.f32.mrb[0].mxu0
        %v2567 = vadd.f32 0.0, %v2566
        %v2568 = vpop.f32.mrb[0].mxu0
        %v2569 = vpop.f32.mrb[0].mxu0
        %v2570 = vadd.f32 0.0, %v2569
        %v2571 = vpop.f32.mrb[0].mxu0
        %2572 = vdwg.mxu0
        %v2576 = vunpack.c.l.b16 %v2400
        %v2577 = vunpack.c.l.b16 %v2401
        %v2578 = vunpack.c.l.b16 %v2402
        %v2579 = vpack.c.b16 %v2577, %v2576
        %v2580 = vpack.c.b16 %v2578, %v2578
        %v2582 = vsel %vm1163, %v2373, 0
        %v2585 = vsel %vm2440, %v2580, 0
        %2587 = vmatprep.subr.bf16.mxu0 0
        %2588 = vmatpush1.bf16.msra.mxu0 %v2579
        %2589 = vmatprep.subr.bf16.mxu0 0
        %2590 = vmatpush1.bf16.msra.mxu0 %v2585
        %2591 = vmatprep.subr.bf16.mxu0 0
        %2592 = vmatpush1.bf16.msra.mxu0 0
        %2593 = vmatprep.subr.bf16.mxu0 0
        %2594 = vmatpush1.bf16.msra.mxu0 0
        %2595 = vmatprep.subr.bf16.mxu0 0
        %2596 = vmatpush1.bf16.msra.mxu0 0
        %2597 = vmatprep.subr.bf16.mxu0 0
        %2598 = vmatpush1.bf16.msra.mxu0 0
        %2599 = vmatprep.subr.bf16.mxu0 0
        %2600 = vmatpush1.bf16.msra.mxu0 0
        %2601 = vmatprep.subr.bf16.mxu0 0
        %2602 = vmatpush1.bf16.msra.mxu0 0
        %2603 = vmatprep.subr.bf16.mxu0 0
        %2604 = vmatpush1.bf16.msra.mxu0 0
        %2605 = vmatprep.subr.bf16.mxu0 0
        %2606 = vmatpush1.bf16.msra.mxu0 0
        %2607 = vmatprep.subr.bf16.mxu0 0
        %2608 = vmatpush1.bf16.msra.mxu0 0
        %2609 = vmatprep.subr.bf16.mxu0 0
        %2610 = vmatpush1.bf16.msra.mxu0 0
        %2611 = vmatprep.subr.bf16.mxu0 0
        %2612 = vmatpush1.bf16.msra.mxu0 0
        %2613 = vmatprep.subr.bf16.mxu0 0
        %2614 = vmatpush1.bf16.msra.mxu0 0
        %2615 = vmatprep.subr.bf16.mxu0 0
        %2616 = vmatpush1.bf16.msra.mxu0 0
        %2617 = vmatprep.subr.bf16.mxu0 0
        %2618 = vmatpush1.bf16.msra.mxu0 0
        %2619 = vmatprep.mubr.bf16.mxu0 0
        %2620 = vmatmul.mubr.bf16.gmra.mrb[0].mxu0 %v2582
        %v2621 = vpop.f32.mrb[0].mxu0
        %v2622 = vadd.f32 %v2479, %v2621
        %v2623 = vpop.f32.mrb[0].mxu0
        %v2624 = vpop.f32.mrb[0].mxu0
        %v2625 = vadd.f32 %v2482, %v2624
        %v2626 = vpop.f32.mrb[0].mxu0
        %2627 = vmatprep.mubr.bf16.mxu0 0
        %2628 = vmatmul.mubr.bf16.gmra.mrb[0].mxu0 %v2416
        %v2629 = vpop.f32.mrb[0].mxu0
        %v2630 = vadd.f32 %v2487, %v2629
        %v2631 = vpop.f32.mrb[0].mxu0
        %v2632 = vpop.f32.mrb[0].mxu0
        %v2633 = vadd.f32 %v2490, %v2632
        %v2634 = vpop.f32.mrb[0].mxu0
        %2635 = vmatprep.mubr.bf16.mxu0 0
        %2636 = vmatmul.mubr.bf16.gmra.mrb[0].mxu0 %v2418
        %v2637 = vpop.f32.mrb[0].mxu0
        %v2638 = vadd.f32 %v2495, %v2637
        %v2639 = vpop.f32.mrb[0].mxu0
        %v2640 = vpop.f32.mrb[0].mxu0
        %v2641 = vadd.f32 %v2498, %v2640
        %v2642 = vpop.f32.mrb[0].mxu0
        %2643 = vmatprep.mubr.bf16.mxu0 0
        %2644 = vmatmul.mubr.bf16.gmra.mrb[0].mxu0 %v2420
        %v2645 = vpop.f32.mrb[0].mxu0
        %v2646 = vadd.f32 %v2503, %v2645
        %v2647 = vpop.f32.mrb[0].mxu0
        %v2648 = vpop.f32.mrb[0].mxu0
        %v2649 = vadd.f32 %v2506, %v2648
        %v2650 = vpop.f32.mrb[0].mxu0
        %2651 = vmatprep.mubr.bf16.mxu0 0
        %2652 = vmatmul.mubr.bf16.gmra.mrb[0].mxu0 %v2422
        %v2653 = vpop.f32.mrb[0].mxu0
        %v2654 = vadd.f32 %v2511, %v2653
        %v2655 = vpop.f32.mrb[0].mxu0
        %v2656 = vpop.f32.mrb[0].mxu0
        %v2657 = vadd.f32 %v2514, %v2656
        %v2658 = vpop.f32.mrb[0].mxu0
        %2659 = vmatprep.mubr.bf16.mxu0 0
        %2660 = vmatmul.mubr.bf16.gmra.mrb[0].mxu0 %v2424
        %v2661 = vpop.f32.mrb[0].mxu0
        %v2662 = vadd.f32 %v2519, %v2661
        %v2663 = vpop.f32.mrb[0].mxu0
        %v2664 = vpop.f32.mrb[0].mxu0
        %v2665 = vadd.f32 %v2522, %v2664
        %v2666 = vpop.f32.mrb[0].mxu0
        %2667 = vmatprep.mubr.bf16.mxu0 0
        %2668 = vmatmul.mubr.bf16.gmra.mrb[0].mxu0 %v2426
        %v2669 = vpop.f32.mrb[0].mxu0
        %v2670 = vadd.f32 %v2527, %v2669
        %v2671 = vpop.f32.mrb[0].mxu0
        %v2672 = vpop.f32.mrb[0].mxu0
        %v2673 = vadd.f32 %v2530, %v2672
        %v2674 = vpop.f32.mrb[0].mxu0
        %2675 = vmatprep.mubr.bf16.mxu0 0
        %2676 = vmatmul.mubr.bf16.gmra.mrb[0].mxu0 %v2428
        %v2677 = vpop.f32.mrb[0].mxu0
        %v2678 = vadd.f32 %v2535, %v2677
        %v2679 = vpop.f32.mrb[0].mxu0
        %v2680 = vpop.f32.mrb[0].mxu0
        %v2681 = vadd.f32 %v2538, %v2680
        %v2682 = vpop.f32.mrb[0].mxu0
        %2683 = vmatprep.mubr.bf16.mxu0 0
        %2684 = vmatmul.mubr.bf16.gmra.mrb[0].mxu0 %v2430
        %v2685 = vpop.f32.mrb[0].mxu0
        %v2686 = vadd.f32 %v2543, %v2685
        %v2687 = vpop.f32.mrb[0].mxu0
        %v2688 = vpop.f32.mrb[0].mxu0
        %v2689 = vadd.f32 %v2546, %v2688
        %v2690 = vpop.f32.mrb[0].mxu0
        %2691 = vmatprep.mubr.bf16.mxu0 0
        %2692 = vmatmul.mubr.bf16.gmra.mrb[0].mxu0 %v2432
        %v2693 = vpop.f32.mrb[0].mxu0
        %v2694 = vadd.f32 %v2551, %v2693
        %v2695 = vpop.f32.mrb[0].mxu0
        %v2696 = vpop.f32.mrb[0].mxu0
        %v2697 = vadd.f32 %v2554, %v2696
        %v2698 = vpop.f32.mrb[0].mxu0
        %2699 = vmatprep.mubr.bf16.mxu0 0
        %2700 = vmatmul.mubr.bf16.gmra.mrb[0].mxu0 %v2434
        %v2701 = vpop.f32.mrb[0].mxu0
        %v2702 = vadd.f32 %v2559, %v2701
        %v2703 = vpop.f32.mrb[0].mxu0
        %v2704 = vpop.f32.mrb[0].mxu0
        %v2705 = vadd.f32 %v2562, %v2704
        %v2706 = vpop.f32.mrb[0].mxu0
        %2707 = vmatprep.mubr.bf16.mxu0 0
        %2708 = vmatmul.mubr.bf16.gmra.mrb[0].mxu0 %v2436
        %v2709 = vpop.f32.mrb[0].mxu0
        %v2710 = vadd.f32 %v2567, %v2709
        %v2711 = vpop.f32.mrb[0].mxu0
        %v2712 = vpop.f32.mrb[0].mxu0
        %v2713 = vadd.f32 %v2570, %v2712
        %v2714 = vpop.f32.mrb[0].mxu0
        %2715 = vdwg.mxu0
        %s2716 = scalar_lea.vmem [#allocation11], 24
        %v2717 = vld [vmem:[%s2716] sm:$0xf]
        %v2718 = vld [vmem:[%s2716 + $0x4] sm:$0xf]
        %v2719 = vld [vmem:[%s2716 + $0x8] sm:$0xf]
        %v2723 = vunpack.c.l.b16 %v2717
        %v2724 = vunpack.c.l.b16 %v2718
        %v2725 = vunpack.c.l.b16 %v2719
        %v2726 = vpack.c.b16 %v2724, %v2723
        %v2727 = vpack.c.b16 %v2725, %v2725
        %v2729 = vsel %vm1163, %v2399, 0
        %v2732 = vsel %vm2440, %v2727, 0
        %2734 = vmatprep.subr.bf16.mxu0 0
        %2735 = vmatpush1.bf16.msra.mxu0 %v2726
        %2736 = vmatprep.subr.bf16.mxu0 0
        %2737 = vmatpush1.bf16.msra.mxu0 %v2732
        %2738 = vmatprep.subr.bf16.mxu0 0
        %2739 = vmatpush1.bf16.msra.mxu0 0
        %2740 = vmatprep.subr.bf16.mxu0 0
        %2741 = vmatpush1.bf16.msra.mxu0 0
        %2742 = vmatprep.subr.bf16.mxu0 0
        %2743 = vmatpush1.bf16.msra.mxu0 0
        %2744 = vmatprep.subr.bf16.mxu0 0
        %2745 = vmatpush1.bf16.msra.mxu0 0
        %2746 = vmatprep.subr.bf16.mxu0 0
        %2747 = vmatpush1.bf16.msra.mxu0 0
        %2748 = vmatprep.subr.bf16.mxu0 0
        %2749 = vmatpush1.bf16.msra.mxu0 0
        %2750 = vmatprep.subr.bf16.mxu0 0
        %2751 = vmatpush1.bf16.msra.mxu0 0
        %2752 = vmatprep.subr.bf16.mxu0 0
        %2753 = vmatpush1.bf16.msra.mxu0 0
        %2754 = vmatprep.subr.bf16.mxu0 0
        %2755 = vmatpush1.bf16.msra.mxu0 0
        %2756 = vmatprep.subr.bf16.mxu0 0
        %2757 = vmatpush1.bf16.msra.mxu0 0
        %2758 = vmatprep.subr.bf16.mxu0 0
        %2759 = vmatpush1.bf16.msra.mxu0 0
        %2760 = vmatprep.subr.bf16.mxu0 0
        %2761 = vmatpush1.bf16.msra.mxu0 0
        %2762 = vmatprep.subr.bf16.mxu0 0
        %2763 = vmatpush1.bf16.msra.mxu0 0
        %2764 = vmatprep.subr.bf16.mxu0 0
        %2765 = vmatpush1.bf16.msra.mxu0 0
        %2766 = vmatprep.mubr.bf16.mxu0 0
        %2767 = vmatmul.mubr.bf16.gmra.mrb[0].mxu0 %v2418
        %v2768 = vpop.f32.mrb[0].mxu0
        %v2769 = vadd.f32 0.0, %v2768
        %v2770 = vpop.f32.mrb[0].mxu0
        %v2771 = vpop.f32.mrb[0].mxu0
        %v2772 = vadd.f32 0.0, %v2771
        %v2773 = vpop.f32.mrb[0].mxu0
        %2774 = vmatprep.mubr.bf16.mxu0 0
        %2775 = vmatmul.mubr.bf16.gmra.mrb[0].mxu0 %v2420
        %v2776 = vpop.f32.mrb[0].mxu0
        %v2777 = vadd.f32 0.0, %v2776
        %v2778 = vpop.f32.mrb[0].mxu0
        %v2779 = vpop.f32.mrb[0].mxu0
        %v2780 = vadd.f32 0.0, %v2779
        %v2781 = vpop.f32.mrb[0].mxu0
        %2782 = vmatprep.mubr.bf16.mxu0 0
        %2783 = vmatmul.mubr.bf16.gmra.mrb[0].mxu0 %v2422
        %v2784 = vpop.f32.mrb[0].mxu0
        %v2785 = vadd.f32 0.0, %v2784
        %v2786 = vpop.f32.mrb[0].mxu0
        %v2787 = vpop.f32.mrb[0].mxu0
        %v2788 = vadd.f32 0.0, %v2787
        %v2789 = vpop.f32.mrb[0].mxu0
        %2790 = vmatprep.mubr.bf16.mxu0 0
        %2791 = vmatmul.mubr.bf16.gmra.mrb[0].mxu0 %v2424
        %v2792 = vpop.f32.mrb[0].mxu0
        %v2793 = vadd.f32 0.0, %v2792
        %v2794 = vpop.f32.mrb[0].mxu0
        %v2795 = vpop.f32.mrb[0].mxu0
        %v2796 = vadd.f32 0.0, %v2795
        %v2797 = vpop.f32.mrb[0].mxu0
        %2798 = vmatprep.mubr.bf16.mxu0 0
        %2799 = vmatmul.mubr.bf16.gmra.mrb[0].mxu0 %v2426
        %v2800 = vpop.f32.mrb[0].mxu0
        %v2801 = vadd.f32 0.0, %v2800
        %v2802 = vpop.f32.mrb[0].mxu0
        %v2803 = vpop.f32.mrb[0].mxu0
        %v2804 = vadd.f32 0.0, %v2803
        %v2805 = vpop.f32.mrb[0].mxu0
        %2806 = vmatprep.mubr.bf16.mxu0 0
        %2807 = vmatmul.mubr.bf16.gmra.mrb[0].mxu0 %v2428
        %v2808 = vpop.f32.mrb[0].mxu0
        %v2809 = vadd.f32 0.0, %v2808
        %v2810 = vpop.f32.mrb[0].mxu0
        %v2811 = vpop.f32.mrb[0].mxu0
        %v2812 = vadd.f32 0.0, %v2811
        %v2813 = vpop.f32.mrb[0].mxu0
        %2814 = vmatprep.mubr.bf16.mxu0 0
        %2815 = vmatmul.mubr.bf16.gmra.mrb[0].mxu0 %v2430
        %v2816 = vpop.f32.mrb[0].mxu0
        %v2817 = vadd.f32 0.0, %v2816
        %v2818 = vpop.f32.mrb[0].mxu0
        %v2819 = vpop.f32.mrb[0].mxu0
        %v2820 = vadd.f32 0.0, %v2819
        %v2821 = vpop.f32.mrb[0].mxu0
        %2822 = vmatprep.mubr.bf16.mxu0 0
        %2823 = vmatmul.mubr.bf16.gmra.mrb[0].mxu0 %v2432
        %v2824 = vpop.f32.mrb[0].mxu0
        %v2825 = vadd.f32 0.0, %v2824
        %v2826 = vpop.f32.mrb[0].mxu0
        %v2827 = vpop.f32.mrb[0].mxu0
        %v2828 = vadd.f32 0.0, %v2827
        %v2829 = vpop.f32.mrb[0].mxu0
        %2830 = vmatprep.mubr.bf16.mxu0 0
        %2831 = vmatmul.mubr.bf16.gmra.mrb[0].mxu0 %v2434
        %v2832 = vpop.f32.mrb[0].mxu0
        %v2833 = vadd.f32 0.0, %v2832
        %v2834 = vpop.f32.mrb[0].mxu0
        %v2835 = vpop.f32.mrb[0].mxu0
        %v2836 = vadd.f32 0.0, %v2835
        %v2837 = vpop.f32.mrb[0].mxu0
        %2838 = vmatprep.mubr.bf16.mxu0 0
        %2839 = vmatmul.mubr.bf16.gmra.mrb[0].mxu0 %v2436
        %v2840 = vpop.f32.mrb[0].mxu0
        %v2841 = vadd.f32 0.0, %v2840
        %v2842 = vpop.f32.mrb[0].mxu0
        %v2843 = vpop.f32.mrb[0].mxu0
        %v2844 = vadd.f32 0.0, %v2843
        %v2845 = vpop.f32.mrb[0].mxu0
        %2846 = vmatprep.mubr.bf16.mxu0 0
        %2847 = vmatmul.mubr.bf16.gmra.mrb[0].mxu0 %v2438
        %v2848 = vpop.f32.mrb[0].mxu0
        %v2849 = vadd.f32 0.0, %v2848
        %v2850 = vpop.f32.mrb[0].mxu0
        %v2851 = vpop.f32.mrb[0].mxu0
        %v2852 = vadd.f32 0.0, %v2851
        %v2853 = vpop.f32.mrb[0].mxu0
        %2854 = vmatprep.mubr.bf16.mxu0 0
        %2855 = vmatmul.mubr.bf16.gmra.mrb[0].mxu0 %v2729
        %v2856 = vpop.f32.mrb[0].mxu0
        %v2857 = vadd.f32 0.0, %v2856
        %v2858 = vpop.f32.mrb[0].mxu0
        %v2859 = vpop.f32.mrb[0].mxu0
        %v2860 = vadd.f32 0.0, %v2859
        %v2861 = vpop.f32.mrb[0].mxu0
        %2862 = vdwg.mxu0
        %v2863 = vadd.f32 %v2622, %v2769
        %v2864 = vadd.f32 %v2625, %v2772
        %v2865 = vadd.f32 %v2630, %v2777
        %v2866 = vadd.f32 %v2633, %v2780
        %v2867 = vadd.f32 %v2638, %v2785
        %v2868 = vadd.f32 %v2641, %v2788
        %v2869 = vadd.f32 %v2646, %v2793
        %v2870 = vadd.f32 %v2649, %v2796
        %v2871 = vadd.f32 %v2654, %v2801
        %v2872 = vadd.f32 %v2657, %v2804
        %v2873 = vadd.f32 %v2662, %v2809
        %v2874 = vadd.f32 %v2665, %v2812
        %v2875 = vadd.f32 %v2670, %v2817
        %v2876 = vadd.f32 %v2673, %v2820
        %v2877 = vadd.f32 %v2678, %v2825
        %v2878 = vadd.f32 %v2681, %v2828
        %v2879 = vadd.f32 %v2686, %v2833
        %v2880 = vadd.f32 %v2689, %v2836
        %v2881 = vadd.f32 %v2694, %v2841
        %v2882 = vadd.f32 %v2697, %v2844
        %v2883 = vadd.f32 %v2702, %v2849
        %v2884 = vadd.f32 %v2705, %v2852
        %v2885 = vadd.f32 %v2710, %v2857
        %v2886 = vadd.f32 %v2713, %v2860
        %v2887 = vld [vmem:[#allocation12] sm:$0x1]
        %v2889 = vlaneseq
        %v2890 = vshrl.u32 %v2889, 7
        %v2891 = vsub.s32 0, %v2890
        %v2892 = vrot.slane %v2887, %v2891
        %v2894 = vadd.f32 %v2863, %v2892
        %v2895 = vadd.f32 %v2864, %v2892
        %v2896 = vadd.f32 %v2865, %v2892
        %v2897 = vadd.f32 %v2866, %v2892
        %v2898 = vadd.f32 %v2867, %v2892
        %v2899 = vadd.f32 %v2868, %v2892
        %v2900 = vadd.f32 %v2869, %v2892
        %v2901 = vadd.f32 %v2870, %v2892
        %v2902 = vadd.f32 %v2871, %v2892
        %v2903 = vadd.f32 %v2872, %v2892
        %v2904 = vadd.f32 %v2873, %v2892
        %v2905 = vadd.f32 %v2874, %v2892
        %v2906 = vadd.f32 %v2875, %v2892
        %v2907 = vadd.f32 %v2876, %v2892
        %v2908 = vadd.f32 %v2877, %v2892
        %v2909 = vadd.f32 %v2878, %v2892
        %v2910 = vadd.f32 %v2879, %v2892
        %v2911 = vadd.f32 %v2880, %v2892
        %v2912 = vadd.f32 %v2881, %v2892
        %v2913 = vadd.f32 %v2882, %v2892
        %v2914 = vadd.f32 %v2883, %v2892
        %v2915 = vadd.f32 %v2884, %v2892
        %v2916 = vadd.f32 %v2885, %v2892
        %v2917 = vadd.f32 %v2886, %v2892
        %2918 = vst.msk [vmem:[%s363] sm:$0xff] %vm1097, %v2894
        %2919 = vst.msk [vmem:[%s363 + $0x8] sm:$0xff] %vm1097, %v2895
        %2920 = vst.msk [vmem:[%s363 + $0x10] sm:$0xff] %vm1097, %v2896
        %2921 = vst.msk [vmem:[%s363 + $0x18] sm:$0xff] %vm1097, %v2897
        %2922 = vst.msk [vmem:[%s363 + $0x20] sm:$0xff] %vm1097, %v2898
        %2923 = vst.msk [vmem:[%s363 + $0x28] sm:$0xff] %vm1097, %v2899
        %2924 = vst.msk [vmem:[%s363 + $0x30] sm:$0xff] %vm1097, %v2900
        %2925 = vst.msk [vmem:[%s363 + $0x38] sm:$0xff] %vm1097, %v2901
        %2926 = vst.msk [vmem:[%s363 + $0x40] sm:$0xff] %vm1097, %v2902
        %2927 = vst.msk [vmem:[%s363 + $0x48] sm:$0xff] %vm1097, %v2903
        %2928 = vst.msk [vmem:[%s363 + $0x50] sm:$0xff] %vm1097, %v2904
        %2929 = vst.msk [vmem:[%s363 + $0x58] sm:$0xff] %vm1097, %v2905
        %2930 = vst.msk [vmem:[%s363 + $0x60] sm:$0xff] %vm1097, %v2906
        %2931 = vst.msk [vmem:[%s363 + $0x68] sm:$0xff] %vm1097, %v2907
        %2932 = vst.msk [vmem:[%s363 + $0x70] sm:$0xff] %vm1097, %v2908
        %2933 = vst.msk [vmem:[%s363 + $0x78] sm:$0xff] %vm1097, %v2909
        %2934 = vst.msk [vmem:[%s363 + $0x80] sm:$0xff] %vm1097, %v2910
        %2935 = vst.msk [vmem:[%s363 + $0x88] sm:$0xff] %vm1097, %v2911
        %2936 = vst.msk [vmem:[%s363 + $0x90] sm:$0xff] %vm1097, %v2912
        %2937 = vst.msk [vmem:[%s363 + $0x98] sm:$0xff] %vm1097, %v2913
        %2938 = vst.msk [vmem:[%s363 + $0xa0] sm:$0xff] %vm1097, %v2914
        %2939 = vst.msk [vmem:[%s363 + $0xa8] sm:$0xff] %vm1097, %v2915
        %2940 = vst.msk [vmem:[%s363 + $0xb0] sm:$0xff] %vm1097, %v2916
        %2941 = vst.msk [vmem:[%s363 + $0xb8] sm:$0xff] %vm1097, %v2917
        %s2942 = sand.u32 %s172, 1
        %s2943 = scalar_lea.sflag [#allocation5], %s2942
        %s2944 = sand.u32 %s172, 1
        %s2945 = smul.addr %s2944, 192
        %s2946 = scalar_lea.vmem [#allocation14], %s2945
        // Predicated region
        $region69: #{decoder_forward.7} parent=43 // pred_check
          %p2947 = pneg %p182
        $region70: #{decoder_forward.7} parent=43 // pred_check_branch
          %2949 = sbr.rel (%p2947) target = $region72
        $region71: #{decoder_forward.7} parent=43 // pred_region
          %s2951 = ssub.s32 3072, 3072
          %2952 = vsyncadd %s2943, %s2951
          %s2953 = smul.addr %s28, 24
          %s2954 = smul.addr %s2953, 128
          %s2955 = scalar_lea.hbm %s6, %s2954
          %s2956 = sshll.u32 %s2946, 4
          %s2957 = int_to_ptr.vmem [resolvable:$true] %s2956
          %2962 = dma.vmem_to_hbm [thread:$0]  %s2957, 3072, %s2955, %s2943, 128, 128, 8
        $region72: #{decoder_forward.7} parent=43 // pred_fallthru
          _
      $region44: #{decoder_forward.7} parent=5 // pred_fallthru
        _
      %p2963 = scmp.le.s32.totalorder 2, %s23
      // Predicated region
      $region73: #{decoder_forward.7} parent=5 // pred_check
        %p2964 = pneg %p2963
      $region74: #{decoder_forward.7} parent=5 // pred_check_branch
        %2966 = sbr.rel (%p2964) target = $region76
      $region75: #{decoder_forward.7} parent=5 // pred_region
        %s2967 = ssub.s32 %s23, 2
        // Predicated region
        $region77: #{decoder_forward.7} parent=75 // pred_check
          %p2968 = pneg %p188
        $region78: #{decoder_forward.7} parent=75 // pred_check_branch
          %2970 = sbr.rel (%p2968) target = $region80
        $region79: #{decoder_forward.7} parent=75 // pred_region
          %s2971 = sand.u32 %s173, 1
          %s2972 = scalar_lea.sflag [#allocation5], %s2971
          %s2973 = sand.u32 %s173, 1
          %s2974 = smul.addr %s2973, 192
          %s2975 = scalar_lea.vmem [#allocation14], %s2974
          %2976 = dma.done %s2972, 3072
        $region80: #{decoder_forward.7} parent=75 // pred_fallthru
          _
      $region76: #{decoder_forward.7} parent=5 // pred_fallthru
        _
    $region6: #{decoder_forward.7} parent=1 // loop_footer
      %s27 = sadd.s32 1, %s23
    $region7: #{decoder_forward.7} parent=1 // loop_footer_branch
      %22 = sbr.rel target = $region3
    $region8: #{decoder_forward.7} parent=1 // loop_exit
      _
    %2977 = vsyncpa [#allocation4], 1
    %s2978 = scalar_lea.sflag [#allocation4], 1
    %2979 = vsyncpa %s2978, 1
    %2980 = vsyncpa [#allocation7], 1
    %s2981 = scalar_lea.sflag [#allocation7], 1
    %2982 = vsyncpa %s2981, 1
    %2983 = vsyncpa [#allocation10], 1
    %2984 = vsyncpa [#allocation13], 1
    %2985 = vsyncpa [#allocation5], 1
    %s2986 = scalar_lea.sflag [#allocation5], 1
    %2987 = vsyncpa %s2986, 1

</llo_original>
